<compile_context>
chip_gen: v7x
topology: tpu7x:2x2x1
jax: 0.10.0
libtpu: 0.0.40
codegen_flags: <defaults>
</compile_context>

<pallas_src>
import jax
import jax.numpy as jnp
from jax.experimental import pallas as pl
from jax.experimental.pallas import tpu as pltpu

# ----------------------------- configuration ------------------------------
OP_CHANNEL = 16
OUT_CHANNEL = 16            # out_channel defaults to op_channel
GROUP_NUM = 4               # SAOM GroupNorm groups
GATE_T = 0.5
ALPHA = 0.5
SQ = 2                      # squeeze_radio
GROUPS = 2                  # group_size for GWC convs
UP = int(ALPHA * OP_CHANNEL)            # 8
LOW = OP_CHANNEL - UP                   # 8
CU = UP // SQ                           # 4 (squeeze1 output = GWC input channels)
CL = LOW // SQ                          # 4
EPS = 1e-5
ROW_TILE_CAP = 8192

_PAR1 = pltpu.CompilerParams(dimension_semantics=("parallel",))
_PAR2 = pltpu.CompilerParams(dimension_semantics=("parallel", "parallel"))


def _row_tile(hw, n, cap=ROW_TILE_CAP):
    """Largest lane tile (multiple of 128 preferred) dividing hw, >= ceil(4/n) steps."""
    want = max(1, -(-4 // n))
    top = min(cap, hw)
    best = None
    for t in range((top // 128) * 128, 127, -128):
        if hw % t == 0:
            if hw // t >= want:
                return t
            if best is None:
                best = t
    if best is not None:
        return best
    for t in range(top - (top % 8), 7, -8):
        if hw % t == 0:
            return t
    # TODO(synk): pad HW / masked remainder tile for awkward sizes instead of full-row.
    return hw


# ----------------------------- Pallas kernels -----------------------------
def _front_kernel(x_ref, wf_ref, b_ref, id_ref, up_ref, low_ref, xst_ref, sqst_ref):
    """Fused shortcut 1x1 conv + squeeze1|squeeze2 1x1 convs + x/sq moment sums."""
    x = x_ref[0]                                                     # (16, t)
    y = jnp.dot(wf_ref[...], x, preferred_element_type=jnp.float32)  # (24, t)
    idn = y[0:OUT_CHANNEL, :] + b_ref[...]
    sq = y[OUT_CHANNEL:OUT_CHANNEL + CU + CL, :]                     # (8, t)
    id_ref[0] = idn
    up_ref[0] = sq[0:CU, :]
    low_ref[0] = sq[CU:CU + CL, :]
    xst_ref[0, 0, :, 0:1] = jnp.sum(x, axis=1, keepdims=True)
    xst_ref[0, 0, :, 1:2] = jnp.sum(x * x, axis=1, keepdims=True)
    sqst_ref[0, 0, :, 0:1] = jnp.sum(sq, axis=1, keepdims=True)
    sqst_ref[0, 0, :, 1:2] = jnp.sum(sq * sq, axis=1, keepdims=True)


def caom_front(x3, w_front, b_id, tile):
    n, c, hw = x3.shape
    nt = hw // tile
    big = lambda ch: pl.BlockSpec((1, ch, tile), lambda i, j: (i, 0, j))
    return pl.pallas_call(
        _front_kernel,
        out_shape=(jax.ShapeDtypeStruct((n, OUT_CHANNEL, hw), jnp.float32),
                   jax.ShapeDtypeStruct((n, CU, hw), jnp.float32),
                   jax.ShapeDtypeStruct((n, CL, hw), jnp.float32),
                   jax.ShapeDtypeStruct((n, nt, OP_CHANNEL, 2), jnp.float32),
                   jax.ShapeDtypeStruct((n, nt, CU + CL, 2), jnp.float32)),
        grid=(n, nt),
        in_specs=[big(OP_CHANNEL),
                  pl.BlockSpec((OUT_CHANNEL + CU + CL, OP_CHANNEL), lambda i, j: (0, 0)),
                  pl.BlockSpec((OUT_CHANNEL, 1), lambda i, j: (0, 0))],
        out_specs=(big(OUT_CHANNEL), big(CU), big(CL),
                   pl.BlockSpec((1, 1, OP_CHANNEL, 2), lambda i, j: (i, j, 0, 0)),
                   pl.BlockSpec((1, 1, CU + CL, 2), lambda i, j: (i, j, 0, 0))),
        compiler_params=_PAR2,
    )(x3, w_front, b_id)


def _make_conv_kernel(hw, img_w):
    """Direct 5x5/3x3 GWC + channel_adj + low-path BN/ReLU + out/identity moment sums."""
    def kernel(upf_ref, low_ref, id_ref, mask_ref, wtap_ref, wlow_ref, kc_ref,
               out_ref, st_ref):
        s8l = kc_ref[0:CL, 1:2]                       # low-path BN scale  (4,1)
        t8l = kc_ref[0:CL, 2:3]                       # low-path BN shift  (4,1)
        low_act = jnp.maximum(low_ref[0] * s8l + t8l, 0.0)           # (4, hw)
        acc = jnp.dot(wlow_ref[...], low_act,
                      preferred_element_type=jnp.float32) + kc_ref[:, 0:1]
        # 25 taps of the row-padded, already-activated up stream (shared 5x5 window;
        # the 3x3 branch is folded into the same per-tap weights).
        for kh in range(5):
            for kw in range(5):
                t = kh * 5 + kw
                start = kh * img_w + kw
                tap = upf_ref[0, :, start:start + hw]                 # (4, hw)
                if kw != 2:
                    tap = tap * mask_ref[kw:kw + 1, :]                # zero wrapped cols
                acc = acc + jnp.dot(wtap_ref[t], tap,
                                    preferred_element_type=jnp.float32)
        out_ref[0] = acc
        idn = id_ref[0]
        st_ref[0, :, 0:1] = jnp.sum(acc, axis=1, keepdims=True)
        st_ref[0, :, 1:2] = jnp.sum(acc * acc, axis=1, keepdims=True)
        st_ref[0, :, 2:3] = jnp.sum(acc * idn, axis=1, keepdims=True)
        st_ref[0, :, 3:4] = jnp.sum(idn, axis=1, keepdims=True)
        st_ref[0, :, 4:5] = jnp.sum(idn * idn, axis=1, keepdims=True)
    return kernel


def conv_adj(upf, low, identity, masks, wtap, wlow, kcons, hw, img_w):
    n = upf.shape[0]
    L = upf.shape[2]
    return pl.pallas_call(
        _make_conv_kernel(hw, img_w),
        out_shape=(jax.ShapeDtypeStruct((n, OUT_CHANNEL, hw), jnp.float32),
                   jax.ShapeDtypeStruct((n, OUT_CHANNEL, 5), jnp.float32)),
        grid=(n,),
        in_specs=[pl.BlockSpec((1, CU, L), lambda i: (i, 0, 0)),
                  pl.BlockSpec((1, CL, hw), lambda i: (i, 0, 0)),
                  pl.BlockSpec((1, OUT_CHANNEL, hw), lambda i: (i, 0, 0)),
                  pl.BlockSpec((5, hw), lambda i: (0, 0)),
                  pl.BlockSpec((25, OUT_CHANNEL, CU), lambda i: (0, 0, 0)),
                  pl.BlockSpec((OUT_CHANNEL, CL), lambda i: (0, 0)),
                  pl.BlockSpec((OUT_CHANNEL, 4), lambda i: (0, 0))],
        out_specs=(pl.BlockSpec((1, OUT_CHANNEL, hw), lambda i: (i, 0, 0)),
                   pl.BlockSpec((1, OUT_CHANNEL, 5), lambda i: (i, 0, 0))),
        compiler_params=_PAR1,
    )(upf, low, identity, masks, wtap, wlow, kcons)


def _final_kernel(x_ref, co_ref, id_ref, pk_ref, cn_ref, o_ref):
    """CAOM attention FMA + BN + ReLU, SAOM gate + reconstruct, weighted combine."""
    x = x_ref[0]                                   # (16, t) original input
    out = co_ref[0]                                # (16, t) CAOM post-channel_adj
    idn = id_ref[0]                                # (16, t) shortcut
    pk = pk_ref[0]                                 # (16, 5) per-batch pack
    A, Bv, attn = pk[:, 0:1], pk[:, 1:2], pk[:, 2:3]
    w_sa, w_ca = pk[:, 3:4], pk[:, 4:5]
    bns, bnt = cn_ref[:, 0:1], cn_ref[:, 1:2]
    avec, bvec, thr = cn_ref[:, 2:3], cn_ref[:, 3:4], cn_ref[:, 4:5]

    # ---- CAOM tail: out*attn + identity -> BN (train stats) -> ReLU ----
    z = out * attn + idn
    caom = jnp.maximum(z * bns + bnt, 0.0)

    # ---- SAOM: GN (per-batch affine) -> sigmoid gate -> split -> reconstruct ----
    rew = jax.nn.sigmoid(x * A + Bv)
    keep = rew > thr
    rx = rew * x
    x1 = jnp.where(keep, x, rx)
    x2 = jnp.where(keep, 0.0, rx)
    half = OP_CHANNEL // 2
    x2s = jnp.concatenate([x2[half:, :], x2[:half, :]], axis=0)   # half-swap (sublanes)
    saom = avec * x1 + bvec * x2s

    # ---- top-level weighted combine ----
    o_ref[0] = w_sa * saom + w_ca * caom


def final_combine(x3, out3, id3, pack, consts, tile):
    n, c, hw = x3.shape
    big = pl.BlockSpec((1, c, tile), lambda i, j: (i, 0, j))
    return pl.pallas_call(
        _final_kernel,
        out_shape=jax.ShapeDtypeStruct((n, c, hw), jnp.float32),
        grid=(n, hw // tile),
        in_specs=[big, big, big,
                  pl.BlockSpec((1, OP_CHANNEL, 5), lambda i, j: (i, 0, 0)),
                  pl.BlockSpec((OP_CHANNEL, 5), lambda i, j: (0, 0))],
        out_specs=big,
        compiler_params=_PAR2,
    )(x3, out3, id3, pack, consts)


# ----------------------------- JAX glue -----------------------------------
def _mlp_sigmoid(pooled, w1, b1, w2, b2):
    """Pooled attention MLP (conv1x1 weights in torch (Cout,Cin,1,1) layout)."""
    h = jnp.maximum(pooled @ w1.reshape(w1.shape[0], -1).T + b1, 0.0)
    return jax.nn.sigmoid(h @ w2.reshape(w2.shape[0], -1).T + b2)


def _dense_group(wk, cout, cin, groups):
    """Grouped conv weight (cout, cin/groups, k, k) -> dense (cout, cin, k, k)."""
    k = wk.shape[-1]
    cout_g, cin_g = cout // groups, cin // groups
    d = jnp.zeros((cout, cin, k, k), jnp.float32)
    for g in range(groups):
        d = d.at[g * cout_g:(g + 1) * cout_g,
                 g * cin_g:(g + 1) * cin_g].set(wk[g * cout_g:(g + 1) * cout_g])
    return d


@jax.jit
def csrd_forward(x_nchw, params):
    n, c, h, w = x_nchw.shape
    hw = h * w
    tile = _row_tile(hw, n)
    x3 = x_nchw.reshape(n, c, hw).astype(jnp.float32)       # (N, C, HW) — no transpose

    pc, ps, pt = params['caom'], params['saom'], params['top']

    # ---------------- K1: fused shortcut + squeeze convs + moment sums --------------
    w_front = jnp.zeros((OUT_CHANNEL + CU + CL, OP_CHANNEL), jnp.float32)
    w_front = w_front.at[:OUT_CHANNEL, :].set(pc['sc_w'].reshape(OUT_CHANNEL, OP_CHANNEL))
    w_front = w_front.at[OUT_CHANNEL:OUT_CHANNEL + CU, :UP].set(pc['sq1_w'].reshape(CU, UP))
    w_front = w_front.at[OUT_CHANNEL + CU:, UP:].set(pc['sq2_w'].reshape(CL, LOW))
    b_id = pc['sc_b'].reshape(OUT_CHANNEL, 1)
    identity, up_raw, low_raw, xst, sqst = caom_front(x3, w_front, b_id, tile)

    # squeeze BatchNorm statistics (training mode, biased var) from K1 partial sums
    cnt = n * hw
    s_sq = sqst[..., 0].sum(axis=(0, 1))
    s_sq2 = sqst[..., 1].sum(axis=(0, 1))
    m8 = s_sq / cnt
    v8 = s_sq2 / cnt - m8 * m8
    gamma8 = jnp.concatenate([pc['bn1_g'], pc['bn2_g']])
    beta8 = jnp.concatenate([pc['bn1_b'], pc['bn2_b']])
    s8 = gamma8 / jnp.sqrt(v8 + EPS)
    t8 = beta8 - m8 * s8

    # activated + row-padded 'up' stream for the in-kernel conv (only 4 channels)
    up_act = jnp.maximum(up_raw * s8[:CU][None, :, None] + t8[:CU][None, :, None], 0.0)
    pad = 2 * w + 2
    upf = jnp.pad(up_act, ((0, 0), (0, 0), (pad, pad)))      # (n, 4, hw + 4w + 4)

    # lane-validity masks for the 5 horizontal tap offsets
    col = jnp.arange(hw, dtype=jnp.int32) % w
    masks = jnp.stack(
        [((col + (kw - 2) >= 0) & (col + (kw - 2) < w)).astype(jnp.float32)
         for kw in range(5)], axis=0)                        # (5, hw)

    # fold GWC3 + GWC5 + channel_adj into 25 per-tap (16,4) weights + low weight + bias
    d3 = _dense_group(pc['gwc3_w'], OUT_CHANNEL // 2, CU, GROUPS)     # (8,4,3,3)
    d5 = _dense_group(pc['gwc5_w'], OUT_CHANNEL // 2, CU, GROUPS)     # (8,4,5,5)
    d3in5 = jnp.zeros((OUT_CHANNEL // 2, CU, 5, 5), jnp.float32).at[:, :, 1:4, 1:4].set(d3)
    dfull = jnp.concatenate([d3in5, d5], axis=0)                      # (16,4,5,5)
    wadj = pc['adj_w'].reshape(OUT_CHANNEL, OUT_CHANNEL + CL)         # (16, 20)
    wtap = jnp.einsum('oi,icyx->yxoc', wadj[:, :OUT_CHANNEL],
                      dfull).reshape(25, OUT_CHANNEL, CU)             # (25,16,4)
    wlow = wadj[:, OUT_CHANNEL:]                                      # (16, 4)
    b_conv = jnp.concatenate([pc['gwc3_b'], pc['gwc5_b']])
    b_all = wadj[:, :OUT_CHANNEL] @ b_conv + pc['adj_b']              # (16,)
    kcons = jnp.zeros((OUT_CHANNEL, 4), jnp.float32)
    kcons = kcons.at[:, 0].set(b_all)
    kcons = kcons.at[:CL, 1].set(s8[CU:])
    kcons = kcons.at[:CL, 2].set(t8[CU:])

    # ---------------- K2: direct conv + channel_adj + out/identity moment sums ------
    out, ost = conv_adj(upf, low_raw, identity, masks, wtap, wlow, kcons, hw, w)

    # ---------------- small per-batch quantities from kernel-side sums --------------
    s_out, s_out2, s_cross = ost[:, :, 0], ost[:, :, 1], ost[:, :, 2]
    s_id, s_id2 = ost[:, :, 3], ost[:, :, 4]
    attn = _mlp_sigmoid(s_out / hw, pc['att1_w'], pc['att1_b'],
                        pc['att2_w'], pc['att2_b'])                   # (n, 16)

    # CAOM final BatchNorm stats of z = out*attn + identity, from moments (no big pass)
    mz = (attn * s_out + s_id).sum(axis=0) / cnt
    ez2 = (attn * attn * s_out2 + 2.0 * attn * s_cross + s_id2).sum(axis=0) / cnt
    vz = ez2 - mz * mz
    bns = pc['bnn_g'] / jnp.sqrt(vz + EPS)
    bnt = pc['bnn_b'] - mz * bns

    # pooled CAOM output for feature adaptation (one fused XLA read of out & identity)
    caom_act = jnp.maximum((out * attn[:, :, None] + identity) * bns[None, :, None]
                           + bnt[None, :, None], 0.0)
    wts = _mlp_sigmoid(caom_act.mean(axis=2), pt['fa1_w'], pt['fa1_b'],
                       pt['fa2_w'], pt['fa2_b'])                      # (n, 2)

    # SAOM: GroupNorm stats (per sample, per group) + channel attention from K1 sums
    s_x = xst[..., 0].sum(axis=1)                                     # (n, 16)
    s_xx = xst[..., 1].sum(axis=1)
    cg = OP_CHANNEL // GROUP_NUM
    mg = s_x.reshape(n, GROUP_NUM, cg).sum(-1) / (hw * cg)
    exg = s_xx.reshape(n, GROUP_NUM, cg).sum(-1) / (hw * cg)
    vg = exg - mg * mg
    inv_c = jnp.repeat(1.0 / jnp.sqrt(vg + EPS), cg, axis=1)          # (n, 16)
    mean_c = jnp.repeat(mg, cg, axis=1)
    gn_a = ps['gn_g'][None, :] * inv_c
    gn_b = ps['gn_b'][None, :] - mean_c * gn_a
    cw = _mlp_sigmoid(s_x / hw, ps['ca1_w'], ps['ca1_b'], ps['ca2_w'], ps['ca2_b'])
    w_gamma = ps['gn_g'] / jnp.sum(ps['gn_g'])
    wgc = w_gamma[None, :] * cw
    gate_a = gn_a * wgc                                               # gn_x*w_gamma*cw = x*A + B
    gate_b = gn_b * wgc

    # adaptive_reconstruct coefficients: same-half + cross-half (half-swap in K3)
    rw = jax.nn.softmax(ps['rec_w'], axis=0)
    half = OP_CHANNEL // 2
    avec = jnp.concatenate([jnp.broadcast_to(rw[0, 0], (half,)),
                            jnp.broadcast_to(rw[1, 0], (half,))])
    bvec = jnp.concatenate([jnp.broadcast_to(rw[0, 1], (half,)),
                            jnp.broadcast_to(rw[1, 1], (half,))])

    # per-batch parameter pack (sublane vectors, broadcast along lanes in-kernel)
    pack = jnp.stack([gate_a, gate_b, attn,
                      jnp.broadcast_to(wts[:, 0:1], (n, OP_CHANNEL)),
                      jnp.broadcast_to(wts[:, 1:2], (n, OP_CHANNEL))], axis=-1)  # (n,16,5)
    consts = jnp.stack([bns, bnt, avec, bvec,
                        jnp.broadcast_to(ps['gate'], (OP_CHANNEL,))], axis=-1)   # (16,5)

    # ---------------- K3: fully fused CAOM tail + SAOM + weighted combine -----------
    out_f = final_combine(x3, out, identity, pack, consts, tile)
    return out_f.reshape(n, OUT_CHANNEL, h, w)


# ----------------------------- parameters ----------------------------------
def init_params(key):
    keys = jax.random.split(key, 32)
    ki = iter(keys)

    def rnd(shape, scale=0.2):
        return scale * jax.random.normal(next(ki), shape, dtype=jnp.float32)

    caom = dict(
        sc_w=rnd((OUT_CHANNEL, OP_CHANNEL, 1, 1)), sc_b=rnd((OUT_CHANNEL,)),
        sq1_w=rnd((CU, UP, 1, 1)),
        bn1_g=jnp.ones((CU,), jnp.float32), bn1_b=jnp.zeros((CU,), jnp.float32),
        sq2_w=rnd((CL, LOW, 1, 1)),
        bn2_g=jnp.ones((CL,), jnp.float32), bn2_b=jnp.zeros((CL,), jnp.float32),
        gwc3_w=rnd((OUT_CHANNEL // 2, CU // GROUPS, 3, 3)), gwc3_b=rnd((OUT_CHANNEL // 2,)),
        gwc5_w=rnd((OUT_CHANNEL // 2, CU // GROUPS, 5, 5)), gwc5_b=rnd((OUT_CHANNEL // 2,)),
        att1_w=rnd((OUT_CHANNEL // 8, OUT_CHANNEL, 1, 1)), att1_b=rnd((OUT_CHANNEL // 8,)),
        att2_w=rnd((OUT_CHANNEL, OUT_CHANNEL // 8, 1, 1)), att2_b=rnd((OUT_CHANNEL,)),
        adj_w=rnd((OUT_CHANNEL, OUT_CHANNEL + CL, 1, 1)), adj_b=rnd((OUT_CHANNEL,)),
        bnn_g=jnp.ones((OUT_CHANNEL,), jnp.float32), bnn_b=jnp.zeros((OUT_CHANNEL,), jnp.float32),
    )
    saom = dict(
        gn_g=jnp.ones((OP_CHANNEL,), jnp.float32), gn_b=jnp.zeros((OP_CHANNEL,), jnp.float32),
        gate=jnp.float32(GATE_T),
        ca1_w=rnd((OP_CHANNEL // 4, OP_CHANNEL, 1, 1)), ca1_b=rnd((OP_CHANNEL // 4,)),
        ca2_w=rnd((OP_CHANNEL, OP_CHANNEL // 4, 1, 1)), ca2_b=rnd((OP_CHANNEL,)),
        rec_w=jnp.ones((2, 2), jnp.float32),
    )
    top = dict(
        fa1_w=rnd((OUT_CHANNEL // 8, OUT_CHANNEL, 1, 1)), fa1_b=rnd((OUT_CHANNEL // 8,)),
        fa2_w=rnd((2, OUT_CHANNEL // 8, 1, 1)), fa2_b=rnd((2,)),
    )
    return dict(caom=caom, saom=saom, top=top)


# ----------------------------- main -----------------------------------------
if __name__ == "__main__":
    key = jax.random.PRNGKey(0)
    kx, kp = jax.random.split(key)
    x = jax.random.normal(kx, (2, OP_CHANNEL, 16, 16), dtype=jnp.float32)  # NCHW
    params = init_params(kp)
    out = csrd_forward(x, params)
    jax.block_until_ready(out)
    assert out.shape == (2, OUT_CHANNEL, 16, 16), out.shape
    assert out.dtype == jnp.float32
    print("KERNEL_OK")
</pallas_src>

<mosaic_0001>
module attributes {stable_mosaic.version = 11 : i64} {
  func.func @_front_kernel(%arg0: i32, %arg1: i32, %arg2: memref<1x16x128xf32, #tpu.memory_space<vmem>>, %arg3: memref<24x16xf32, #tpu.memory_space<vmem>>, %arg4: memref<16x1xf32, #tpu.memory_space<vmem>>, %arg5: memref<1x16x128xf32, #tpu.memory_space<vmem>>, %arg6: memref<1x4x128xf32, #tpu.memory_space<vmem>>, %arg7: memref<1x4x128xf32, #tpu.memory_space<vmem>>, %arg8: memref<1x1x16x2xf32, #tpu.memory_space<vmem>>, %arg9: memref<1x1x8x2xf32, #tpu.memory_space<vmem>>) attributes {dimension_semantics = [#tpu.dimension_semantics<parallel>, #tpu.dimension_semantics<parallel>], iteration_bounds = array<i64: 2, 2>, scalar_prefetch = 0 : i64, scratch_operands = 0 : i64, tpu.core_type = #tpu.core_type<tc>, window_params = [{transform_indices = @transform_0, window_bounds = array<i64: 1, 16, 128>}, {pipeline_mode = #tpu.pipeline_mode<synchronous>, transform_indices = @transform_1, window_bounds = array<i64: 24, 16>}, {pipeline_mode = #tpu.pipeline_mode<synchronous>, transform_indices = @transform_2, window_bounds = array<i64: 16, 1>}, {transform_indices = @transform_3, window_bounds = array<i64: 1, 16, 128>}, {transform_indices = @transform_4, window_bounds = array<i64: 1, 4, 128>}, {transform_indices = @transform_5, window_bounds = array<i64: 1, 4, 128>}, {transform_indices = @transform_6, window_bounds = array<i64: 1, 1, 16, 2>}, {transform_indices = @transform_7, window_bounds = array<i64: 1, 1, 8, 2>}]} {
    %c0 = arith.constant 0 : index
    %c0_0 = arith.constant 0 : index
    %c0_1 = arith.constant 0 : index
    %0 = vector.load %arg2[%c0, %c0_0, %c0_1] : memref<1x16x128xf32, #tpu.memory_space<vmem>>, vector<1x16x128xf32>
    %1 = vector.shape_cast %0 : vector<1x16x128xf32> to vector<16x128xf32>
    %c0_2 = arith.constant 0 : index
    %c0_3 = arith.constant 0 : index
    %2 = vector.load %arg3[%c0_2, %c0_3] : memref<24x16xf32, #tpu.memory_space<vmem>>, vector<24x16xf32>
    %cst = arith.constant dense<0.000000e+00> : vector<24x128xf32>
    %3 = tpu.matmul %2, %1, %cst {dimension_numbers = #tpu.dot_dimension_numbers<[1], [0], [0], [1], [0, 0, 1, 1], [], []>} : vector<24x16xf32>, vector<16x128xf32>, vector<24x128xf32> -> vector<24x128xf32>
    %4 = vector.extract_strided_slice %3 {offsets = [0, 0], sizes = [16, 128], strides = [1, 1]} : vector<24x128xf32> to vector<16x128xf32>
    %c0_4 = arith.constant 0 : index
    %c0_5 = arith.constant 0 : index
    %5 = vector.load %arg4[%c0_4, %c0_5] : memref<16x1xf32, #tpu.memory_space<vmem>>, vector<16x1xf32>
    %6 = vector.broadcast %5 : vector<16x1xf32> to vector<16x128xf32>
    %7 = arith.addf %4, %6 : vector<16x128xf32>
    %8 = vector.extract_strided_slice %3 {offsets = [16, 0], sizes = [8, 128], strides = [1, 1]} : vector<24x128xf32> to vector<8x128xf32>
    %c0_6 = arith.constant 0 : index
    %c0_7 = arith.constant 0 : index
    %c0_8 = arith.constant 0 : index
    %9 = vector.load %arg5[%c0_6, %c0_7, %c0_8] : memref<1x16x128xf32, #tpu.memory_space<vmem>>, vector<1x16x128xf32>
    %10 = vector.shape_cast %9 : vector<1x16x128xf32> to vector<16x128xf32>
    %11 = vector.shape_cast %7 : vector<16x128xf32> to vector<1x16x128xf32>
    tpu.vector_store %arg5[%c0_6, %c0_7, %c0_8], %11 {strides = array<i32>} : memref<1x16x128xf32, #tpu.memory_space<vmem>>, vector<1x16x128xf32>,
    %12 = vector.extract_strided_slice %8 {offsets = [0, 0], sizes = [4, 128], strides = [1, 1]} : vector<8x128xf32> to vector<4x128xf32>
    %c0_9 = arith.constant 0 : index
    %c0_10 = arith.constant 0 : index
    %c0_11 = arith.constant 0 : index
    %13 = vector.load %arg6[%c0_9, %c0_10, %c0_11] : memref<1x4x128xf32, #tpu.memory_space<vmem>>, vector<1x4x128xf32>
    %14 = vector.shape_cast %13 : vector<1x4x128xf32> to vector<4x128xf32>
    %15 = vector.shape_cast %12 : vector<4x128xf32> to vector<1x4x128xf32>
    tpu.vector_store %arg6[%c0_9, %c0_10, %c0_11], %15 {strides = array<i32>} : memref<1x4x128xf32, #tpu.memory_space<vmem>>, vector<1x4x128xf32>,
    %16 = vector.extract_strided_slice %8 {offsets = [4, 0], sizes = [4, 128], strides = [1, 1]} : vector<8x128xf32> to vector<4x128xf32>
    %c0_12 = arith.constant 0 : index
    %c0_13 = arith.constant 0 : index
    %c0_14 = arith.constant 0 : index
    %17 = vector.load %arg7[%c0_12, %c0_13, %c0_14] : memref<1x4x128xf32, #tpu.memory_space<vmem>>, vector<1x4x128xf32>
    %18 = vector.shape_cast %17 : vector<1x4x128xf32> to vector<4x128xf32>
    %19 = vector.shape_cast %16 : vector<4x128xf32> to vector<1x4x128xf32>
    tpu.vector_store %arg7[%c0_12, %c0_13, %c0_14], %19 {strides = array<i32>} : memref<1x4x128xf32, #tpu.memory_space<vmem>>, vector<1x4x128xf32>,
    %cst_15 = arith.constant dense<0.000000e+00> : vector<16xf32>
    %20 = vector.multi_reduction <add>, %1, %cst_15 [1] : vector<16x128xf32> to vector<16xf32>
    %21 = vector.shape_cast %20 : vector<16xf32> to vector<16x1xf32>
    %c0_16 = arith.constant 0 : index
    %c0_17 = arith.constant 0 : index
    %c0_18 = arith.constant 0 : index
    %c0_19 = arith.constant 0 : index
    %22 = vector.load %arg8[%c0_16, %c0_17, %c0_18, %c0_19] : memref<1x1x16x2xf32, #tpu.memory_space<vmem>>, vector<1x1x16x1xf32>
    %23 = vector.shape_cast %22 : vector<1x1x16x1xf32> to vector<16x1xf32>
    %24 = vector.shape_cast %21 : vector<16x1xf32> to vector<1x1x16x1xf32>
    tpu.vector_store %arg8[%c0_16, %c0_17, %c0_18, %c0_19], %24 {strides = array<i32>} : memref<1x1x16x2xf32, #tpu.memory_space<vmem>>, vector<1x1x16x1xf32>,
    %25 = arith.mulf %1, %1 : vector<16x128xf32>
    %cst_20 = arith.constant dense<0.000000e+00> : vector<16xf32>
    %26 = vector.multi_reduction <add>, %25, %cst_20 [1] : vector<16x128xf32> to vector<16xf32>
    %27 = vector.shape_cast %26 : vector<16xf32> to vector<16x1xf32>
    %c0_21 = arith.constant 0 : index
    %c0_22 = arith.constant 0 : index
    %c0_23 = arith.constant 0 : index
    %c1 = arith.constant 1 : index
    %28 = vector.load %arg8[%c0_21, %c0_22, %c0_23, %c1] : memref<1x1x16x2xf32, #tpu.memory_space<vmem>>, vector<1x1x16x1xf32>
    %29 = vector.shape_cast %28 : vector<1x1x16x1xf32> to vector<16x1xf32>
    %30 = vector.shape_cast %27 : vector<16x1xf32> to vector<1x1x16x1xf32>
    tpu.vector_store %arg8[%c0_21, %c0_22, %c0_23, %c1], %30 {strides = array<i32>} : memref<1x1x16x2xf32, #tpu.memory_space<vmem>>, vector<1x1x16x1xf32>,
    %cst_24 = arith.constant dense<0.000000e+00> : vector<8xf32>
    %31 = vector.multi_reduction <add>, %8, %cst_24 [1] : vector<8x128xf32> to vector<8xf32>
    %32 = vector.shape_cast %31 : vector<8xf32> to vector<8x1xf32>
    %c0_25 = arith.constant 0 : index
    %c0_26 = arith.constant 0 : index
    %c0_27 = arith.constant 0 : index
    %c0_28 = arith.constant 0 : index
    %33 = vector.load %arg9[%c0_25, %c0_26, %c0_27, %c0_28] : memref<1x1x8x2xf32, #tpu.memory_space<vmem>>, vector<1x1x8x1xf32>
    %34 = vector.shape_cast %33 : vector<1x1x8x1xf32> to vector<8x1xf32>
    %35 = vector.shape_cast %32 : vector<8x1xf32> to vector<1x1x8x1xf32>
    tpu.vector_store %arg9[%c0_25, %c0_26, %c0_27, %c0_28], %35 {strides = array<i32>} : memref<1x1x8x2xf32, #tpu.memory_space<vmem>>, vector<1x1x8x1xf32>,
    %36 = arith.mulf %8, %8 : vector<8x128xf32>
    %cst_29 = arith.constant dense<0.000000e+00> : vector<8xf32>
    %37 = vector.multi_reduction <add>, %36, %cst_29 [1] : vector<8x128xf32> to vector<8xf32>
    %38 = vector.shape_cast %37 : vector<8xf32> to vector<8x1xf32>
    %c0_30 = arith.constant 0 : index
    %c0_31 = arith.constant 0 : index
    %c0_32 = arith.constant 0 : index
    %c1_33 = arith.constant 1 : index
    %39 = vector.load %arg9[%c0_30, %c0_31, %c0_32, %c1_33] : memref<1x1x8x2xf32, #tpu.memory_space<vmem>>, vector<1x1x8x1xf32>
    %40 = vector.shape_cast %39 : vector<1x1x8x1xf32> to vector<8x1xf32>
    %41 = vector.shape_cast %38 : vector<8x1xf32> to vector<1x1x8x1xf32>
    tpu.vector_store %arg9[%c0_30, %c0_31, %c0_32, %c1_33], %41 {strides = array<i32>} : memref<1x1x8x2xf32, #tpu.memory_space<vmem>>, vector<1x1x8x1xf32>,
    return
  }
  func.func @transform_0(%arg0: i32, %arg1: i32) -> (i32, i32, i32) {
    %c0_i32 = arith.constant 0 : i32
    %c0_i32_0 = arith.constant 0 : i32
    return %arg0, %c0_i32, %arg1 : i32, i32, i32
  }
  func.func @transform_1(%arg0: i32, %arg1: i32) -> (i32, i32) {
    %c0_i32 = arith.constant 0 : i32
    %c0_i32_0 = arith.constant 0 : i32
    %c0_i32_1 = arith.constant 0 : i32
    return %c0_i32, %c0_i32_0 : i32, i32
  }
  func.func @transform_2(%arg0: i32, %arg1: i32) -> (i32, i32) {
    %c0_i32 = arith.constant 0 : i32
    %c0_i32_0 = arith.constant 0 : i32
    %c0_i32_1 = arith.constant 0 : i32
    return %c0_i32, %c0_i32_0 : i32, i32
  }
  func.func @transform_3(%arg0: i32, %arg1: i32) -> (i32, i32, i32) {
    %c0_i32 = arith.constant 0 : i32
    %c0_i32_0 = arith.constant 0 : i32
    return %arg0, %c0_i32, %arg1 : i32, i32, i32
  }
  func.func @transform_4(%arg0: i32, %arg1: i32) -> (i32, i32, i32) {
    %c0_i32 = arith.constant 0 : i32
    %c0_i32_0 = arith.constant 0 : i32
    return %arg0, %c0_i32, %arg1 : i32, i32, i32
  }
  func.func @transform_5(%arg0: i32, %arg1: i32) -> (i32, i32, i32) {
    %c0_i32 = arith.constant 0 : i32
    %c0_i32_0 = arith.constant 0 : i32
    return %arg0, %c0_i32, %arg1 : i32, i32, i32
  }
  func.func @transform_6(%arg0: i32, %arg1: i32) -> (i32, i32, i32, i32) {
    %c0_i32 = arith.constant 0 : i32
    %c0_i32_0 = arith.constant 0 : i32
    %c0_i32_1 = arith.constant 0 : i32
    return %arg0, %arg1, %c0_i32, %c0_i32_0 : i32, i32, i32, i32
  }
  func.func @transform_7(%arg0: i32, %arg1: i32) -> (i32, i32, i32, i32) {
    %c0_i32 = arith.constant 0 : i32
    %c0_i32_0 = arith.constant 0 : i32
    %c0_i32_1 = arith.constant 0 : i32
    return %arg0, %arg1, %c0_i32, %c0_i32_0 : i32, i32, i32, i32
  }
}

module attributes {stable_mosaic.version = 11 : i64} {
  func.func @kernel(%arg0: i32, %arg1: memref<1x4x324xf32, #tpu.memory_space<vmem>>, %arg2: memref<1x4x256xf32, #tpu.memory_space<vmem>>, %arg3: memref<1x16x256xf32, #tpu.memory_space<vmem>>, %arg4: memref<5x256xf32, #tpu.memory_space<vmem>>, %arg5: memref<25x16x4xf32, #tpu.memory_space<vmem>>, %arg6: memref<16x4xf32, #tpu.memory_space<vmem>>, %arg7: memref<16x4xf32, #tpu.memory_space<vmem>>, %arg8: memref<1x16x256xf32, #tpu.memory_space<vmem>>, %arg9: memref<1x16x5xf32, #tpu.memory_space<vmem>>) attributes {dimension_semantics = [#tpu.dimension_semantics<parallel>], iteration_bounds = array<i64: 2>, scalar_prefetch = 0 : i64, scratch_operands = 0 : i64, tpu.core_type = #tpu.core_type<tc>, window_params = [{transform_indices = @transform_0, window_bounds = array<i64: 1, 4, 324>}, {transform_indices = @transform_1, window_bounds = array<i64: 1, 4, 256>}, {transform_indices = @transform_2, window_bounds = array<i64: 1, 16, 256>}, {pipeline_mode = #tpu.pipeline_mode<synchronous>, transform_indices = @transform_3, window_bounds = array<i64: 5, 256>}, {pipeline_mode = #tpu.pipeline_mode<synchronous>, transform_indices = @transform_4, window_bounds = array<i64: 25, 16, 4>}, {pipeline_mode = #tpu.pipeline_mode<synchronous>, transform_indices = @transform_5, window_bounds = array<i64: 16, 4>}, {pipeline_mode = #tpu.pipeline_mode<synchronous>, transform_indices = @transform_6, window_bounds = array<i64: 16, 4>}, {transform_indices = @transform_7, window_bounds = array<i64: 1, 16, 256>}, {transform_indices = @transform_8, window_bounds = array<i64: 1, 16, 5>}]} {
    %c0 = arith.constant 0 : index
    %c1 = arith.constant 1 : index
    %0 = vector.load %arg7[%c0, %c1] : memref<16x4xf32, #tpu.memory_space<vmem>>, vector<4x1xf32>
    %c0_0 = arith.constant 0 : index
    %c2 = arith.constant 2 : index
    %1 = vector.load %arg7[%c0_0, %c2] : memref<16x4xf32, #tpu.memory_space<vmem>>, vector<4x1xf32>
    %c0_1 = arith.constant 0 : index
    %c0_2 = arith.constant 0 : index
    %c0_3 = arith.constant 0 : index
    %2 = vector.load %arg2[%c0_1, %c0_2, %c0_3] : memref<1x4x256xf32, #tpu.memory_space<vmem>>, vector<1x4x256xf32>
    %3 = vector.shape_cast %2 : vector<1x4x256xf32> to vector<4x256xf32>
    %4 = vector.broadcast %0 : vector<4x1xf32> to vector<4x256xf32>
    %5 = arith.mulf %3, %4 : vector<4x256xf32>
    %6 = vector.broadcast %1 : vector<4x1xf32> to vector<4x256xf32>
    %7 = arith.addf %5, %6 : vector<4x256xf32>
    %cst = arith.constant 0.000000e+00 : f32
    %8 = vector.broadcast %cst : f32 to vector<4x256xf32>
    %9 = arith.maximumf %7, %8 : vector<4x256xf32>
    %c0_4 = arith.constant 0 : index
    %c0_5 = arith.constant 0 : index
    %10 = vector.load %arg6[%c0_4, %c0_5] : memref<16x4xf32, #tpu.memory_space<vmem>>, vector<16x4xf32>
    %cst_6 = arith.constant dense<0.000000e+00> : vector<16x256xf32>
    %11 = tpu.matmul %10, %9, %cst_6 {dimension_numbers = #tpu.dot_dimension_numbers<[1], [0], [0], [1], [0, 0, 1, 1], [], []>} : vector<16x4xf32>, vector<4x256xf32>, vector<16x256xf32> -> vector<16x256xf32>
    %c0_7 = arith.constant 0 : index
    %c0_8 = arith.constant 0 : index
    %12 = vector.load %arg7[%c0_7, %c0_8] : memref<16x4xf32, #tpu.memory_space<vmem>>, vector<16x1xf32>
    %13 = vector.broadcast %12 : vector<16x1xf32> to vector<16x256xf32>
    %14 = arith.addf %11, %13 : vector<16x256xf32>
    %c0_9 = arith.constant 0 : index
    %c0_10 = arith.constant 0 : index
    %c0_11 = arith.constant 0 : index
    %15 = vector.load %arg1[%c0_9, %c0_10, %c0_11] : memref<1x4x324xf32, #tpu.memory_space<vmem>>, vector<1x4x256xf32>
    %16 = vector.shape_cast %15 : vector<1x4x256xf32> to vector<4x256xf32>
    %c0_12 = arith.constant 0 : index
    %c0_13 = arith.constant 0 : index
    %17 = vector.load %arg4[%c0_12, %c0_13] : memref<5x256xf32, #tpu.memory_space<vmem>>, vector<1x256xf32>
    %18 = vector.broadcast %17 : vector<1x256xf32> to vector<4x256xf32>
    %19 = arith.mulf %16, %18 : vector<4x256xf32>
    %c0_14 = arith.constant 0 : index
    %c0_15 = arith.constant 0 : index
    %c0_16 = arith.constant 0 : index
    %20 = vector.load %arg5[%c0_14, %c0_15, %c0_16] : memref<25x16x4xf32, #tpu.memory_space<vmem>>, vector<1x16x4xf32>
    %21 = vector.shape_cast %20 : vector<1x16x4xf32> to vector<16x4xf32>
    %cst_17 = arith.constant dense<0.000000e+00> : vector<16x256xf32>
    %22 = tpu.matmul %21, %19, %cst_17 {dimension_numbers = #tpu.dot_dimension_numbers<[1], [0], [0], [1], [0, 0, 1, 1], [], []>} : vector<16x4xf32>, vector<4x256xf32>, vector<16x256xf32> -> vector<16x256xf32>
    %23 = arith.addf %14, %22 : vector<16x256xf32>
    %c0_18 = arith.constant 0 : index
    %c0_19 = arith.constant 0 : index
    %c1_20 = arith.constant 1 : index
    %24 = vector.load %arg1[%c0_18, %c0_19, %c1_20] : memref<1x4x324xf32, #tpu.memory_space<vmem>>, vector<1x4x256xf32>
    %25 = vector.shape_cast %24 : vector<1x4x256xf32> to vector<4x256xf32>
    %c1_21 = arith.constant 1 : index
    %c0_22 = arith.constant 0 : index
    %26 = vector.load %arg4[%c1_21, %c0_22] : memref<5x256xf32, #tpu.memory_space<vmem>>, vector<1x256xf32>
    %27 = vector.broadcast %26 : vector<1x256xf32> to vector<4x256xf32>
    %28 = arith.mulf %25, %27 : vector<4x256xf32>
    %c1_23 = arith.constant 1 : index
    %c0_24 = arith.constant 0 : index
    %c0_25 = arith.constant 0 : index
    %29 = vector.load %arg5[%c1_23, %c0_24, %c0_25] : memref<25x16x4xf32, #tpu.memory_space<vmem>>, vector<1x16x4xf32>
    %30 = vector.shape_cast %29 : vector<1x16x4xf32> to vector<16x4xf32>
    %cst_26 = arith.constant dense<0.000000e+00> : vector<16x256xf32>
    %31 = tpu.matmul %30, %28, %cst_26 {dimension_numbers = #tpu.dot_dimension_numbers<[1], [0], [0], [1], [0, 0, 1, 1], [], []>} : vector<16x4xf32>, vector<4x256xf32>, vector<16x256xf32> -> vector<16x256xf32>
    %32 = arith.addf %23, %31 : vector<16x256xf32>
    %c0_27 = arith.constant 0 : index
    %c0_28 = arith.constant 0 : index
    %c2_29 = arith.constant 2 : index
    %33 = vector.load %arg1[%c0_27, %c0_28, %c2_29] : memref<1x4x324xf32, #tpu.memory_space<vmem>>, vector<1x4x256xf32>
    %34 = vector.shape_cast %33 : vector<1x4x256xf32> to vector<4x256xf32>
    %c2_30 = arith.constant 2 : index
    %c0_31 = arith.constant 0 : index
    %c0_32 = arith.constant 0 : index
    %35 = vector.load %arg5[%c2_30, %c0_31, %c0_32] : memref<25x16x4xf32, #tpu.memory_space<vmem>>, vector<1x16x4xf32>
    %36 = vector.shape_cast %35 : vector<1x16x4xf32> to vector<16x4xf32>
    %cst_33 = arith.constant dense<0.000000e+00> : vector<16x256xf32>
    %37 = tpu.matmul %36, %34, %cst_33 {dimension_numbers = #tpu.dot_dimension_numbers<[1], [0], [0], [1], [0, 0, 1, 1], [], []>} : vector<16x4xf32>, vector<4x256xf32>, vector<16x256xf32> -> vector<16x256xf32>
    %38 = arith.addf %32, %37 : vector<16x256xf32>
    %c0_34 = arith.constant 0 : index
    %c0_35 = arith.constant 0 : index
    %c3 = arith.constant 3 : index
    %39 = vector.load %arg1[%c0_34, %c0_35, %c3] : memref<1x4x324xf32, #tpu.memory_space<vmem>>, vector<1x4x256xf32>
    %40 = vector.shape_cast %39 : vector<1x4x256xf32> to vector<4x256xf32>
    %c3_36 = arith.constant 3 : index
    %c0_37 = arith.constant 0 : index
    %41 = vector.load %arg4[%c3_36, %c0_37] : memref<5x256xf32, #tpu.memory_space<vmem>>, vector<1x256xf32>
    %42 = vector.broadcast %41 : vector<1x256xf32> to vector<4x256xf32>
    %43 = arith.mulf %40, %42 : vector<4x256xf32>
    %c3_38 = arith.constant 3 : index
    %c0_39 = arith.constant 0 : index
    %c0_40 = arith.constant 0 : index
    %44 = vector.load %arg5[%c3_38, %c0_39, %c0_40] : memref<25x16x4xf32, #tpu.memory_space<vmem>>, vector<1x16x4xf32>
    %45 = vector.shape_cast %44 : vector<1x16x4xf32> to vector<16x4xf32>
    %cst_41 = arith.constant dense<0.000000e+00> : vector<16x256xf32>
    %46 = tpu.matmul %45, %43, %cst_41 {dimension_numbers = #tpu.dot_dimension_numbers<[1], [0], [0], [1], [0, 0, 1, 1], [], []>} : vector<16x4xf32>, vector<4x256xf32>, vector<16x256xf32> -> vector<16x256xf32>
    %47 = arith.addf %38, %46 : vector<16x256xf32>
    %c0_42 = arith.constant 0 : index
    %c0_43 = arith.constant 0 : index
    %c4 = arith.constant 4 : index
    %48 = vector.load %arg1[%c0_42, %c0_43, %c4] : memref<1x4x324xf32, #tpu.memory_space<vmem>>, vector<1x4x256xf32>
    %49 = vector.shape_cast %48 : vector<1x4x256xf32> to vector<4x256xf32>
    %c4_44 = arith.constant 4 : index
    %c0_45 = arith.constant 0 : index
    %50 = vector.load %arg4[%c4_44, %c0_45] : memref<5x256xf32, #tpu.memory_space<vmem>>, vector<1x256xf32>
    %51 = vector.broadcast %50 : vector<1x256xf32> to vector<4x256xf32>
    %52 = arith.mulf %49, %51 : vector<4x256xf32>
    %c4_46 = arith.constant 4 : index
    %c0_47 = arith.constant 0 : index
    %c0_48 = arith.constant 0 : index
    %53 = vector.load %arg5[%c4_46, %c0_47, %c0_48] : memref<25x16x4xf32, #tpu.memory_space<vmem>>, vector<1x16x4xf32>
    %54 = vector.shape_cast %53 : vector<1x16x4xf32> to vector<16x4xf32>
    %cst_49 = arith.constant dense<0.000000e+00> : vector<16x256xf32>
    %55 = tpu.matmul %54, %52, %cst_49 {dimension_numbers = #tpu.dot_dimension_numbers<[1], [0], [0], [1], [0, 0, 1, 1], [], []>} : vector<16x4xf32>, vector<4x256xf32>, vector<16x256xf32> -> vector<16x256xf32>
    %56 = arith.addf %47, %55 : vector<16x256xf32>
    %c0_50 = arith.constant 0 : index
    %c0_51 = arith.constant 0 : index
    %c16 = arith.constant 16 : index
    %57 = vector.load %arg1[%c0_50, %c0_51, %c16] : memref<1x4x324xf32, #tpu.memory_space<vmem>>, vector<1x4x256xf32>
    %58 = vector.shape_cast %57 : vector<1x4x256xf32> to vector<4x256xf32>
    %c0_52 = arith.constant 0 : index
    %c0_53 = arith.constant 0 : index
    %59 = vector.load %arg4[%c0_52, %c0_53] : memref<5x256xf32, #tpu.memory_space<vmem>>, vector<1x256xf32>
    %60 = vector.broadcast %59 : vector<1x256xf32> to vector<4x256xf32>
    %61 = arith.mulf %58, %60 : vector<4x256xf32>
    %c5 = arith.constant 5 : index
    %c0_54 = arith.constant 0 : index
    %c0_55 = arith.constant 0 : index
    %62 = vector.load %arg5[%c5, %c0_54, %c0_55] : memref<25x16x4xf32, #tpu.memory_space<vmem>>, vector<1x16x4xf32>
    %63 = vector.shape_cast %62 : vector<1x16x4xf32> to vector<16x4xf32>
    %cst_56 = arith.constant dense<0.000000e+00> : vector<16x256xf32>
    %64 = tpu.matmul %63, %61, %cst_56 {dimension_numbers = #tpu.dot_dimension_numbers<[1], [0], [0], [1], [0, 0, 1, 1], [], []>} : vector<16x4xf32>, vector<4x256xf32>, vector<16x256xf32> -> vector<16x256xf32>
    %65 = arith.addf %56, %64 : vector<16x256xf32>
    %c0_57 = arith.constant 0 : index
    %c0_58 = arith.constant 0 : index
    %c17 = arith.constant 17 : index
    %66 = vector.load %arg1[%c0_57, %c0_58, %c17] : memref<1x4x324xf32, #tpu.memory_space<vmem>>, vector<1x4x256xf32>
    %67 = vector.shape_cast %66 : vector<1x4x256xf32> to vector<4x256xf32>
    %c1_59 = arith.constant 1 : index
    %c0_60 = arith.constant 0 : index
    %68 = vector.load %arg4[%c1_59, %c0_60] : memref<5x256xf32, #tpu.memory_space<vmem>>, vector<1x256xf32>
    %69 = vector.broadcast %68 : vector<1x256xf32> to vector<4x256xf32>
    %70 = arith.mulf %67, %69 : vector<4x256xf32>
    %c6 = arith.constant 6 : index
    %c0_61 = arith.constant 0 : index
    %c0_62 = arith.constant 0 : index
    %71 = vector.load %arg5[%c6, %c0_61, %c0_62] : memref<25x16x4xf32, #tpu.memory_space<vmem>>, vector<1x16x4xf32>
    %72 = vector.shape_cast %71 : vector<1x16x4xf32> to vector<16x4xf32>
    %cst_63 = arith.constant dense<0.000000e+00> : vector<16x256xf32>
    %73 = tpu.matmul %72, %70, %cst_63 {dimension_numbers = #tpu.dot_dimension_numbers<[1], [0], [0], [1], [0, 0, 1, 1], [], []>} : vector<16x4xf32>, vector<4x256xf32>, vector<16x256xf32> -> vector<16x256xf32>
    %74 = arith.addf %65, %73 : vector<16x256xf32>
    %c0_64 = arith.constant 0 : index
    %c0_65 = arith.constant 0 : index
    %c18 = arith.constant 18 : index
    %75 = vector.load %arg1[%c0_64, %c0_65, %c18] : memref<1x4x324xf32, #tpu.memory_space<vmem>>, vector<1x4x256xf32>
    %76 = vector.shape_cast %75 : vector<1x4x256xf32> to vector<4x256xf32>
    %c7 = arith.constant 7 : index
    %c0_66 = arith.constant 0 : index
    %c0_67 = arith.constant 0 : index
    %77 = vector.load %arg5[%c7, %c0_66, %c0_67] : memref<25x16x4xf32, #tpu.memory_space<vmem>>, vector<1x16x4xf32>
    %78 = vector.shape_cast %77 : vector<1x16x4xf32> to vector<16x4xf32>
    %cst_68 = arith.constant dense<0.000000e+00> : vector<16x256xf32>
    %79 = tpu.matmul %78, %76, %cst_68 {dimension_numbers = #tpu.dot_dimension_numbers<[1], [0], [0], [1], [0, 0, 1, 1], [], []>} : vector<16x4xf32>, vector<4x256xf32>, vector<16x256xf32> -> vector<16x256xf32>
    %80 = arith.addf %74, %79 : vector<16x256xf32>
    %c0_69 = arith.constant 0 : index
    %c0_70 = arith.constant 0 : index
    %c19 = arith.constant 19 : index
    %81 = vector.load %arg1[%c0_69, %c0_70, %c19] : memref<1x4x324xf32, #tpu.memory_space<vmem>>, vector<1x4x256xf32>
    %82 = vector.shape_cast %81 : vector<1x4x256xf32> to vector<4x256xf32>
    %c3_71 = arith.constant 3 : index
    %c0_72 = arith.constant 0 : index
    %83 = vector.load %arg4[%c3_71, %c0_72] : memref<5x256xf32, #tpu.memory_space<vmem>>, vector<1x256xf32>
    %84 = vector.broadcast %83 : vector<1x256xf32> to vector<4x256xf32>
    %85 = arith.mulf %82, %84 : vector<4x256xf32>
    %c8 = arith.constant 8 : index
    %c0_73 = arith.constant 0 : index
    %c0_74 = arith.constant 0 : index
    %86 = vector.load %arg5[%c8, %c0_73, %c0_74] : memref<25x16x4xf32, #tpu.memory_space<vmem>>, vector<1x16x4xf32>
    %87 = vector.shape_cast %86 : vector<1x16x4xf32> to vector<16x4xf32>
    %cst_75 = arith.constant dense<0.000000e+00> : vector<16x256xf32>
    %88 = tpu.matmul %87, %85, %cst_75 {dimension_numbers = #tpu.dot_dimension_numbers<[1], [0], [0], [1], [0, 0, 1, 1], [], []>} : vector<16x4xf32>, vector<4x256xf32>, vector<16x256xf32> -> vector<16x256xf32>
    %89 = arith.addf %80, %88 : vector<16x256xf32>
    %c0_76 = arith.constant 0 : index
    %c0_77 = arith.constant 0 : index
    %c20 = arith.constant 20 : index
    %90 = vector.load %arg1[%c0_76, %c0_77, %c20] : memref<1x4x324xf32, #tpu.memory_space<vmem>>, vector<1x4x256xf32>
    %91 = vector.shape_cast %90 : vector<1x4x256xf32> to vector<4x256xf32>
    %c4_78 = arith.constant 4 : index
    %c0_79 = arith.constant 0 : index
    %92 = vector.load %arg4[%c4_78, %c0_79] : memref<5x256xf32, #tpu.memory_space<vmem>>, vector<1x256xf32>
    %93 = vector.broadcast %92 : vector<1x256xf32> to vector<4x256xf32>
    %94 = arith.mulf %91, %93 : vector<4x256xf32>
    %c9 = arith.constant 9 : index
    %c0_80 = arith.constant 0 : index
    %c0_81 = arith.constant 0 : index
    %95 = vector.load %arg5[%c9, %c0_80, %c0_81] : memref<25x16x4xf32, #tpu.memory_space<vmem>>, vector<1x16x4xf32>
    %96 = vector.shape_cast %95 : vector<1x16x4xf32> to vector<16x4xf32>
    %cst_82 = arith.constant dense<0.000000e+00> : vector<16x256xf32>
    %97 = tpu.matmul %96, %94, %cst_82 {dimension_numbers = #tpu.dot_dimension_numbers<[1], [0], [0], [1], [0, 0, 1, 1], [], []>} : vector<16x4xf32>, vector<4x256xf32>, vector<16x256xf32> -> vector<16x256xf32>
    %98 = arith.addf %89, %97 : vector<16x256xf32>
    %c0_83 = arith.constant 0 : index
    %c0_84 = arith.constant 0 : index
    %c32 = arith.constant 32 : index
    %99 = vector.load %arg1[%c0_83, %c0_84, %c32] : memref<1x4x324xf32, #tpu.memory_space<vmem>>, vector<1x4x256xf32>
    %100 = vector.shape_cast %99 : vector<1x4x256xf32> to vector<4x256xf32>
    %c0_85 = arith.constant 0 : index
    %c0_86 = arith.constant 0 : index
    %101 = vector.load %arg4[%c0_85, %c0_86] : memref<5x256xf32, #tpu.memory_space<vmem>>, vector<1x256xf32>
    %102 = vector.broadcast %101 : vector<1x256xf32> to vector<4x256xf32>
    %103 = arith.mulf %100, %102 : vector<4x256xf32>
    %c10 = arith.constant 10 : index
    %c0_87 = arith.constant 0 : index
    %c0_88 = arith.constant 0 : index
    %104 = vector.load %arg5[%c10, %c0_87, %c0_88] : memref<25x16x4xf32, #tpu.memory_space<vmem>>, vector<1x16x4xf32>
    %105 = vector.shape_cast %104 : vector<1x16x4xf32> to vector<16x4xf32>
    %cst_89 = arith.constant dense<0.000000e+00> : vector<16x256xf32>
    %106 = tpu.matmul %105, %103, %cst_89 {dimension_numbers = #tpu.dot_dimension_numbers<[1], [0], [0], [1], [0, 0, 1, 1], [], []>} : vector<16x4xf32>, vector<4x256xf32>, vector<16x256xf32> -> vector<16x256xf32>
    %107 = arith.addf %98, %106 : vector<16x256xf32>
    %c0_90 = arith.constant 0 : index
    %c0_91 = arith.constant 0 : index
    %c33 = arith.constant 33 : index
    %108 = vector.load %arg1[%c0_90, %c0_91, %c33] : memref<1x4x324xf32, #tpu.memory_space<vmem>>, vector<1x4x256xf32>
    %109 = vector.shape_cast %108 : vector<1x4x256xf32> to vector<4x256xf32>
    %c1_92 = arith.constant 1 : index
    %c0_93 = arith.constant 0 : index
    %110 = vector.load %arg4[%c1_92, %c0_93] : memref<5x256xf32, #tpu.memory_space<vmem>>, vector<1x256xf32>
    %111 = vector.broadcast %110 : vector<1x256xf32> to vector<4x256xf32>
    %112 = arith.mulf %109, %111 : vector<4x256xf32>
    %c11 = arith.constant 11 : index
    %c0_94 = arith.constant 0 : index
    %c0_95 = arith.constant 0 : index
    %113 = vector.load %arg5[%c11, %c0_94, %c0_95] : memref<25x16x4xf32, #tpu.memory_space<vmem>>, vector<1x16x4xf32>
    %114 = vector.shape_cast %113 : vector<1x16x4xf32> to vector<16x4xf32>
    %cst_96 = arith.constant dense<0.000000e+00> : vector<16x256xf32>
    %115 = tpu.matmul %114, %112, %cst_96 {dimension_numbers = #tpu.dot_dimension_numbers<[1], [0], [0], [1], [0, 0, 1, 1], [], []>} : vector<16x4xf32>, vector<4x256xf32>, vector<16x256xf32> -> vector<16x256xf32>
    %116 = arith.addf %107, %115 : vector<16x256xf32>
    %c0_97 = arith.constant 0 : index
    %c0_98 = arith.constant 0 : index
    %c34 = arith.constant 34 : index
    %117 = vector.load %arg1[%c0_97, %c0_98, %c34] : memref<1x4x324xf32, #tpu.memory_space<vmem>>, vector<1x4x256xf32>
    %118 = vector.shape_cast %117 : vector<1x4x256xf32> to vector<4x256xf32>
    %c12 = arith.constant 12 : index
    %c0_99 = arith.constant 0 : index
    %c0_100 = arith.constant 0 : index
    %119 = vector.load %arg5[%c12, %c0_99, %c0_100] : memref<25x16x4xf32, #tpu.memory_space<vmem>>, vector<1x16x4xf32>
    %120 = vector.shape_cast %119 : vector<1x16x4xf32> to vector<16x4xf32>
    %cst_101 = arith.constant dense<0.000000e+00> : vector<16x256xf32>
    %121 = tpu.matmul %120, %118, %cst_101 {dimension_numbers = #tpu.dot_dimension_numbers<[1], [0], [0], [1], [0, 0, 1, 1], [], []>} : vector<16x4xf32>, vector<4x256xf32>, vector<16x256xf32> -> vector<16x256xf32>
    %122 = arith.addf %116, %121 : vector<16x256xf32>
    %c0_102 = arith.constant 0 : index
    %c0_103 = arith.constant 0 : index
    %c35 = arith.constant 35 : index
    %123 = vector.load %arg1[%c0_102, %c0_103, %c35] : memref<1x4x324xf32, #tpu.memory_space<vmem>>, vector<1x4x256xf32>
    %124 = vector.shape_cast %123 : vector<1x4x256xf32> to vector<4x256xf32>
    %c3_104 = arith.constant 3 : index
    %c0_105 = arith.constant 0 : index
    %125 = vector.load %arg4[%c3_104, %c0_105] : memref<5x256xf32, #tpu.memory_space<vmem>>, vector<1x256xf32>
    %126 = vector.broadcast %125 : vector<1x256xf32> to vector<4x256xf32>
    %127 = arith.mulf %124, %126 : vector<4x256xf32>
    %c13 = arith.constant 13 : index
    %c0_106 = arith.constant 0 : index
    %c0_107 = arith.constant 0 : index
    %128 = vector.load %arg5[%c13, %c0_106, %c0_107] : memref<25x16x4xf32, #tpu.memory_space<vmem>>, vector<1x16x4xf32>
    %129 = vector.shape_cast %128 : vector<1x16x4xf32> to vector<16x4xf32>
    %cst_108 = arith.constant dense<0.000000e+00> : vector<16x256xf32>
    %130 = tpu.matmul %129, %127, %cst_108 {dimension_numbers = #tpu.dot_dimension_numbers<[1], [0], [0], [1], [0, 0, 1, 1], [], []>} : vector<16x4xf32>, vector<4x256xf32>, vector<16x256xf32> -> vector<16x256xf32>
    %131 = arith.addf %122, %130 : vector<16x256xf32>
    %c0_109 = arith.constant 0 : index
    %c0_110 = arith.constant 0 : index
    %c36 = arith.constant 36 : index
    %132 = vector.load %arg1[%c0_109, %c0_110, %c36] : memref<1x4x324xf32, #tpu.memory_space<vmem>>, vector<1x4x256xf32>
    %133 = vector.shape_cast %132 : vector<1x4x256xf32> to vector<4x256xf32>
    %c4_111 = arith.constant 4 : index
    %c0_112 = arith.constant 0 : index
    %134 = vector.load %arg4[%c4_111, %c0_112] : memref<5x256xf32, #tpu.memory_space<vmem>>, vector<1x256xf32>
    %135 = vector.broadcast %134 : vector<1x256xf32> to vector<4x256xf32>
    %136 = arith.mulf %133, %135 : vector<4x256xf32>
    %c14 = arith.constant 14 : index
    %c0_113 = arith.constant 0 : index
    %c0_114 = arith.constant 0 : index
    %137 = vector.load %arg5[%c14, %c0_113, %c0_114] : memref<25x16x4xf32, #tpu.memory_space<vmem>>, vector<1x16x4xf32>
    %138 = vector.shape_cast %137 : vector<1x16x4xf32> to vector<16x4xf32>
    %cst_115 = arith.constant dense<0.000000e+00> : vector<16x256xf32>
    %139 = tpu.matmul %138, %136, %cst_115 {dimension_numbers = #tpu.dot_dimension_numbers<[1], [0], [0], [1], [0, 0, 1, 1], [], []>} : vector<16x4xf32>, vector<4x256xf32>, vector<16x256xf32> -> vector<16x256xf32>
    %140 = arith.addf %131, %139 : vector<16x256xf32>
    %c0_116 = arith.constant 0 : index
    %c0_117 = arith.constant 0 : index
    %c48 = arith.constant 48 : index
    %141 = vector.load %arg1[%c0_116, %c0_117, %c48] : memref<1x4x324xf32, #tpu.memory_space<vmem>>, vector<1x4x256xf32>
    %142 = vector.shape_cast %141 : vector<1x4x256xf32> to vector<4x256xf32>
    %c0_118 = arith.constant 0 : index
    %c0_119 = arith.constant 0 : index
    %143 = vector.load %arg4[%c0_118, %c0_119] : memref<5x256xf32, #tpu.memory_space<vmem>>, vector<1x256xf32>
    %144 = vector.broadcast %143 : vector<1x256xf32> to vector<4x256xf32>
    %145 = arith.mulf %142, %144 : vector<4x256xf32>
    %c15 = arith.constant 15 : index
    %c0_120 = arith.constant 0 : index
    %c0_121 = arith.constant 0 : index
    %146 = vector.load %arg5[%c15, %c0_120, %c0_121] : memref<25x16x4xf32, #tpu.memory_space<vmem>>, vector<1x16x4xf32>
    %147 = vector.shape_cast %146 : vector<1x16x4xf32> to vector<16x4xf32>
    %cst_122 = arith.constant dense<0.000000e+00> : vector<16x256xf32>
    %148 = tpu.matmul %147, %145, %cst_122 {dimension_numbers = #tpu.dot_dimension_numbers<[1], [0], [0], [1], [0, 0, 1, 1], [], []>} : vector<16x4xf32>, vector<4x256xf32>, vector<16x256xf32> -> vector<16x256xf32>
    %149 = arith.addf %140, %148 : vector<16x256xf32>
    %c0_123 = arith.constant 0 : index
    %c0_124 = arith.constant 0 : index
    %c49 = arith.constant 49 : index
    %150 = vector.load %arg1[%c0_123, %c0_124, %c49] : memref<1x4x324xf32, #tpu.memory_space<vmem>>, vector<1x4x256xf32>
    %151 = vector.shape_cast %150 : vector<1x4x256xf32> to vector<4x256xf32>
    %c1_125 = arith.constant 1 : index
    %c0_126 = arith.constant 0 : index
    %152 = vector.load %arg4[%c1_125, %c0_126] : memref<5x256xf32, #tpu.memory_space<vmem>>, vector<1x256xf32>
    %153 = vector.broadcast %152 : vector<1x256xf32> to vector<4x256xf32>
    %154 = arith.mulf %151, %153 : vector<4x256xf32>
    %c16_127 = arith.constant 16 : index
    %c0_128 = arith.constant 0 : index
    %c0_129 = arith.constant 0 : index
    %155 = vector.load %arg5[%c16_127, %c0_128, %c0_129] : memref<25x16x4xf32, #tpu.memory_space<vmem>>, vector<1x16x4xf32>
    %156 = vector.shape_cast %155 : vector<1x16x4xf32> to vector<16x4xf32>
    %cst_130 = arith.constant dense<0.000000e+00> : vector<16x256xf32>
    %157 = tpu.matmul %156, %154, %cst_130 {dimension_numbers = #tpu.dot_dimension_numbers<[1], [0], [0], [1], [0, 0, 1, 1], [], []>} : vector<16x4xf32>, vector<4x256xf32>, vector<16x256xf32> -> vector<16x256xf32>
    %158 = arith.addf %149, %157 : vector<16x256xf32>
    %c0_131 = arith.constant 0 : index
    %c0_132 = arith.constant 0 : index
    %c50 = arith.constant 50 : index
    %159 = vector.load %arg1[%c0_131, %c0_132, %c50] : memref<1x4x324xf32, #tpu.memory_space<vmem>>, vector<1x4x256xf32>
    %160 = vector.shape_cast %159 : vector<1x4x256xf32> to vector<4x256xf32>
    %c17_133 = arith.constant 17 : index
    %c0_134 = arith.constant 0 : index
    %c0_135 = arith.constant 0 : index
    %161 = vector.load %arg5[%c17_133, %c0_134, %c0_135] : memref<25x16x4xf32, #tpu.memory_space<vmem>>, vector<1x16x4xf32>
    %162 = vector.shape_cast %161 : vector<1x16x4xf32> to vector<16x4xf32>
    %cst_136 = arith.constant dense<0.000000e+00> : vector<16x256xf32>
    %163 = tpu.matmul %162, %160, %cst_136 {dimension_numbers = #tpu.dot_dimension_numbers<[1], [0], [0], [1], [0, 0, 1, 1], [], []>} : vector<16x4xf32>, vector<4x256xf32>, vector<16x256xf32> -> vector<16x256xf32>
    %164 = arith.addf %158, %163 : vector<16x256xf32>
    %c0_137 = arith.constant 0 : index
    %c0_138 = arith.constant 0 : index
    %c51 = arith.constant 51 : index
    %165 = vector.load %arg1[%c0_137, %c0_138, %c51] : memref<1x4x324xf32, #tpu.memory_space<vmem>>, vector<1x4x256xf32>
    %166 = vector.shape_cast %165 : vector<1x4x256xf32> to vector<4x256xf32>
    %c3_139 = arith.constant 3 : index
    %c0_140 = arith.constant 0 : index
    %167 = vector.load %arg4[%c3_139, %c0_140] : memref<5x256xf32, #tpu.memory_space<vmem>>, vector<1x256xf32>
    %168 = vector.broadcast %167 : vector<1x256xf32> to vector<4x256xf32>
    %169 = arith.mulf %166, %168 : vector<4x256xf32>
    %c18_141 = arith.constant 18 : index
    %c0_142 = arith.constant 0 : index
    %c0_143 = arith.constant 0 : index
    %170 = vector.load %arg5[%c18_141, %c0_142, %c0_143] : memref<25x16x4xf32, #tpu.memory_space<vmem>>, vector<1x16x4xf32>
    %171 = vector.shape_cast %170 : vector<1x16x4xf32> to vector<16x4xf32>
    %cst_144 = arith.constant dense<0.000000e+00> : vector<16x256xf32>
    %172 = tpu.matmul %171, %169, %cst_144 {dimension_numbers = #tpu.dot_dimension_numbers<[1], [0], [0], [1], [0, 0, 1, 1], [], []>} : vector<16x4xf32>, vector<4x256xf32>, vector<16x256xf32> -> vector<16x256xf32>
    %173 = arith.addf %164, %172 : vector<16x256xf32>
    %c0_145 = arith.constant 0 : index
    %c0_146 = arith.constant 0 : index
    %c52 = arith.constant 52 : index
    %174 = vector.load %arg1[%c0_145, %c0_146, %c52] : memref<1x4x324xf32, #tpu.memory_space<vmem>>, vector<1x4x256xf32>
    %175 = vector.shape_cast %174 : vector<1x4x256xf32> to vector<4x256xf32>
    %c4_147 = arith.constant 4 : index
    %c0_148 = arith.constant 0 : index
    %176 = vector.load %arg4[%c4_147, %c0_148] : memref<5x256xf32, #tpu.memory_space<vmem>>, vector<1x256xf32>
    %177 = vector.broadcast %176 : vector<1x256xf32> to vector<4x256xf32>
    %178 = arith.mulf %175, %177 : vector<4x256xf32>
    %c19_149 = arith.constant 19 : index
    %c0_150 = arith.constant 0 : index
    %c0_151 = arith.constant 0 : index
    %179 = vector.load %arg5[%c19_149, %c0_150, %c0_151] : memref<25x16x4xf32, #tpu.memory_space<vmem>>, vector<1x16x4xf32>
    %180 = vector.shape_cast %179 : vector<1x16x4xf32> to vector<16x4xf32>
    %cst_152 = arith.constant dense<0.000000e+00> : vector<16x256xf32>
    %181 = tpu.matmul %180, %178, %cst_152 {dimension_numbers = #tpu.dot_dimension_numbers<[1], [0], [0], [1], [0, 0, 1, 1], [], []>} : vector<16x4xf32>, vector<4x256xf32>, vector<16x256xf32> -> vector<16x256xf32>
    %182 = arith.addf %173, %181 : vector<16x256xf32>
    %c0_153 = arith.constant 0 : index
    %c0_154 = arith.constant 0 : index
    %c64 = arith.constant 64 : index
    %183 = vector.load %arg1[%c0_153, %c0_154, %c64] : memref<1x4x324xf32, #tpu.memory_space<vmem>>, vector<1x4x256xf32>
    %184 = vector.shape_cast %183 : vector<1x4x256xf32> to vector<4x256xf32>
    %c0_155 = arith.constant 0 : index
    %c0_156 = arith.constant 0 : index
    %185 = vector.load %arg4[%c0_155, %c0_156] : memref<5x256xf32, #tpu.memory_space<vmem>>, vector<1x256xf32>
    %186 = vector.broadcast %185 : vector<1x256xf32> to vector<4x256xf32>
    %187 = arith.mulf %184, %186 : vector<4x256xf32>
    %c20_157 = arith.constant 20 : index
    %c0_158 = arith.constant 0 : index
    %c0_159 = arith.constant 0 : index
    %188 = vector.load %arg5[%c20_157, %c0_158, %c0_159] : memref<25x16x4xf32, #tpu.memory_space<vmem>>, vector<1x16x4xf32>
    %189 = vector.shape_cast %188 : vector<1x16x4xf32> to vector<16x4xf32>
    %cst_160 = arith.constant dense<0.000000e+00> : vector<16x256xf32>
    %190 = tpu.matmul %189, %187, %cst_160 {dimension_numbers = #tpu.dot_dimension_numbers<[1], [0], [0], [1], [0, 0, 1, 1], [], []>} : vector<16x4xf32>, vector<4x256xf32>, vector<16x256xf32> -> vector<16x256xf32>
    %191 = arith.addf %182, %190 : vector<16x256xf32>
    %c0_161 = arith.constant 0 : index
    %c0_162 = arith.constant 0 : index
    %c65 = arith.constant 65 : index
    %192 = vector.load %arg1[%c0_161, %c0_162, %c65] : memref<1x4x324xf32, #tpu.memory_space<vmem>>, vector<1x4x256xf32>
    %193 = vector.shape_cast %192 : vector<1x4x256xf32> to vector<4x256xf32>
    %c1_163 = arith.constant 1 : index
    %c0_164 = arith.constant 0 : index
    %194 = vector.load %arg4[%c1_163, %c0_164] : memref<5x256xf32, #tpu.memory_space<vmem>>, vector<1x256xf32>
    %195 = vector.broadcast %194 : vector<1x256xf32> to vector<4x256xf32>
    %196 = arith.mulf %193, %195 : vector<4x256xf32>
    %c21 = arith.constant 21 : index
    %c0_165 = arith.constant 0 : index
    %c0_166 = arith.constant 0 : index
    %197 = vector.load %arg5[%c21, %c0_165, %c0_166] : memref<25x16x4xf32, #tpu.memory_space<vmem>>, vector<1x16x4xf32>
    %198 = vector.shape_cast %197 : vector<1x16x4xf32> to vector<16x4xf32>
    %cst_167 = arith.constant dense<0.000000e+00> : vector<16x256xf32>
    %199 = tpu.matmul %198, %196, %cst_167 {dimension_numbers = #tpu.dot_dimension_numbers<[1], [0], [0], [1], [0, 0, 1, 1], [], []>} : vector<16x4xf32>, vector<4x256xf32>, vector<16x256xf32> -> vector<16x256xf32>
    %200 = arith.addf %191, %199 : vector<16x256xf32>
    %c0_168 = arith.constant 0 : index
    %c0_169 = arith.constant 0 : index
    %c66 = arith.constant 66 : index
    %201 = vector.load %arg1[%c0_168, %c0_169, %c66] : memref<1x4x324xf32, #tpu.memory_space<vmem>>, vector<1x4x256xf32>
    %202 = vector.shape_cast %201 : vector<1x4x256xf32> to vector<4x256xf32>
    %c22 = arith.constant 22 : index
    %c0_170 = arith.constant 0 : index
    %c0_171 = arith.constant 0 : index
    %203 = vector.load %arg5[%c22, %c0_170, %c0_171] : memref<25x16x4xf32, #tpu.memory_space<vmem>>, vector<1x16x4xf32>
    %204 = vector.shape_cast %203 : vector<1x16x4xf32> to vector<16x4xf32>
    %cst_172 = arith.constant dense<0.000000e+00> : vector<16x256xf32>
    %205 = tpu.matmul %204, %202, %cst_172 {dimension_numbers = #tpu.dot_dimension_numbers<[1], [0], [0], [1], [0, 0, 1, 1], [], []>} : vector<16x4xf32>, vector<4x256xf32>, vector<16x256xf32> -> vector<16x256xf32>
    %206 = arith.addf %200, %205 : vector<16x256xf32>
    %c0_173 = arith.constant 0 : index
    %c0_174 = arith.constant 0 : index
    %c67 = arith.constant 67 : index
    %207 = vector.load %arg1[%c0_173, %c0_174, %c67] : memref<1x4x324xf32, #tpu.memory_space<vmem>>, vector<1x4x256xf32>
    %208 = vector.shape_cast %207 : vector<1x4x256xf32> to vector<4x256xf32>
    %c3_175 = arith.constant 3 : index
    %c0_176 = arith.constant 0 : index
    %209 = vector.load %arg4[%c3_175, %c0_176] : memref<5x256xf32, #tpu.memory_space<vmem>>, vector<1x256xf32>
    %210 = vector.broadcast %209 : vector<1x256xf32> to vector<4x256xf32>
    %211 = arith.mulf %208, %210 : vector<4x256xf32>
    %c23 = arith.constant 23 : index
    %c0_177 = arith.constant 0 : index
    %c0_178 = arith.constant 0 : index
    %212 = vector.load %arg5[%c23, %c0_177, %c0_178] : memref<25x16x4xf32, #tpu.memory_space<vmem>>, vector<1x16x4xf32>
    %213 = vector.shape_cast %212 : vector<1x16x4xf32> to vector<16x4xf32>
    %cst_179 = arith.constant dense<0.000000e+00> : vector<16x256xf32>
    %214 = tpu.matmul %213, %211, %cst_179 {dimension_numbers = #tpu.dot_dimension_numbers<[1], [0], [0], [1], [0, 0, 1, 1], [], []>} : vector<16x4xf32>, vector<4x256xf32>, vector<16x256xf32> -> vector<16x256xf32>
    %215 = arith.addf %206, %214 : vector<16x256xf32>
    %c0_180 = arith.constant 0 : index
    %c0_181 = arith.constant 0 : index
    %c68 = arith.constant 68 : index
    %216 = vector.load %arg1[%c0_180, %c0_181, %c68] : memref<1x4x324xf32, #tpu.memory_space<vmem>>, vector<1x4x256xf32>
    %217 = vector.shape_cast %216 : vector<1x4x256xf32> to vector<4x256xf32>
    %c4_182 = arith.constant 4 : index
    %c0_183 = arith.constant 0 : index
    %218 = vector.load %arg4[%c4_182, %c0_183] : memref<5x256xf32, #tpu.memory_space<vmem>>, vector<1x256xf32>
    %219 = vector.broadcast %218 : vector<1x256xf32> to vector<4x256xf32>
    %220 = arith.mulf %217, %219 : vector<4x256xf32>
    %c24 = arith.constant 24 : index
    %c0_184 = arith.constant 0 : index
    %c0_185 = arith.constant 0 : index
    %221 = vector.load %arg5[%c24, %c0_184, %c0_185] : memref<25x16x4xf32, #tpu.memory_space<vmem>>, vector<1x16x4xf32>
    %222 = vector.shape_cast %221 : vector<1x16x4xf32> to vector<16x4xf32>
    %cst_186 = arith.constant dense<0.000000e+00> : vector<16x256xf32>
    %223 = tpu.matmul %222, %220, %cst_186 {dimension_numbers = #tpu.dot_dimension_numbers<[1], [0], [0], [1], [0, 0, 1, 1], [], []>} : vector<16x4xf32>, vector<4x256xf32>, vector<16x256xf32> -> vector<16x256xf32>
    %224 = arith.addf %215, %223 : vector<16x256xf32>
    %c0_187 = arith.constant 0 : index
    %c0_188 = arith.constant 0 : index
    %c0_189 = arith.constant 0 : index
    %225 = vector.load %arg8[%c0_187, %c0_188, %c0_189] : memref<1x16x256xf32, #tpu.memory_space<vmem>>, vector<1x16x256xf32>
    %226 = vector.shape_cast %225 : vector<1x16x256xf32> to vector<16x256xf32>
    %227 = vector.shape_cast %224 : vector<16x256xf32> to vector<1x16x256xf32>
    tpu.vector_store %arg8[%c0_187, %c0_188, %c0_189], %227 {strides = array<i32>} : memref<1x16x256xf32, #tpu.memory_space<vmem>>, vector<1x16x256xf32>,
    %c0_190 = arith.constant 0 : index
    %c0_191 = arith.constant 0 : index
    %c0_192 = arith.constant 0 : index
    %228 = vector.load %arg3[%c0_190, %c0_191, %c0_192] : memref<1x16x256xf32, #tpu.memory_space<vmem>>, vector<1x16x256xf32>
    %229 = vector.shape_cast %228 : vector<1x16x256xf32> to vector<16x256xf32>
    %cst_193 = arith.constant dense<0.000000e+00> : vector<16xf32>
    %230 = vector.multi_reduction <add>, %224, %cst_193 [1] : vector<16x256xf32> to vector<16xf32>
    %231 = vector.shape_cast %230 : vector<16xf32> to vector<16x1xf32>
    %c0_194 = arith.constant 0 : index
    %c0_195 = arith.constant 0 : index
    %c0_196 = arith.constant 0 : index
    %232 = vector.load %arg9[%c0_194, %c0_195, %c0_196] : memref<1x16x5xf32, #tpu.memory_space<vmem>>, vector<1x16x1xf32>
    %233 = vector.shape_cast %232 : vector<1x16x1xf32> to vector<16x1xf32>
    %234 = vector.shape_cast %231 : vector<16x1xf32> to vector<1x16x1xf32>
    tpu.vector_store %arg9[%c0_194, %c0_195, %c0_196], %234 {strides = array<i32>} : memref<1x16x5xf32, #tpu.memory_space<vmem>>, vector<1x16x1xf32>,
    %235 = arith.mulf %224, %224 : vector<16x256xf32>
    %cst_197 = arith.constant dense<0.000000e+00> : vector<16xf32>
    %236 = vector.multi_reduction <add>, %235, %cst_197 [1] : vector<16x256xf32> to vector<16xf32>
    %237 = vector.shape_cast %236 : vector<16xf32> to vector<16x1xf32>
    %c0_198 = arith.constant 0 : index
    %c0_199 = arith.constant 0 : index
    %c1_200 = arith.constant 1 : index
    %238 = vector.load %arg9[%c0_198, %c0_199, %c1_200] : memref<1x16x5xf32, #tpu.memory_space<vmem>>, vector<1x16x1xf32>
    %239 = vector.shape_cast %238 : vector<1x16x1xf32> to vector<16x1xf32>
    %240 = vector.shape_cast %237 : vector<16x1xf32> to vector<1x16x1xf32>
    tpu.vector_store %arg9[%c0_198, %c0_199, %c1_200], %240 {strides = array<i32>} : memref<1x16x5xf32, #tpu.memory_space<vmem>>, vector<1x16x1xf32>,
    %241 = arith.mulf %224, %229 : vector<16x256xf32>
    %cst_201 = arith.constant dense<0.000000e+00> : vector<16xf32>
    %242 = vector.multi_reduction <add>, %241, %cst_201 [1] : vector<16x256xf32> to vector<16xf32>
    %243 = vector.shape_cast %242 : vector<16xf32> to vector<16x1xf32>
    %c0_202 = arith.constant 0 : index
    %c0_203 = arith.constant 0 : index
    %c2_204 = arith.constant 2 : index
    %244 = vector.load %arg9[%c0_202, %c0_203, %c2_204] : memref<1x16x5xf32, #tpu.memory_space<vmem>>, vector<1x16x1xf32>
    %245 = vector.shape_cast %244 : vector<1x16x1xf32> to vector<16x1xf32>
    %246 = vector.shape_cast %243 : vector<16x1xf32> to vector<1x16x1xf32>
    tpu.vector_store %arg9[%c0_202, %c0_203, %c2_204], %246 {strides = array<i32>} : memref<1x16x5xf32, #tpu.memory_space<vmem>>, vector<1x16x1xf32>,
    %cst_205 = arith.constant dense<0.000000e+00> : vector<16xf32>
    %247 = vector.multi_reduction <add>, %229, %cst_205 [1] : vector<16x256xf32> to vector<16xf32>
    %248 = vector.shape_cast %247 : vector<16xf32> to vector<16x1xf32>
    %c0_206 = arith.constant 0 : index
    %c0_207 = arith.constant 0 : index
    %c3_208 = arith.constant 3 : index
    %249 = vector.load %arg9[%c0_206, %c0_207, %c3_208] : memref<1x16x5xf32, #tpu.memory_space<vmem>>, vector<1x16x1xf32>
    %250 = vector.shape_cast %249 : vector<1x16x1xf32> to vector<16x1xf32>
    %251 = vector.shape_cast %248 : vector<16x1xf32> to vector<1x16x1xf32>
    tpu.vector_store %arg9[%c0_206, %c0_207, %c3_208], %251 {strides = array<i32>} : memref<1x16x5xf32, #tpu.memory_space<vmem>>, vector<1x16x1xf32>,
    %252 = arith.mulf %229, %229 : vector<16x256xf32>
    %cst_209 = arith.constant dense<0.000000e+00> : vector<16xf32>
    %253 = vector.multi_reduction <add>, %252, %cst_209 [1] : vector<16x256xf32> to vector<16xf32>
    %254 = vector.shape_cast %253 : vector<16xf32> to vector<16x1xf32>
    %c0_210 = arith.constant 0 : index
    %c0_211 = arith.constant 0 : index
    %c4_212 = arith.constant 4 : index
    %255 = vector.load %arg9[%c0_210, %c0_211, %c4_212] : memref<1x16x5xf32, #tpu.memory_space<vmem>>, vector<1x16x1xf32>
    %256 = vector.shape_cast %255 : vector<1x16x1xf32> to vector<16x1xf32>
    %257 = vector.shape_cast %254 : vector<16x1xf32> to vector<1x16x1xf32>
    tpu.vector_store %arg9[%c0_210, %c0_211, %c4_212], %257 {strides = array<i32>} : memref<1x16x5xf32, #tpu.memory_space<vmem>>, vector<1x16x1xf32>,
    return
  }
  func.func @transform_0(%arg0: i32) -> (i32, i32, i32) {
    %c0_i32 = arith.constant 0 : i32
    %c0_i32_0 = arith.constant 0 : i32
    %c0_i32_1 = arith.constant 0 : i32
    return %arg0, %c0_i32, %c0_i32_0 : i32, i32, i32
  }
  func.func @transform_1(%arg0: i32) -> (i32, i32, i32) {
    %c0_i32 = arith.constant 0 : i32
    %c0_i32_0 = arith.constant 0 : i32
    %c0_i32_1 = arith.constant 0 : i32
    return %arg0, %c0_i32, %c0_i32_0 : i32, i32, i32
  }
  func.func @transform_2(%arg0: i32) -> (i32, i32, i32) {
    %c0_i32 = arith.constant 0 : i32
    %c0_i32_0 = arith.constant 0 : i32
    %c0_i32_1 = arith.constant 0 : i32
    return %arg0, %c0_i32, %c0_i32_0 : i32, i32, i32
  }
  func.func @transform_3(%arg0: i32) -> (i32, i32) {
    %c0_i32 = arith.constant 0 : i32
    %c0_i32_0 = arith.constant 0 : i32
    %c0_i32_1 = arith.constant 0 : i32
    return %c0_i32, %c0_i32_0 : i32, i32
  }
  func.func @transform_4(%arg0: i32) -> (i32, i32, i32) {
    %c0_i32 = arith.constant 0 : i32
    %c0_i32_0 = arith.constant 0 : i32
    %c0_i32_1 = arith.constant 0 : i32
    %c0_i32_2 = arith.constant 0 : i32
    return %c0_i32, %c0_i32_0, %c0_i32_1 : i32, i32, i32
  }
  func.func @transform_5(%arg0: i32) -> (i32, i32) {
    %c0_i32 = arith.constant 0 : i32
    %c0_i32_0 = arith.constant 0 : i32
    %c0_i32_1 = arith.constant 0 : i32
    return %c0_i32, %c0_i32_0 : i32, i32
  }
  func.func @transform_6(%arg0: i32) -> (i32, i32) {
    %c0_i32 = arith.constant 0 : i32
    %c0_i32_0 = arith.constant 0 : i32
    %c0_i32_1 = arith.constant 0 : i32
    return %c0_i32, %c0_i32_0 : i32, i32
  }
  func.func @transform_7(%arg0: i32) -> (i32, i32, i32) {
    %c0_i32 = arith.constant 0 : i32
    %c0_i32_0 = arith.constant 0 : i32
    %c0_i32_1 = arith.constant 0 : i32
    return %arg0, %c0_i32, %c0_i32_0 : i32, i32, i32
  }
  func.func @transform_8(%arg0: i32) -> (i32, i32, i32) {
    %c0_i32 = arith.constant 0 : i32
    %c0_i32_0 = arith.constant 0 : i32
    %c0_i32_1 = arith.constant 0 : i32
    return %arg0, %c0_i32, %c0_i32_0 : i32, i32, i32
  }
}

module attributes {stable_mosaic.version = 11 : i64} {
  func.func @_final_kernel(%arg0: i32, %arg1: i32, %arg2: memref<1x16x128xf32, #tpu.memory_space<vmem>>, %arg3: memref<1x16x128xf32, #tpu.memory_space<vmem>>, %arg4: memref<1x16x128xf32, #tpu.memory_space<vmem>>, %arg5: memref<1x16x5xf32, #tpu.memory_space<vmem>>, %arg6: memref<16x5xf32, #tpu.memory_space<vmem>>, %arg7: memref<1x16x128xf32, #tpu.memory_space<vmem>>) attributes {dimension_semantics = [#tpu.dimension_semantics<parallel>, #tpu.dimension_semantics<parallel>], iteration_bounds = array<i64: 2, 2>, scalar_prefetch = 0 : i64, scratch_operands = 0 : i64, tpu.core_type = #tpu.core_type<tc>, window_params = [{transform_indices = @transform_0, window_bounds = array<i64: 1, 16, 128>}, {transform_indices = @transform_1, window_bounds = array<i64: 1, 16, 128>}, {transform_indices = @transform_2, window_bounds = array<i64: 1, 16, 128>}, {transform_indices = @transform_3, window_bounds = array<i64: 1, 16, 5>}, {pipeline_mode = #tpu.pipeline_mode<synchronous>, transform_indices = @transform_4, window_bounds = array<i64: 16, 5>}, {transform_indices = @transform_5, window_bounds = array<i64: 1, 16, 128>}]} {
    %c0 = arith.constant 0 : index
    %c0_0 = arith.constant 0 : index
    %c0_1 = arith.constant 0 : index
    %0 = vector.load %arg2[%c0, %c0_0, %c0_1] : memref<1x16x128xf32, #tpu.memory_space<vmem>>, vector<1x16x128xf32>
    %1 = vector.shape_cast %0 : vector<1x16x128xf32> to vector<16x128xf32>
    %c0_2 = arith.constant 0 : index
    %c0_3 = arith.constant 0 : index
    %c0_4 = arith.constant 0 : index
    %2 = vector.load %arg3[%c0_2, %c0_3, %c0_4] : memref<1x16x128xf32, #tpu.memory_space<vmem>>, vector<1x16x128xf32>
    %3 = vector.shape_cast %2 : vector<1x16x128xf32> to vector<16x128xf32>
    %c0_5 = arith.constant 0 : index
    %c0_6 = arith.constant 0 : index
    %c0_7 = arith.constant 0 : index
    %4 = vector.load %arg4[%c0_5, %c0_6, %c0_7] : memref<1x16x128xf32, #tpu.memory_space<vmem>>, vector<1x16x128xf32>
    %5 = vector.shape_cast %4 : vector<1x16x128xf32> to vector<16x128xf32>
    %c0_8 = arith.constant 0 : index
    %c0_9 = arith.constant 0 : index
    %c0_10 = arith.constant 0 : index
    %6 = vector.load %arg5[%c0_8, %c0_9, %c0_10] : memref<1x16x5xf32, #tpu.memory_space<vmem>>, vector<1x16x5xf32>
    %7 = vector.shape_cast %6 : vector<1x16x5xf32> to vector<16x5xf32>
    %8 = vector.extract_strided_slice %7 {offsets = [0, 0], sizes = [16, 1], strides = [1, 1]} : vector<16x5xf32> to vector<16x1xf32>
    %9 = vector.extract_strided_slice %7 {offsets = [0, 1], sizes = [16, 1], strides = [1, 1]} : vector<16x5xf32> to vector<16x1xf32>
    %10 = vector.extract_strided_slice %7 {offsets = [0, 2], sizes = [16, 1], strides = [1, 1]} : vector<16x5xf32> to vector<16x1xf32>
    %11 = vector.extract_strided_slice %7 {offsets = [0, 3], sizes = [16, 1], strides = [1, 1]} : vector<16x5xf32> to vector<16x1xf32>
    %12 = vector.extract_strided_slice %7 {offsets = [0, 4], sizes = [16, 1], strides = [1, 1]} : vector<16x5xf32> to vector<16x1xf32>
    %c0_11 = arith.constant 0 : index
    %c0_12 = arith.constant 0 : index
    %13 = vector.load %arg6[%c0_11, %c0_12] : memref<16x5xf32, #tpu.memory_space<vmem>>, vector<16x1xf32>
    %c0_13 = arith.constant 0 : index
    %c1 = arith.constant 1 : index
    %14 = vector.load %arg6[%c0_13, %c1] : memref<16x5xf32, #tpu.memory_space<vmem>>, vector<16x1xf32>
    %c0_14 = arith.constant 0 : index
    %c2 = arith.constant 2 : index
    %15 = vector.load %arg6[%c0_14, %c2] : memref<16x5xf32, #tpu.memory_space<vmem>>, vector<16x1xf32>
    %c0_15 = arith.constant 0 : index
    %c3 = arith.constant 3 : index
    %16 = vector.load %arg6[%c0_15, %c3] : memref<16x5xf32, #tpu.memory_space<vmem>>, vector<16x1xf32>
    %c0_16 = arith.constant 0 : index
    %c4 = arith.constant 4 : index
    %17 = vector.load %arg6[%c0_16, %c4] : memref<16x5xf32, #tpu.memory_space<vmem>>, vector<16x1xf32>
    %18 = vector.broadcast %10 : vector<16x1xf32> to vector<16x128xf32>
    %19 = arith.mulf %3, %18 : vector<16x128xf32>
    %20 = arith.addf %19, %5 : vector<16x128xf32>
    %21 = vector.broadcast %13 : vector<16x1xf32> to vector<16x128xf32>
    %22 = arith.mulf %20, %21 : vector<16x128xf32>
    %23 = vector.broadcast %14 : vector<16x1xf32> to vector<16x128xf32>
    %24 = arith.addf %22, %23 : vector<16x128xf32>
    %cst = arith.constant 0.000000e+00 : f32
    %25 = vector.broadcast %cst : f32 to vector<16x128xf32>
    %26 = arith.maximumf %24, %25 : vector<16x128xf32>
    %27 = vector.broadcast %8 : vector<16x1xf32> to vector<16x128xf32>
    %28 = arith.mulf %1, %27 : vector<16x128xf32>
    %29 = vector.broadcast %9 : vector<16x1xf32> to vector<16x128xf32>
    %30 = arith.addf %28, %29 : vector<16x128xf32>
    %31 = arith.negf %30 : vector<16x128xf32>
    %32 = math.exp %31 : vector<16x128xf32>
    %cst_17 = arith.constant 1.000000e+00 : f32
    %33 = vector.broadcast %cst_17 : f32 to vector<16x128xf32>
    %34 = arith.addf %33, %32 : vector<16x128xf32>
    %35 = arith.divf %33, %34 : vector<16x128xf32>
    %36 = vector.broadcast %17 : vector<16x1xf32> to vector<16x128xf32>
    %37 = arith.cmpf ogt, %35, %36 : vector<16x128xf32>
    %38 = arith.mulf %35, %1 : vector<16x128xf32>
    %39 = arith.select %37, %1, %38 : vector<16x128xi1>, vector<16x128xf32>
    %cst_18 = arith.constant 0.000000e+00 : f32
    %40 = vector.broadcast %cst_18 : f32 to vector<16x128xf32>
    %41 = arith.select %37, %40, %38 : vector<16x128xi1>, vector<16x128xf32>
    %42 = vector.extract_strided_slice %41 {offsets = [8, 0], sizes = [8, 128], strides = [1, 1]} : vector<16x128xf32> to vector<8x128xf32>
    %43 = vector.extract_strided_slice %41 {offsets = [0, 0], sizes = [8, 128], strides = [1, 1]} : vector<16x128xf32> to vector<8x128xf32>
    %44 = tpu.concatenate %42, %43 in 0 : vector<8x128xf32>, vector<8x128xf32> -> vector<16x128xf32>
    %45 = vector.broadcast %15 : vector<16x1xf32> to vector<16x128xf32>
    %46 = arith.mulf %45, %39 : vector<16x128xf32>
    %47 = vector.broadcast %16 : vector<16x1xf32> to vector<16x128xf32>
    %48 = arith.mulf %47, %44 : vector<16x128xf32>
    %49 = arith.addf %46, %48 : vector<16x128xf32>
    %50 = vector.broadcast %11 : vector<16x1xf32> to vector<16x128xf32>
    %51 = arith.mulf %50, %49 : vector<16x128xf32>
    %52 = vector.broadcast %12 : vector<16x1xf32> to vector<16x128xf32>
    %53 = arith.mulf %52, %26 : vector<16x128xf32>
    %54 = arith.addf %51, %53 : vector<16x128xf32>
    %c0_19 = arith.constant 0 : index
    %c0_20 = arith.constant 0 : index
    %c0_21 = arith.constant 0 : index
    %55 = vector.load %arg7[%c0_19, %c0_20, %c0_21] : memref<1x16x128xf32, #tpu.memory_space<vmem>>, vector<1x16x128xf32>
    %56 = vector.shape_cast %55 : vector<1x16x128xf32> to vector<16x128xf32>
    %57 = vector.shape_cast %54 : vector<16x128xf32> to vector<1x16x128xf32>
    tpu.vector_store %arg7[%c0_19, %c0_20, %c0_21], %57 {strides = array<i32>} : memref<1x16x128xf32, #tpu.memory_space<vmem>>, vector<1x16x128xf32>,
    return
  }
  func.func @transform_0(%arg0: i32, %arg1: i32) -> (i32, i32, i32) {
    %c0_i32 = arith.constant 0 : i32
    %c0_i32_0 = arith.constant 0 : i32
    return %arg0, %c0_i32, %arg1 : i32, i32, i32
  }
  func.func @transform_1(%arg0: i32, %arg1: i32) -> (i32, i32, i32) {
    %c0_i32 = arith.constant 0 : i32
    %c0_i32_0 = arith.constant 0 : i32
    return %arg0, %c0_i32, %arg1 : i32, i32, i32
  }
  func.func @transform_2(%arg0: i32, %arg1: i32) -> (i32, i32, i32) {
    %c0_i32 = arith.constant 0 : i32
    %c0_i32_0 = arith.constant 0 : i32
    return %arg0, %c0_i32, %arg1 : i32, i32, i32
  }
  func.func @transform_3(%arg0: i32, %arg1: i32) -> (i32, i32, i32) {
    %c0_i32 = arith.constant 0 : i32
    %c0_i32_0 = arith.constant 0 : i32
    %c0_i32_1 = arith.constant 0 : i32
    return %arg0, %c0_i32, %c0_i32_0 : i32, i32, i32
  }
  func.func @transform_4(%arg0: i32, %arg1: i32) -> (i32, i32) {
    %c0_i32 = arith.constant 0 : i32
    %c0_i32_0 = arith.constant 0 : i32
    %c0_i32_1 = arith.constant 0 : i32
    return %c0_i32, %c0_i32_0 : i32, i32
  }
  func.func @transform_5(%arg0: i32, %arg1: i32) -> (i32, i32, i32) {
    %c0_i32 = arith.constant 0 : i32
    %c0_i32_0 = arith.constant 0 : i32
    return %arg0, %c0_i32, %arg1 : i32, i32, i32
  }
}

</mosaic_0001>

<llo_original>
// kernel: csrd_forward.3
$region0: #{csrd_forward.3}
  #allocation0 [shape = 'u32[]', space=smem, size = 0x4, offset = 0x4, fixed_abs, tag = 'smem constant byte address 0x4 - core index']
  #allocation1 [shape = 'u32[144,128]{1,0:T(1,128)}', space=vmem, size = 0x12000, scoped, tag = 'internal scratch']
  %s0 = inlined_call_operand.vmem [shape: f32[2,16,256], index: 0, kind: input, shape index: {}]
  %s1 = inlined_call_operand.vmem [shape: f32[24,16], index: 1, kind: input, shape index: {}]
  %s2 = inlined_call_operand.vmem [shape: f32[16,1], index: 2, kind: input, shape index: {}]
  %s3 = inlined_call_operand.vmem [shape: f32[2,16,256], index: 3, kind: output, shape index: {0}]
  %s4 = inlined_call_operand.vmem [shape: f32[2,4,256], index: 4, kind: output, shape index: {1}]
  %s5 = inlined_call_operand.vmem [shape: f32[2,4,256], index: 5, kind: output, shape index: {2}]
  %s6 = inlined_call_operand.vmem [shape: f32[2,2,16,2], index: 6, kind: output, shape index: {3}]
  %s7 = inlined_call_operand.vmem [shape: f32[2,2,8,2], index: 7, kind: output, shape index: {4}]
  %8 = xla_tuple %s3, %s4, %s5, %s6, %s7
  %s9 = sld [smem:[#allocation0]]
  $region149: #{csrd_forward.3} parent=0
    _
  %s11 = ssub.s32 1, %s9
  %s12 = scalar_select 0, %s11, %s9
  $region1: #{csrd_forward.3} parent=0
    #allocation2 [shape = 'u8[16384]{0}', space=vmem, size = 0x4000, scoped, tag = 'input window, operand 0']
    #allocation3 [shape = 'u8[16384]{0}', space=vmem, size = 0x4000, scoped, tag = 'output window, operand 0']
    loop: start=0, step=1, limit=6
    $region2: #{csrd_forward.3} parent=1 // loop_pre_header
      _
    $region3: #{csrd_forward.3} parent=1 // loop_header
      %s14 = sphi 0, %s18
      %p15 = scmp.ge.s32.totalorder %s14, 6
      %s21 = sphi 0, %s33
      %s22 = sphi 0, %s29
      %s23 = sphi 0, %s21
      %s24 = sphi 0, %s22
      %s25 = sphi 0, %s23
      %s26 = sphi 0, %s24
      %s38 = sphi 0, %s40
      %s41 = sphi 0, %s38
      %s42 = sphi 0, %s41
      %s58 = sphi 0, %s42
      %s62 = sphi 0, %s62
      %s64 = sphi 0, %s62
      %s65 = sphi 0, %s64
      %s79 = sphi 0, %s65
      %s83 = sphi 0, %s83
      %s85 = sphi 0, %s83
      %s86 = sphi 0, %s85
      %s100 = sphi 0, %s86
      %s108 = sphi 0, %s110
      %s111 = sphi 0, %s108
      %s112 = sphi 0, %s111
      %s128 = sphi 0, %s112
      %s136 = sphi 0, %s138
      %s139 = sphi 0, %s136
      %s140 = sphi 0, %s139
      %s156 = sphi 0, %s140
      %s164 = sphi 0, %s166
      %s167 = sphi 0, %s164
      %s168 = sphi 0, %s167
      %s184 = sphi 0, %s168
      %s192 = sphi 0, %s194
      %s195 = sphi 0, %s192
      %s196 = sphi 0, %s195
      %s212 = sphi 0, %s196
      %s220 = sphi 0, %s222
      %s223 = sphi 0, %s220
      %s224 = sphi 0, %s223
      %s240 = sphi 0, %s224
    $region4: #{csrd_forward.3} parent=1 // loop_header_branch
      %17 = sbr.rel (%p15) target = $region8
    $region5: #{csrd_forward.3} parent=1 // loop_body
      %s19 = ssub.s32 %s14, 1
      %s20 = ssub.s32 %s14, 2
      %s27 = sadd.s32 1, %s22
      %p28 = scmp.ge.s32.totalorder %s27, 2
      %s29 = scalar_select %p28, 0, %s27
      %s30 = sadd.s32 1, %s21
      %s31 = scalar_select %p28, %s30, %s21
      %p32 = scmp.ge.s32.totalorder %s31, 2
      %s33 = scalar_select %p32, 0, %s31
      %s34 = ssub.s32 %s21, %s33
      %s35 = ssub.s32 %s22, %s29
      %s36 = sor.u32 %s34, %s35
      %p37 = scmp.eq.s32.totalorder %s36, 0
      %s39 = sadd.s32 %s38, 1
      %s40 = scalar_select %p37, %s38, %s39
      %p43 = pneg %p37
      %p44 = scmp.eq.s32.totalorder %s14, 3
      %p45 = por %p43, %p44
      %p46 = scmp.ne.s32.totalorder %s38, %s41
      %p47 = scmp.eq.s32.totalorder %s14, 0
      %p48 = por %p46, %p47
      %p49 = scmp.ne.s32.totalorder %s38, %s41
      %p50 = scmp.eq.s32.totalorder %s19, 3
      %p51 = por %p49, %p50
      %p52 = scmp.ne.s32.totalorder %s41, %s42
      %p53 = scmp.eq.s32.totalorder %s19, 0
      %p54 = por %p52, %p53
      %p55 = scmp.ne.s32.totalorder %s41, %s42
      %p56 = scmp.eq.s32.totalorder %s20, 3
      %p57 = por %p55, %p56
      %p59 = scmp.ne.s32.totalorder %s42, %s58
      %p60 = scmp.eq.s32.totalorder %s20, 0
      %p61 = por %p59, %p60
      %s63 = sadd.s32 %s62, 1
      %p66 = scmp.eq.s32.totalorder %s14, 3
      %p67 = scmp.ne.s32.totalorder %s62, %s64
      %p68 = scmp.eq.s32.totalorder %s14, 0
      %p69 = por %p67, %p68
      %p70 = scmp.ne.s32.totalorder %s62, %s64
      %p71 = scmp.eq.s32.totalorder %s19, 3
      %p72 = por %p70, %p71
      %p73 = scmp.ne.s32.totalorder %s64, %s65
      %p74 = scmp.eq.s32.totalorder %s19, 0
      %p75 = por %p73, %p74
      %p76 = scmp.ne.s32.totalorder %s64, %s65
      %p77 = scmp.eq.s32.totalorder %s20, 3
      %p78 = por %p76, %p77
      %p80 = scmp.ne.s32.totalorder %s65, %s79
      %p81 = scmp.eq.s32.totalorder %s20, 0
      %p82 = por %p80, %p81
      %s84 = sadd.s32 %s83, 1
      %p87 = scmp.eq.s32.totalorder %s14, 3
      %p88 = scmp.ne.s32.totalorder %s83, %s85
      %p89 = scmp.eq.s32.totalorder %s14, 0
      %p90 = por %p88, %p89
      %p91 = scmp.ne.s32.totalorder %s83, %s85
      %p92 = scmp.eq.s32.totalorder %s19, 3
      %p93 = por %p91, %p92
      %p94 = scmp.ne.s32.totalorder %s85, %s86
      %p95 = scmp.eq.s32.totalorder %s19, 0
      %p96 = por %p94, %p95
      %p97 = scmp.ne.s32.totalorder %s85, %s86
      %p98 = scmp.eq.s32.totalorder %s20, 3
      %p99 = por %p97, %p98
      %p101 = scmp.ne.s32.totalorder %s86, %s100
      %p102 = scmp.eq.s32.totalorder %s20, 0
      %p103 = por %p101, %p102
      %s104 = ssub.s32 %s21, %s33
      %s105 = ssub.s32 %s22, %s29
      %s106 = sor.u32 %s104, %s105
      %p107 = scmp.eq.s32.totalorder %s106, 0
      %s109 = sadd.s32 %s108, 1
      %s110 = scalar_select %p107, %s108, %s109
      %p113 = pneg %p107
      %p114 = scmp.eq.s32.totalorder %s14, 3
      %p115 = por %p113, %p114
      %p116 = scmp.ne.s32.totalorder %s108, %s111
      %p117 = scmp.eq.s32.totalorder %s14, 0
      %p118 = por %p116, %p117
      %p119 = scmp.ne.s32.totalorder %s108, %s111
      %p120 = scmp.eq.s32.totalorder %s19, 3
      %p121 = por %p119, %p120
      %p122 = scmp.ne.s32.totalorder %s111, %s112
      %p123 = scmp.eq.s32.totalorder %s19, 0
      %p124 = por %p122, %p123
      %p125 = scmp.ne.s32.totalorder %s111, %s112
      %p126 = scmp.eq.s32.totalorder %s20, 3
      %p127 = por %p125, %p126
      %p129 = scmp.ne.s32.totalorder %s112, %s128
      %p130 = scmp.eq.s32.totalorder %s20, 0
      %p131 = por %p129, %p130
      %s132 = ssub.s32 %s21, %s33
      %s133 = ssub.s32 %s22, %s29
      %s134 = sor.u32 %s132, %s133
      %p135 = scmp.eq.s32.totalorder %s134, 0
      %s137 = sadd.s32 %s136, 1
      %s138 = scalar_select %p135, %s136, %s137
      %p141 = pneg %p135
      %p142 = scmp.eq.s32.totalorder %s14, 3
      %p143 = por %p141, %p142
      %p144 = scmp.ne.s32.totalorder %s136, %s139
      %p145 = scmp.eq.s32.totalorder %s14, 0
      %p146 = por %p144, %p145
      %p147 = scmp.ne.s32.totalorder %s136, %s139
      %p148 = scmp.eq.s32.totalorder %s19, 3
      %p149 = por %p147, %p148
      %p150 = scmp.ne.s32.totalorder %s139, %s140
      %p151 = scmp.eq.s32.totalorder %s19, 0
      %p152 = por %p150, %p151
      %p153 = scmp.ne.s32.totalorder %s139, %s140
      %p154 = scmp.eq.s32.totalorder %s20, 3
      %p155 = por %p153, %p154
      %p157 = scmp.ne.s32.totalorder %s140, %s156
      %p158 = scmp.eq.s32.totalorder %s20, 0
      %p159 = por %p157, %p158
      %s160 = ssub.s32 %s21, %s33
      %s161 = ssub.s32 %s22, %s29
      %s162 = sor.u32 %s160, %s161
      %p163 = scmp.eq.s32.totalorder %s162, 0
      %s165 = sadd.s32 %s164, 1
      %s166 = scalar_select %p163, %s164, %s165
      %p169 = pneg %p163
      %p170 = scmp.eq.s32.totalorder %s14, 3
      %p171 = por %p169, %p170
      %p172 = scmp.ne.s32.totalorder %s164, %s167
      %p173 = scmp.eq.s32.totalorder %s14, 0
      %p174 = por %p172, %p173
      %p175 = scmp.ne.s32.totalorder %s164, %s167
      %p176 = scmp.eq.s32.totalorder %s19, 3
      %p177 = por %p175, %p176
      %p178 = scmp.ne.s32.totalorder %s167, %s168
      %p179 = scmp.eq.s32.totalorder %s19, 0
      %p180 = por %p178, %p179
      %p181 = scmp.ne.s32.totalorder %s167, %s168
      %p182 = scmp.eq.s32.totalorder %s20, 3
      %p183 = por %p181, %p182
      %p185 = scmp.ne.s32.totalorder %s168, %s184
      %p186 = scmp.eq.s32.totalorder %s20, 0
      %p187 = por %p185, %p186
      %s188 = ssub.s32 %s21, %s33
      %s189 = ssub.s32 %s22, %s29
      %s190 = sor.u32 %s188, %s189
      %p191 = scmp.eq.s32.totalorder %s190, 0
      %s193 = sadd.s32 %s192, 1
      %s194 = scalar_select %p191, %s192, %s193
      %p197 = pneg %p191
      %p198 = scmp.eq.s32.totalorder %s14, 3
      %p199 = por %p197, %p198
      %p200 = scmp.ne.s32.totalorder %s192, %s195
      %p201 = scmp.eq.s32.totalorder %s14, 0
      %p202 = por %p200, %p201
      %p203 = scmp.ne.s32.totalorder %s192, %s195
      %p204 = scmp.eq.s32.totalorder %s19, 3
      %p205 = por %p203, %p204
      %p206 = scmp.ne.s32.totalorder %s195, %s196
      %p207 = scmp.eq.s32.totalorder %s19, 0
      %p208 = por %p206, %p207
      %p209 = scmp.ne.s32.totalorder %s195, %s196
      %p210 = scmp.eq.s32.totalorder %s20, 3
      %p211 = por %p209, %p210
      %p213 = scmp.ne.s32.totalorder %s196, %s212
      %p214 = scmp.eq.s32.totalorder %s20, 0
      %p215 = por %p213, %p214
      %s216 = ssub.s32 %s21, %s33
      %s217 = ssub.s32 %s22, %s29
      %s218 = sor.u32 %s216, %s217
      %p219 = scmp.eq.s32.totalorder %s218, 0
      %s221 = sadd.s32 %s220, 1
      %s222 = scalar_select %p219, %s220, %s221
      %p225 = pneg %p219
      %p226 = scmp.eq.s32.totalorder %s14, 3
      %p227 = por %p225, %p226
      %p228 = scmp.ne.s32.totalorder %s220, %s223
      %p229 = scmp.eq.s32.totalorder %s14, 0
      %p230 = por %p228, %p229
      %p231 = scmp.ne.s32.totalorder %s220, %s223
      %p232 = scmp.eq.s32.totalorder %s19, 3
      %p233 = por %p231, %p232
      %p234 = scmp.ne.s32.totalorder %s223, %s224
      %p235 = scmp.eq.s32.totalorder %s19, 0
      %p236 = por %p234, %p235
      %p237 = scmp.ne.s32.totalorder %s223, %s224
      %p238 = scmp.eq.s32.totalorder %s20, 3
      %p239 = por %p237, %p238
      %p241 = scmp.ne.s32.totalorder %s224, %s240
      %p242 = scmp.eq.s32.totalorder %s20, 0
      %p243 = por %p241, %p242
      %p244 = scmp.le.s32.totalorder 1, %s14
      %p245 = scmp.lt.s32.totalorder %s14, 5
      %p246 = pnand %p244, %p245
      %p247 = pneg %p246
      // Predicated region
      $region9: #{csrd_forward.3} parent=5 // pred_check
        _
      $region10: #{csrd_forward.3} parent=5 // pred_check_branch
        %249 = sbr.rel (%p246) target = $region12
      $region11: #{csrd_forward.3} parent=5 // pred_region
        %s250 = ssub.s32 %s14, 1
        // Predicated region
        $region13: #{csrd_forward.3} parent=11 // pred_check
          %p251 = pneg %p75
        $region14: #{csrd_forward.3} parent=11 // pred_check_branch
          %253 = sbr.rel (%p251) target = $region16
        $region15: #{csrd_forward.3} parent=11 // pred_region
          _
        $region16: #{csrd_forward.3} parent=11 // pred_fallthru
          _
        // Predicated region
        $region17: #{csrd_forward.3} parent=11 // pred_check
          %p254 = pneg %p96
        $region18: #{csrd_forward.3} parent=11 // pred_check_branch
          %256 = sbr.rel (%p254) target = $region20
        $region19: #{csrd_forward.3} parent=11 // pred_region
          _
        $region20: #{csrd_forward.3} parent=11 // pred_fallthru
          _
      $region12: #{csrd_forward.3} parent=5 // pred_fallthru
        _
      %p257 = scmp.lt.s32.totalorder %s14, 4
      // Predicated region
      $region21: #{csrd_forward.3} parent=5 // pred_check
        %p258 = pneg %p257
      $region22: #{csrd_forward.3} parent=5 // pred_check_branch
        %260 = sbr.rel (%p258) target = $region24
      $region23: #{csrd_forward.3} parent=5 // pred_region
        // Predicated region
        $region25: #{csrd_forward.3} parent=23 // pred_check
          %p261 = pneg %p48
        $region26: #{csrd_forward.3} parent=23 // pred_check_branch
          %263 = sbr.rel (%p261) target = $region28
        $region27: #{csrd_forward.3} parent=23 // pred_region
          %s264 = sand.u32 %s38, 1
          %s265 = sand.u32 %s38, 1
          %s266 = smul.addr %s265, 16
          %s267 = scalar_lea.vmem [#allocation2], %s266
          %s268 = smul.addr %s21, 4
          %s269 = sadd.s32 %s22, %s268
          %s270 = smul.addr %s269, 8
          %s271 = scalar_lea.vmem %s0, %s270
          // Predicated region
          $region29: #{csrd_forward.3} parent=27 // pred_check
            _
          $region30: #{csrd_forward.3} parent=27 // pred_check_branch
            %273 = sbr.rel (0) target = $region32
          $region31: #{csrd_forward.3} parent=27 // pred_region
            // Predicated region
            $region33: #{csrd_forward.3} parent=31 // pred_check
              _
            $region34: #{csrd_forward.3} parent=31 // pred_check_branch
              %275 = sbr.rel (0) target = $region36
            $region35: #{csrd_forward.3} parent=31 // pred_region
              // Predicated region
              $region48: #{csrd_forward.3} parent=35 // pred_check
                _
              $region49: #{csrd_forward.3} parent=35 // pred_check_branch
                %292 = sbr.rel (0) target = $region51
              $region50: #{csrd_forward.3} parent=35 // pred_region
                loop: start=0, step=1, limit=1
                $region52: #{csrd_forward.3} parent=50 // loop_pre_header
                  _
                $region53: #{csrd_forward.3} parent=50 // loop_header
                  %s294 = sphi 0, %s298
                  %p295 = scmp.ge.s32.totalorder %s294, 1
                  %s299 = sphi %s271, %s271
                  %s300 = sphi %s267, %s267
                $region54: #{csrd_forward.3} parent=50 // loop_header_branch
                  %297 = sbr.rel (%p295) target = $region58
                $region55: #{csrd_forward.3} parent=50 // loop_body
                  %v301 = vld [vmem:[%s299] sm:$0xff]
                  %302 = vst [vmem:[%s300] sm:$0xff] %v301
                  %v303 = vld [vmem:[%s299 + $0x10] sm:$0xff]
                  %304 = vst [vmem:[%s300 + $0x8] sm:$0xff] %v303
                $region56: #{csrd_forward.3} parent=50 // loop_footer
                  %s298 = sadd.s32 1, %s294
                $region57: #{csrd_forward.3} parent=50 // loop_footer_branch
                  %293 = sbr.rel target = $region53
                $region58: #{csrd_forward.3} parent=50 // loop_exit
                  _
              $region51: #{csrd_forward.3} parent=35 // pred_fallthru
                _
              // Predicated region
              $region59: #{csrd_forward.3} parent=35 // pred_check
                _
              $region60: #{csrd_forward.3} parent=35 // pred_check_branch
                %306 = sbr.rel target = $region62
              $region61: #{csrd_forward.3} parent=35 // pred_region
                _
              $region62: #{csrd_forward.3} parent=35 // pred_fallthru
                _
            $region36: #{csrd_forward.3} parent=31 // pred_fallthru
              _
            // Predicated region
            $region37: #{csrd_forward.3} parent=31 // pred_check
              _
            $region38: #{csrd_forward.3} parent=31 // pred_check_branch
              %277 = sbr.rel target = $region40
            $region39: #{csrd_forward.3} parent=31 // pred_region
              loop: start=0, step=1, limit=1
              $region41: #{csrd_forward.3} parent=39 // loop_pre_header
                _
              $region42: #{csrd_forward.3} parent=39 // loop_header
                %s280 = sphi 0, %s284
                %p281 = scmp.ge.s32.totalorder %s280, 1
                %s285 = sphi %s271, %s271
                %s286 = sphi %s267, %s267
              $region43: #{csrd_forward.3} parent=39 // loop_header_branch
                %283 = sbr.rel (%p281) target = $region47
              $region44: #{csrd_forward.3} parent=39 // loop_body
                %v287 = vld [vmem:[%s285] sm:$0xff]
                %288 = vst [vmem:[%s286] sm:$0xff] %v287
                %v289 = vld [vmem:[%s285 + $0x10] sm:$0xff]
                %290 = vst [vmem:[%s286 + $0x8] sm:$0xff] %v289
              $region45: #{csrd_forward.3} parent=39 // loop_footer
                %s284 = sadd.s32 1, %s280
              $region46: #{csrd_forward.3} parent=39 // loop_footer_branch
                %279 = sbr.rel target = $region42
              $region47: #{csrd_forward.3} parent=39 // loop_exit
                _
            $region40: #{csrd_forward.3} parent=31 // pred_fallthru
              _
          $region32: #{csrd_forward.3} parent=27 // pred_fallthru
            _
          %307 = vnop
        $region28: #{csrd_forward.3} parent=23 // pred_fallthru
          _
      $region24: #{csrd_forward.3} parent=5 // pred_fallthru
        _
      %p308 = scmp.le.s32.totalorder 1, %s14
      %p309 = scmp.lt.s32.totalorder %s14, 5
      %p310 = pnand %p308, %p309
      %p311 = pneg %p310
      // Predicated region
      $region63: #{csrd_forward.3} parent=5 // pred_check
        _
      $region64: #{csrd_forward.3} parent=5 // pred_check_branch
        %313 = sbr.rel (%p310) target = $region66
      $region65: #{csrd_forward.3} parent=5 // pred_region
        %s314 = ssub.s32 %s14, 1
        %s315 = sand.u32 %s41, 1
        %s316 = sand.u32 %s41, 1
        %s317 = smul.addr %s316, 16
        %s318 = scalar_lea.vmem [#allocation2], %s317
        // Predicated region
        $region67: #{csrd_forward.3} parent=65 // pred_check
          %p319 = pneg %p54
        $region68: #{csrd_forward.3} parent=65 // pred_check_branch
          %321 = sbr.rel (%p319) target = $region70
        $region69: #{csrd_forward.3} parent=65 // pred_region
          _
        $region70: #{csrd_forward.3} parent=65 // pred_fallthru
          _
        %s322 = sand.u32 %s41, 1
        %s323 = sand.u32 %s41, 1
        %s324 = smul.addr %s323, 16
        %s325 = scalar_lea.vmem [#allocation2], %s324
        %p326 = pneg %p54
        %p327 = pneg %p51
        %p328 = pneg %p75
        %p329 = pneg %p72
        %p330 = pneg %p96
        %p331 = pneg %p93
        %p332 = pneg %p124
        %p333 = pneg %p121
        %s334 = sand.u32 %s111, 1
        %s335 = sand.u32 %s111, 1
        %s336 = smul.addr %s335, 16
        %s337 = scalar_lea.vmem [#allocation3], %s336
        %p338 = pneg %p152
        %p339 = pneg %p149
        %p340 = scmp.lt.s32.totalorder %s23, 1
        %s341 = scalar_select %p340, %s23, 1
        %p342 = scmp.lt.s32.totalorder %s24, 1
        %s343 = scalar_select %p342, %s24, 1
        %s344 = smul.addr %s341, 2
        %s345 = sadd.s32 %s343, %s344
        %s346 = smul.addr %s345, 4
        %s347 = scalar_lea.vmem %s4, %s346
        %p348 = pneg %p180
        %p349 = pneg %p177
        %p350 = scmp.lt.s32.totalorder %s23, 1
        %s351 = scalar_select %p350, %s23, 1
        %p352 = scmp.lt.s32.totalorder %s24, 1
        %s353 = scalar_select %p352, %s24, 1
        %s354 = smul.addr %s351, 2
        %s355 = sadd.s32 %s353, %s354
        %s356 = smul.addr %s355, 4
        %s357 = scalar_lea.vmem %s5, %s356
        %p358 = pneg %p208
        %p359 = pneg %p205
        %p360 = scmp.lt.s32.totalorder %s23, 1
        %s361 = scalar_select %p360, %s23, 1
        %p362 = scmp.lt.s32.totalorder %s24, 1
        %s363 = scalar_select %p362, %s24, 1
        %s364 = smul.addr %s363, 2
        %s365 = smul.addr %s361, 4
        %s366 = sadd.s32 %s364, %s365
        %s367 = smul.addr %s366, 8
        %s368 = scalar_lea.vmem %s6, %s367
        %p369 = pneg %p236
        %p370 = pneg %p233
        %p371 = scmp.lt.s32.totalorder %s23, 1
        %s372 = scalar_select %p371, %s23, 1
        %p373 = scmp.lt.s32.totalorder %s24, 1
        %s374 = scalar_select %p373, %s24, 1
        %s375 = smul.addr %s372, 2
        %s376 = sadd.s32 %s374, %s375
        %s377 = smul.addr %s376, 8
        %s378 = scalar_lea.vmem %s7, %s377
        %p379 = scmp.lt.s32.totalorder %s23, 1
        %s380 = scalar_select %p379, %s23, 1
        %p381 = scmp.lt.s32.totalorder %s24, 1
        %s382 = scalar_select %p381, %s24, 1
        %s383 = smul.addr %s380, 2
        %s384 = sadd.s32 %s382, %s383
        %s385 = smul.addr %s384, 4
        %s386 = scalar_lea.vmem %s4, %s385
        %p387 = scmp.lt.s32.totalorder %s23, 1
        %s388 = scalar_select %p387, %s23, 1
        %p389 = scmp.lt.s32.totalorder %s24, 1
        %s390 = scalar_select %p389, %s24, 1
        %s391 = smul.addr %s388, 2
        %s392 = sadd.s32 %s390, %s391
        %s393 = smul.addr %s392, 4
        %s394 = scalar_lea.vmem %s5, %s393
        %p395 = scmp.lt.s32.totalorder %s23, 1
        %s396 = scalar_select %p395, %s23, 1
        %p397 = scmp.lt.s32.totalorder %s24, 1
        %s398 = scalar_select %p397, %s24, 1
        %s399 = smul.addr %s398, 2
        %s400 = smul.addr %s396, 4
        %s401 = sadd.s32 %s399, %s400
        %s402 = smul.addr %s401, 8
        %s403 = scalar_lea.vmem %s6, %s402
        %p404 = scmp.lt.s32.totalorder %s23, 1
        %s405 = scalar_select %p404, %s23, 1
        %p406 = scmp.lt.s32.totalorder %s24, 1
        %s407 = scalar_select %p406, %s24, 1
        %s408 = smul.addr %s405, 2
        %s409 = sadd.s32 %s407, %s408
        %s410 = smul.addr %s409, 8
        %s411 = scalar_lea.vmem %s7, %s410
        %v412 = vld [vmem:[%s318] sm:$0xff]
        %v413 = vld [vmem:[%s318 + $0x8] sm:$0xff]
        %v414 = vld [vmem:[%s1] sm:$0xff]
        %v415 = vld [vmem:[%s1 + $0x8] sm:$0xff]
        %v416 = vld [vmem:[%s1 + $0x10] sm:$0xff]
        %vm417 = vcmask 130048
        %v419 = vsel %vm417, %v414, 0
        %v422 = vsel %vm417, %v415, 0
        %v425 = vsel %vm417, %v416, 0
        %427 = vmatprep.subr.mxu0 0.0
        %428 = vmatpush1.msra.mxu0 %v412
        %429 = vmatprep.subr.mxu0 0.0
        %430 = vmatpush1.msra.mxu0 %v413
        %431 = vmatprep.subr.mxu0 0.0
        %432 = vmatpush1.msra.mxu0 0.0
        %433 = vmatprep.subr.mxu0 0.0
        %434 = vmatpush1.msra.mxu0 0.0
        %435 = vmatprep.subr.mxu0 0.0
        %436 = vmatpush1.msra.mxu0 0.0
        %437 = vmatprep.subr.mxu0 0.0
        %438 = vmatpush1.msra.mxu0 0.0
        %439 = vmatprep.subr.mxu0 0.0
        %440 = vmatpush1.msra.mxu0 0.0
        %441 = vmatprep.subr.mxu0 0.0
        %442 = vmatpush1.msra.mxu0 0.0
        %443 = vmatprep.subr.mxu0 0.0
        %444 = vmatpush1.msra.mxu0 0.0
        %445 = vmatprep.subr.mxu0 0.0
        %446 = vmatpush1.msra.mxu0 0.0
        %447 = vmatprep.subr.mxu0 0.0
        %448 = vmatpush1.msra.mxu0 0.0
        %449 = vmatprep.subr.mxu0 0.0
        %450 = vmatpush1.msra.mxu0 0.0
        %451 = vmatprep.subr.mxu0 0.0
        %452 = vmatpush1.msra.mxu0 0.0
        %453 = vmatprep.subr.mxu0 0.0
        %454 = vmatpush1.msra.mxu0 0.0
        %455 = vmatprep.subr.mxu0 0.0
        %456 = vmatpush1.msra.mxu0 0.0
        %457 = vmatprep.subr.mxu0 0.0
        %458 = vmatpush1.msra.mxu0 0.0
        %459 = vmatprep.subr.mxu0 0.0
        %460 = vmatpush1.msra.mxu0 0.0
        %461 = vmatprep.subr.mxu0 0.0
        %462 = vmatpush1.msra.mxu0 0.0
        %463 = vmatprep.subr.mxu0 0.0
        %464 = vmatpush1.msra.mxu0 0.0
        %465 = vmatprep.subr.mxu0 0.0
        %466 = vmatpush1.msra.mxu0 0.0
        %467 = vmatprep.subr.mxu0 0.0
        %468 = vmatpush1.msra.mxu0 0.0
        %469 = vmatprep.subr.mxu0 0.0
        %470 = vmatpush1.msra.mxu0 0.0
        %471 = vmatprep.subr.mxu0 0.0
        %472 = vmatpush1.msra.mxu0 0.0
        %473 = vmatprep.subr.mxu0 0.0
        %474 = vmatpush1.msra.mxu0 0.0
        %475 = vmatprep.subr.mxu0 0.0
        %476 = vmatpush1.msra.mxu0 0.0
        %477 = vmatprep.subr.mxu0 0.0
        %478 = vmatpush1.msra.mxu0 0.0
        %479 = vmatprep.subr.mxu0 0.0
        %480 = vmatpush1.msra.mxu0 0.0
        %481 = vmatprep.subr.mxu0 0.0
        %482 = vmatpush1.msra.mxu0 0.0
        %483 = vmatprep.subr.mxu0 0.0
        %484 = vmatpush1.msra.mxu0 0.0
        %485 = vmatprep.subr.mxu0 0.0
        %486 = vmatpush1.msra.mxu0 0.0
        %487 = vmatprep.subr.mxu0 0.0
        %488 = vmatpush1.msra.mxu0 0.0
        %489 = vmatprep.subr.mxu0 0.0
        %490 = vmatpush1.msra.mxu0 0.0
        %491 = vmatprep.mubr.f32.mxu0 0.0
        %492 = vmatmul.mubr.f32.gmra.mrb[0].mxu0 %v419
        %v493 = vpop.f32.mrb[0].mxu0
        %v494 = vadd.f32 0.0, %v493
        %v495 = vpop.f32.mrb[0].mxu0
        %496 = vmatprep.mubr.f32.mxu0 0.0
        %497 = vmatmul.mubr.f32.gmra.mrb[0].mxu0 %v422
        %v498 = vpop.f32.mrb[0].mxu0
        %v499 = vadd.f32 0.0, %v498
        %v500 = vpop.f32.mrb[0].mxu0
        %501 = vmatprep.mubr.f32.mxu0 0.0
        %502 = vmatmul.mubr.f32.gmra.mrb[0].mxu0 %v425
        %v503 = vpop.f32.mrb[0].mxu0
        %v504 = vadd.f32 0.0, %v503
        %v505 = vpop.f32.mrb[0].mxu0
        %506 = vdwg.mxu0
        %v507 = vld [vmem:[%s2] sm:$0xff]
        %v508 = vld [vmem:[%s2 + $0x8] sm:$0xff]
        %510 = vset.pattern.permute.xlu0 0
        %511 = vperm.xlu0 %510, %v507
        %v512 = vpop.permute.xlu0 %511
        %515 = vset.pattern.permute.xlu0 0
        %516 = vperm.xlu0 %515, %v508
        %v517 = vpop.permute.xlu0 %516
        %v519 = vadd.f32 %v494, %v512
        %v520 = vadd.f32 %v499, %v517
        %521 = vst [vmem:[%s337] sm:$0xff] %v519
        %522 = vst [vmem:[%s337 + $0x8] sm:$0xff] %v520
        %523 = vst [vmem:[%s386] sm:$0xf] %v504
        %524 = vst [vmem:[%s394 - $0x4] sm:$0xf0] %v504
        %525 = vadd.xlane.f32.xlu0 %v412
        %v526 = vpop.xlane.xlu0 %525
        %527 = vadd.xlane.f32.xlu0 %v413
        %v528 = vpop.xlane.xlu0 %527
        %vm529 = vcmask 7168
        %530 = vst.msk [vmem:[%s403] sm:$0xff] %vm529, %v526
        %531 = vst.msk [vmem:[%s403 + $0x8] sm:$0xff] %vm529, %v528
        %v532 = vmul.f32 %v412, %v412
        %v533 = vmul.f32 %v413, %v413
        %534 = vadd.xlane.f32.xlu0 %v532
        %v535 = vpop.xlane.xlu0 %534
        %536 = vadd.xlane.f32.xlu0 %v533
        %v537 = vpop.xlane.xlu0 %536
        %vm538 = vcmask 15368
        %539 = vst.msk [vmem:[%s403] sm:$0xff] %vm538, %v535
        %540 = vst.msk [vmem:[%s403 + $0x8] sm:$0xff] %vm538, %v537
        %541 = vadd.xlane.f32.xlu0 %v504
        %v542 = vpop.xlane.xlu0 %541
        %543 = vst.msk [vmem:[%s411] sm:$0xff] %vm529, %v542
        %v544 = vmul.f32 %v504, %v504
        %545 = vadd.xlane.f32.xlu0 %v544
        %v546 = vpop.xlane.xlu0 %545
        %547 = vst.msk [vmem:[%s411] sm:$0xff] %vm538, %v546
        %s548 = sand.u32 %s111, 1
        %s549 = sand.u32 %s111, 1
        %s550 = smul.addr %s549, 16
        %s551 = scalar_lea.vmem [#allocation3], %s550
        %p552 = scmp.lt.s32.totalorder %s23, 1
        %s553 = scalar_select %p552, %s23, 1
        %p554 = scmp.lt.s32.totalorder %s24, 1
        %s555 = scalar_select %p554, %s24, 1
        %s556 = smul.addr %s553, 2
        %s557 = sadd.s32 %s555, %s556
        %s558 = smul.addr %s557, 4
        %s559 = scalar_lea.vmem %s4, %s558
        %p560 = scmp.lt.s32.totalorder %s23, 1
        %s561 = scalar_select %p560, %s23, 1
        %p562 = scmp.lt.s32.totalorder %s24, 1
        %s563 = scalar_select %p562, %s24, 1
        %s564 = smul.addr %s561, 2
        %s565 = sadd.s32 %s563, %s564
        %s566 = smul.addr %s565, 4
        %s567 = scalar_lea.vmem %s5, %s566
        %p568 = scmp.lt.s32.totalorder %s23, 1
        %s569 = scalar_select %p568, %s23, 1
        %p570 = scmp.lt.s32.totalorder %s24, 1
        %s571 = scalar_select %p570, %s24, 1
        %s572 = smul.addr %s571, 2
        %s573 = smul.addr %s569, 4
        %s574 = sadd.s32 %s572, %s573
        %s575 = smul.addr %s574, 8
        %s576 = scalar_lea.vmem %s6, %s575
        %p577 = scmp.lt.s32.totalorder %s23, 1
        %s578 = scalar_select %p577, %s23, 1
        %p579 = scmp.lt.s32.totalorder %s24, 1
        %s580 = scalar_select %p579, %s24, 1
        %s581 = smul.addr %s578, 2
        %s582 = sadd.s32 %s580, %s581
        %s583 = smul.addr %s582, 8
        %s584 = scalar_lea.vmem %s7, %s583
        // Predicated region
        $region71: #{csrd_forward.3} parent=65 // pred_check
          %p585 = pneg %p121
        $region72: #{csrd_forward.3} parent=65 // pred_check_branch
          %587 = sbr.rel (%p585) target = $region74
        $region73: #{csrd_forward.3} parent=65 // pred_region
          %s588 = smul.addr %s23, 4
          %s589 = sadd.s32 %s24, %s588
          %s590 = smul.addr %s589, 8
          %s591 = scalar_lea.vmem %s3, %s590
          // Predicated region
          $region75: #{csrd_forward.3} parent=73 // pred_check
            _
          $region76: #{csrd_forward.3} parent=73 // pred_check_branch
            %593 = sbr.rel (0) target = $region78
          $region77: #{csrd_forward.3} parent=73 // pred_region
            // Predicated region
            $region79: #{csrd_forward.3} parent=77 // pred_check
              _
            $region80: #{csrd_forward.3} parent=77 // pred_check_branch
              %595 = sbr.rel (0) target = $region82
            $region81: #{csrd_forward.3} parent=77 // pred_region
              // Predicated region
              $region94: #{csrd_forward.3} parent=81 // pred_check
                _
              $region95: #{csrd_forward.3} parent=81 // pred_check_branch
                %612 = sbr.rel (0) target = $region97
              $region96: #{csrd_forward.3} parent=81 // pred_region
                loop: start=0, step=1, limit=1
                $region98: #{csrd_forward.3} parent=96 // loop_pre_header
                  _
                $region99: #{csrd_forward.3} parent=96 // loop_header
                  %s614 = sphi 0, %s618
                  %p615 = scmp.ge.s32.totalorder %s614, 1
                  %s619 = sphi %s551, %s551
                  %s620 = sphi %s591, %s591
                $region100: #{csrd_forward.3} parent=96 // loop_header_branch
                  %617 = sbr.rel (%p615) target = $region104
                $region101: #{csrd_forward.3} parent=96 // loop_body
                  %v621 = vld [vmem:[%s619] sm:$0xff]
                  %622 = vst [vmem:[%s620] sm:$0xff] %v621
                  %v623 = vld [vmem:[%s619 + $0x8] sm:$0xff]
                  %624 = vst [vmem:[%s620 + $0x10] sm:$0xff] %v623
                $region102: #{csrd_forward.3} parent=96 // loop_footer
                  %s618 = sadd.s32 1, %s614
                $region103: #{csrd_forward.3} parent=96 // loop_footer_branch
                  %613 = sbr.rel target = $region99
                $region104: #{csrd_forward.3} parent=96 // loop_exit
                  _
              $region97: #{csrd_forward.3} parent=81 // pred_fallthru
                _
              // Predicated region
              $region105: #{csrd_forward.3} parent=81 // pred_check
                _
              $region106: #{csrd_forward.3} parent=81 // pred_check_branch
                %626 = sbr.rel target = $region108
              $region107: #{csrd_forward.3} parent=81 // pred_region
                _
              $region108: #{csrd_forward.3} parent=81 // pred_fallthru
                _
            $region82: #{csrd_forward.3} parent=77 // pred_fallthru
              _
            // Predicated region
            $region83: #{csrd_forward.3} parent=77 // pred_check
              _
            $region84: #{csrd_forward.3} parent=77 // pred_check_branch
              %597 = sbr.rel target = $region86
            $region85: #{csrd_forward.3} parent=77 // pred_region
              loop: start=0, step=1, limit=1
              $region87: #{csrd_forward.3} parent=85 // loop_pre_header
                _
              $region88: #{csrd_forward.3} parent=85 // loop_header
                %s600 = sphi 0, %s604
                %p601 = scmp.ge.s32.totalorder %s600, 1
                %s605 = sphi %s551, %s551
                %s606 = sphi %s591, %s591
              $region89: #{csrd_forward.3} parent=85 // loop_header_branch
                %603 = sbr.rel (%p601) target = $region93
              $region90: #{csrd_forward.3} parent=85 // loop_body
                %v607 = vld [vmem:[%s605] sm:$0xff]
                %608 = vst [vmem:[%s606] sm:$0xff] %v607
                %v609 = vld [vmem:[%s605 + $0x8] sm:$0xff]
                %610 = vst [vmem:[%s606 + $0x10] sm:$0xff] %v609
              $region91: #{csrd_forward.3} parent=85 // loop_footer
                %s604 = sadd.s32 1, %s600
              $region92: #{csrd_forward.3} parent=85 // loop_footer_branch
                %599 = sbr.rel target = $region88
              $region93: #{csrd_forward.3} parent=85 // loop_exit
                _
            $region86: #{csrd_forward.3} parent=77 // pred_fallthru
              _
          $region78: #{csrd_forward.3} parent=73 // pred_fallthru
            _
          %627 = vnop
        $region74: #{csrd_forward.3} parent=65 // pred_fallthru
          _
        // Predicated region
        $region109: #{csrd_forward.3} parent=65 // pred_check
          %p628 = pneg %p149
        $region110: #{csrd_forward.3} parent=65 // pred_check_branch
          %630 = sbr.rel (%p628) target = $region112
        $region111: #{csrd_forward.3} parent=65 // pred_region
          _
        $region112: #{csrd_forward.3} parent=65 // pred_fallthru
          _
        // Predicated region
        $region113: #{csrd_forward.3} parent=65 // pred_check
          %p631 = pneg %p177
        $region114: #{csrd_forward.3} parent=65 // pred_check_branch
          %633 = sbr.rel (%p631) target = $region116
        $region115: #{csrd_forward.3} parent=65 // pred_region
          _
        $region116: #{csrd_forward.3} parent=65 // pred_fallthru
          _
        // Predicated region
        $region117: #{csrd_forward.3} parent=65 // pred_check
          %p634 = pneg %p205
        $region118: #{csrd_forward.3} parent=65 // pred_check_branch
          %636 = sbr.rel (%p634) target = $region120
        $region119: #{csrd_forward.3} parent=65 // pred_region
          _
        $region120: #{csrd_forward.3} parent=65 // pred_fallthru
          _
        // Predicated region
        $region121: #{csrd_forward.3} parent=65 // pred_check
          %p637 = pneg %p233
        $region122: #{csrd_forward.3} parent=65 // pred_check_branch
          %639 = sbr.rel (%p637) target = $region124
        $region123: #{csrd_forward.3} parent=65 // pred_region
          _
        $region124: #{csrd_forward.3} parent=65 // pred_fallthru
          _
      $region66: #{csrd_forward.3} parent=5 // pred_fallthru
        _
      %p640 = scmp.le.s32.totalorder 2, %s14
      // Predicated region
      $region125: #{csrd_forward.3} parent=5 // pred_check
        %p641 = pneg %p640
      $region126: #{csrd_forward.3} parent=5 // pred_check_branch
        %643 = sbr.rel (%p641) target = $region128
      $region127: #{csrd_forward.3} parent=5 // pred_region
        %s644 = ssub.s32 %s14, 2
        // Predicated region
        $region129: #{csrd_forward.3} parent=127 // pred_check
          %p645 = pneg %p127
        $region130: #{csrd_forward.3} parent=127 // pred_check_branch
          %647 = sbr.rel (%p645) target = $region132
        $region131: #{csrd_forward.3} parent=127 // pred_region
          %s648 = sand.u32 %s112, 1
          %s649 = sand.u32 %s112, 1
          %s650 = smul.addr %s649, 16
          %s651 = scalar_lea.vmem [#allocation3], %s650
        $region132: #{csrd_forward.3} parent=127 // pred_fallthru
          _
        // Predicated region
        $region133: #{csrd_forward.3} parent=127 // pred_check
          %p652 = pneg %p155
        $region134: #{csrd_forward.3} parent=127 // pred_check_branch
          %654 = sbr.rel (%p652) target = $region136
        $region135: #{csrd_forward.3} parent=127 // pred_region
          %p655 = scmp.lt.s32.totalorder %s25, 1
          %s656 = scalar_select %p655, %s25, 1
          %p657 = scmp.lt.s32.totalorder %s26, 1
          %s658 = scalar_select %p657, %s26, 1
          %s659 = smul.addr %s656, 2
          %s660 = sadd.s32 %s658, %s659
          %s661 = smul.addr %s660, 4
          %s662 = scalar_lea.vmem %s4, %s661
        $region136: #{csrd_forward.3} parent=127 // pred_fallthru
          _
        // Predicated region
        $region137: #{csrd_forward.3} parent=127 // pred_check
          %p663 = pneg %p183
        $region138: #{csrd_forward.3} parent=127 // pred_check_branch
          %665 = sbr.rel (%p663) target = $region140
        $region139: #{csrd_forward.3} parent=127 // pred_region
          %p666 = scmp.lt.s32.totalorder %s25, 1
          %s667 = scalar_select %p666, %s25, 1
          %p668 = scmp.lt.s32.totalorder %s26, 1
          %s669 = scalar_select %p668, %s26, 1
          %s670 = smul.addr %s667, 2
          %s671 = sadd.s32 %s669, %s670
          %s672 = smul.addr %s671, 4
          %s673 = scalar_lea.vmem %s5, %s672
        $region140: #{csrd_forward.3} parent=127 // pred_fallthru
          _
        // Predicated region
        $region141: #{csrd_forward.3} parent=127 // pred_check
          %p674 = pneg %p211
        $region142: #{csrd_forward.3} parent=127 // pred_check_branch
          %676 = sbr.rel (%p674) target = $region144
        $region143: #{csrd_forward.3} parent=127 // pred_region
          %p677 = scmp.lt.s32.totalorder %s25, 1
          %s678 = scalar_select %p677, %s25, 1
          %p679 = scmp.lt.s32.totalorder %s26, 1
          %s680 = scalar_select %p679, %s26, 1
          %s681 = smul.addr %s680, 2
          %s682 = smul.addr %s678, 4
          %s683 = sadd.s32 %s681, %s682
          %s684 = smul.addr %s683, 8
          %s685 = scalar_lea.vmem %s6, %s684
        $region144: #{csrd_forward.3} parent=127 // pred_fallthru
          _
        // Predicated region
        $region145: #{csrd_forward.3} parent=127 // pred_check
          %p686 = pneg %p239
        $region146: #{csrd_forward.3} parent=127 // pred_check_branch
          %688 = sbr.rel (%p686) target = $region148
        $region147: #{csrd_forward.3} parent=127 // pred_region
          %p689 = scmp.lt.s32.totalorder %s25, 1
          %s690 = scalar_select %p689, %s25, 1
          %p691 = scmp.lt.s32.totalorder %s26, 1
          %s692 = scalar_select %p691, %s26, 1
          %s693 = smul.addr %s690, 2
          %s694 = sadd.s32 %s692, %s693
          %s695 = smul.addr %s694, 8
          %s696 = scalar_lea.vmem %s7, %s695
        $region148: #{csrd_forward.3} parent=127 // pred_fallthru
          _
      $region128: #{csrd_forward.3} parent=5 // pred_fallthru
        _
    $region6: #{csrd_forward.3} parent=1 // loop_footer
      %s18 = sadd.s32 1, %s14
    $region7: #{csrd_forward.3} parent=1 // loop_footer_branch
      %13 = sbr.rel target = $region3
    $region8: #{csrd_forward.3} parent=1 // loop_exit
      _

// kernel: csrd_forward.5
$region0: #{csrd_forward.5}
  #allocation0 [shape = 'u32[]', space=smem, size = 0x4, offset = 0x4, fixed_abs, tag = 'smem constant byte address 0x4 - core index']
  #allocation1 [shape = 'u32[144,128]{1,0:T(1,128)}', space=vmem, size = 0x12000, scoped, tag = 'internal scratch']
  %s0 = inlined_call_operand.vmem [shape: f32[2,16,256], index: 0, kind: input, shape index: {}]
  %s1 = inlined_call_operand.vmem [shape: f32[2,16,256], index: 1, kind: input, shape index: {}]
  %s2 = inlined_call_operand.vmem [shape: f32[2,16,256], index: 2, kind: input, shape index: {}]
  %s3 = inlined_call_operand.vmem [shape: f32[2,16,5], index: 3, kind: input, shape index: {}]
  %s4 = inlined_call_operand.vmem [shape: f32[16,5], index: 4, kind: input, shape index: {}]
  %s5 = inlined_call_operand.vmem [shape: f32[2,16,256], index: 5, kind: output, shape index: {}]
  %s6 = sld [smem:[#allocation0]]
  $region201: #{csrd_forward.5} parent=0
    _
  %s8 = ssub.s32 1, %s6
  %s9 = scalar_select 0, %s8, %s6
  $region1: #{csrd_forward.5} parent=0
    #allocation2 [shape = 'u8[16384]{0}', space=vmem, size = 0x4000, scoped, tag = 'input window, operand 0']
    #allocation3 [shape = 'u8[16384]{0}', space=vmem, size = 0x4000, scoped, tag = 'input window, operand 1']
    #allocation4 [shape = 'u8[16384]{0}', space=vmem, size = 0x4000, scoped, tag = 'input window, operand 2']
    #allocation5 [shape = 'u8[16384]{0}', space=vmem, size = 0x4000, scoped, tag = 'output window, operand 0']
    loop: start=0, step=1, limit=6
    $region2: #{csrd_forward.5} parent=1 // loop_pre_header
      _
    $region3: #{csrd_forward.5} parent=1 // loop_header
      %s11 = sphi 0, %s15
      %p12 = scmp.ge.s32.totalorder %s11, 6
      %s18 = sphi 0, %s30
      %s19 = sphi 0, %s26
      %s20 = sphi 0, %s18
      %s21 = sphi 0, %s19
      %s22 = sphi 0, %s20
      %s23 = sphi 0, %s21
      %s35 = sphi 0, %s37
      %s38 = sphi 0, %s35
      %s39 = sphi 0, %s38
      %s55 = sphi 0, %s39
      %s63 = sphi 0, %s65
      %s66 = sphi 0, %s63
      %s67 = sphi 0, %s66
      %s83 = sphi 0, %s67
      %s91 = sphi 0, %s93
      %s94 = sphi 0, %s91
      %s95 = sphi 0, %s94
      %s111 = sphi 0, %s95
      %s117 = sphi 0, %s119
      %s120 = sphi 0, %s117
      %s121 = sphi 0, %s120
      %s137 = sphi 0, %s121
      %s141 = sphi 0, %s141
      %s143 = sphi 0, %s141
      %s144 = sphi 0, %s143
      %s158 = sphi 0, %s144
      %s166 = sphi 0, %s168
      %s169 = sphi 0, %s166
      %s170 = sphi 0, %s169
      %s186 = sphi 0, %s170
    $region4: #{csrd_forward.5} parent=1 // loop_header_branch
      %14 = sbr.rel (%p12) target = $region8
    $region5: #{csrd_forward.5} parent=1 // loop_body
      %s16 = ssub.s32 %s11, 1
      %s17 = ssub.s32 %s11, 2
      %s24 = sadd.s32 1, %s19
      %p25 = scmp.ge.s32.totalorder %s24, 2
      %s26 = scalar_select %p25, 0, %s24
      %s27 = sadd.s32 1, %s18
      %s28 = scalar_select %p25, %s27, %s18
      %p29 = scmp.ge.s32.totalorder %s28, 2
      %s30 = scalar_select %p29, 0, %s28
      %s31 = ssub.s32 %s18, %s30
      %s32 = ssub.s32 %s19, %s26
      %s33 = sor.u32 %s31, %s32
      %p34 = scmp.eq.s32.totalorder %s33, 0
      %s36 = sadd.s32 %s35, 1
      %s37 = scalar_select %p34, %s35, %s36
      %p40 = pneg %p34
      %p41 = scmp.eq.s32.totalorder %s11, 3
      %p42 = por %p40, %p41
      %p43 = scmp.ne.s32.totalorder %s35, %s38
      %p44 = scmp.eq.s32.totalorder %s11, 0
      %p45 = por %p43, %p44
      %p46 = scmp.ne.s32.totalorder %s35, %s38
      %p47 = scmp.eq.s32.totalorder %s16, 3
      %p48 = por %p46, %p47
      %p49 = scmp.ne.s32.totalorder %s38, %s39
      %p50 = scmp.eq.s32.totalorder %s16, 0
      %p51 = por %p49, %p50
      %p52 = scmp.ne.s32.totalorder %s38, %s39
      %p53 = scmp.eq.s32.totalorder %s17, 3
      %p54 = por %p52, %p53
      %p56 = scmp.ne.s32.totalorder %s39, %s55
      %p57 = scmp.eq.s32.totalorder %s17, 0
      %p58 = por %p56, %p57
      %s59 = ssub.s32 %s18, %s30
      %s60 = ssub.s32 %s19, %s26
      %s61 = sor.u32 %s59, %s60
      %p62 = scmp.eq.s32.totalorder %s61, 0
      %s64 = sadd.s32 %s63, 1
      %s65 = scalar_select %p62, %s63, %s64
      %p68 = pneg %p62
      %p69 = scmp.eq.s32.totalorder %s11, 3
      %p70 = por %p68, %p69
      %p71 = scmp.ne.s32.totalorder %s63, %s66
      %p72 = scmp.eq.s32.totalorder %s11, 0
      %p73 = por %p71, %p72
      %p74 = scmp.ne.s32.totalorder %s63, %s66
      %p75 = scmp.eq.s32.totalorder %s16, 3
      %p76 = por %p74, %p75
      %p77 = scmp.ne.s32.totalorder %s66, %s67
      %p78 = scmp.eq.s32.totalorder %s16, 0
      %p79 = por %p77, %p78
      %p80 = scmp.ne.s32.totalorder %s66, %s67
      %p81 = scmp.eq.s32.totalorder %s17, 3
      %p82 = por %p80, %p81
      %p84 = scmp.ne.s32.totalorder %s67, %s83
      %p85 = scmp.eq.s32.totalorder %s17, 0
      %p86 = por %p84, %p85
      %s87 = ssub.s32 %s18, %s30
      %s88 = ssub.s32 %s19, %s26
      %s89 = sor.u32 %s87, %s88
      %p90 = scmp.eq.s32.totalorder %s89, 0
      %s92 = sadd.s32 %s91, 1
      %s93 = scalar_select %p90, %s91, %s92
      %p96 = pneg %p90
      %p97 = scmp.eq.s32.totalorder %s11, 3
      %p98 = por %p96, %p97
      %p99 = scmp.ne.s32.totalorder %s91, %s94
      %p100 = scmp.eq.s32.totalorder %s11, 0
      %p101 = por %p99, %p100
      %p102 = scmp.ne.s32.totalorder %s91, %s94
      %p103 = scmp.eq.s32.totalorder %s16, 3
      %p104 = por %p102, %p103
      %p105 = scmp.ne.s32.totalorder %s94, %s95
      %p106 = scmp.eq.s32.totalorder %s16, 0
      %p107 = por %p105, %p106
      %p108 = scmp.ne.s32.totalorder %s94, %s95
      %p109 = scmp.eq.s32.totalorder %s17, 3
      %p110 = por %p108, %p109
      %p112 = scmp.ne.s32.totalorder %s95, %s111
      %p113 = scmp.eq.s32.totalorder %s17, 0
      %p114 = por %p112, %p113
      %s115 = ssub.s32 %s18, %s30
      %p116 = scmp.eq.s32.totalorder %s115, 0
      %s118 = sadd.s32 %s117, 1
      %s119 = scalar_select %p116, %s117, %s118
      %p122 = pneg %p116
      %p123 = scmp.eq.s32.totalorder %s11, 3
      %p124 = por %p122, %p123
      %p125 = scmp.ne.s32.totalorder %s117, %s120
      %p126 = scmp.eq.s32.totalorder %s11, 0
      %p127 = por %p125, %p126
      %p128 = scmp.ne.s32.totalorder %s117, %s120
      %p129 = scmp.eq.s32.totalorder %s16, 3
      %p130 = por %p128, %p129
      %p131 = scmp.ne.s32.totalorder %s120, %s121
      %p132 = scmp.eq.s32.totalorder %s16, 0
      %p133 = por %p131, %p132
      %p134 = scmp.ne.s32.totalorder %s120, %s121
      %p135 = scmp.eq.s32.totalorder %s17, 3
      %p136 = por %p134, %p135
      %p138 = scmp.ne.s32.totalorder %s121, %s137
      %p139 = scmp.eq.s32.totalorder %s17, 0
      %p140 = por %p138, %p139
      %s142 = sadd.s32 %s141, 1
      %p145 = scmp.eq.s32.totalorder %s11, 3
      %p146 = scmp.ne.s32.totalorder %s141, %s143
      %p147 = scmp.eq.s32.totalorder %s11, 0
      %p148 = por %p146, %p147
      %p149 = scmp.ne.s32.totalorder %s141, %s143
      %p150 = scmp.eq.s32.totalorder %s16, 3
      %p151 = por %p149, %p150
      %p152 = scmp.ne.s32.totalorder %s143, %s144
      %p153 = scmp.eq.s32.totalorder %s16, 0
      %p154 = por %p152, %p153
      %p155 = scmp.ne.s32.totalorder %s143, %s144
      %p156 = scmp.eq.s32.totalorder %s17, 3
      %p157 = por %p155, %p156
      %p159 = scmp.ne.s32.totalorder %s144, %s158
      %p160 = scmp.eq.s32.totalorder %s17, 0
      %p161 = por %p159, %p160
      %s162 = ssub.s32 %s18, %s30
      %s163 = ssub.s32 %s19, %s26
      %s164 = sor.u32 %s162, %s163
      %p165 = scmp.eq.s32.totalorder %s164, 0
      %s167 = sadd.s32 %s166, 1
      %s168 = scalar_select %p165, %s166, %s167
      %p171 = pneg %p165
      %p172 = scmp.eq.s32.totalorder %s11, 3
      %p173 = por %p171, %p172
      %p174 = scmp.ne.s32.totalorder %s166, %s169
      %p175 = scmp.eq.s32.totalorder %s11, 0
      %p176 = por %p174, %p175
      %p177 = scmp.ne.s32.totalorder %s166, %s169
      %p178 = scmp.eq.s32.totalorder %s16, 3
      %p179 = por %p177, %p178
      %p180 = scmp.ne.s32.totalorder %s169, %s170
      %p181 = scmp.eq.s32.totalorder %s16, 0
      %p182 = por %p180, %p181
      %p183 = scmp.ne.s32.totalorder %s169, %s170
      %p184 = scmp.eq.s32.totalorder %s17, 3
      %p185 = por %p183, %p184
      %p187 = scmp.ne.s32.totalorder %s170, %s186
      %p188 = scmp.eq.s32.totalorder %s17, 0
      %p189 = por %p187, %p188
      %p190 = scmp.le.s32.totalorder 1, %s11
      %p191 = scmp.lt.s32.totalorder %s11, 5
      %p192 = pnand %p190, %p191
      %p193 = pneg %p192
      // Predicated region
      $region9: #{csrd_forward.5} parent=5 // pred_check
        _
      $region10: #{csrd_forward.5} parent=5 // pred_check_branch
        %195 = sbr.rel (%p192) target = $region12
      $region11: #{csrd_forward.5} parent=5 // pred_region
        %s196 = ssub.s32 %s11, 1
        // Predicated region
        $region13: #{csrd_forward.5} parent=11 // pred_check
          %p197 = pneg %p154
        $region14: #{csrd_forward.5} parent=11 // pred_check_branch
          %199 = sbr.rel (%p197) target = $region16
        $region15: #{csrd_forward.5} parent=11 // pred_region
          _
        $region16: #{csrd_forward.5} parent=11 // pred_fallthru
          _
      $region12: #{csrd_forward.5} parent=5 // pred_fallthru
        _
      %p200 = scmp.lt.s32.totalorder %s11, 4
      // Predicated region
      $region17: #{csrd_forward.5} parent=5 // pred_check
        %p201 = pneg %p200
      $region18: #{csrd_forward.5} parent=5 // pred_check_branch
        %203 = sbr.rel (%p201) target = $region20
      $region19: #{csrd_forward.5} parent=5 // pred_region
        // Predicated region
        $region21: #{csrd_forward.5} parent=19 // pred_check
          %p204 = pneg %p45
        $region22: #{csrd_forward.5} parent=19 // pred_check_branch
          %206 = sbr.rel (%p204) target = $region24
        $region23: #{csrd_forward.5} parent=19 // pred_region
          %s207 = sand.u32 %s35, 1
          %s208 = sand.u32 %s35, 1
          %s209 = smul.addr %s208, 16
          %s210 = scalar_lea.vmem [#allocation2], %s209
          %s211 = smul.addr %s18, 4
          %s212 = sadd.s32 %s19, %s211
          %s213 = smul.addr %s212, 8
          %s214 = scalar_lea.vmem %s0, %s213
          // Predicated region
          $region25: #{csrd_forward.5} parent=23 // pred_check
            _
          $region26: #{csrd_forward.5} parent=23 // pred_check_branch
            %216 = sbr.rel (0) target = $region28
          $region27: #{csrd_forward.5} parent=23 // pred_region
            // Predicated region
            $region29: #{csrd_forward.5} parent=27 // pred_check
              _
            $region30: #{csrd_forward.5} parent=27 // pred_check_branch
              %218 = sbr.rel (0) target = $region32
            $region31: #{csrd_forward.5} parent=27 // pred_region
              // Predicated region
              $region44: #{csrd_forward.5} parent=31 // pred_check
                _
              $region45: #{csrd_forward.5} parent=31 // pred_check_branch
                %235 = sbr.rel (0) target = $region47
              $region46: #{csrd_forward.5} parent=31 // pred_region
                loop: start=0, step=1, limit=1
                $region48: #{csrd_forward.5} parent=46 // loop_pre_header
                  _
                $region49: #{csrd_forward.5} parent=46 // loop_header
                  %s237 = sphi 0, %s241
                  %p238 = scmp.ge.s32.totalorder %s237, 1
                  %s242 = sphi %s214, %s214
                  %s243 = sphi %s210, %s210
                $region50: #{csrd_forward.5} parent=46 // loop_header_branch
                  %240 = sbr.rel (%p238) target = $region54
                $region51: #{csrd_forward.5} parent=46 // loop_body
                  %v244 = vld [vmem:[%s242] sm:$0xff]
                  %245 = vst [vmem:[%s243] sm:$0xff] %v244
                  %v246 = vld [vmem:[%s242 + $0x10] sm:$0xff]
                  %247 = vst [vmem:[%s243 + $0x8] sm:$0xff] %v246
                $region52: #{csrd_forward.5} parent=46 // loop_footer
                  %s241 = sadd.s32 1, %s237
                $region53: #{csrd_forward.5} parent=46 // loop_footer_branch
                  %236 = sbr.rel target = $region49
                $region54: #{csrd_forward.5} parent=46 // loop_exit
                  _
              $region47: #{csrd_forward.5} parent=31 // pred_fallthru
                _
              // Predicated region
              $region55: #{csrd_forward.5} parent=31 // pred_check
                _
              $region56: #{csrd_forward.5} parent=31 // pred_check_branch
                %249 = sbr.rel target = $region58
              $region57: #{csrd_forward.5} parent=31 // pred_region
                _
              $region58: #{csrd_forward.5} parent=31 // pred_fallthru
                _
            $region32: #{csrd_forward.5} parent=27 // pred_fallthru
              _
            // Predicated region
            $region33: #{csrd_forward.5} parent=27 // pred_check
              _
            $region34: #{csrd_forward.5} parent=27 // pred_check_branch
              %220 = sbr.rel target = $region36
            $region35: #{csrd_forward.5} parent=27 // pred_region
              loop: start=0, step=1, limit=1
              $region37: #{csrd_forward.5} parent=35 // loop_pre_header
                _
              $region38: #{csrd_forward.5} parent=35 // loop_header
                %s223 = sphi 0, %s227
                %p224 = scmp.ge.s32.totalorder %s223, 1
                %s228 = sphi %s214, %s214
                %s229 = sphi %s210, %s210
              $region39: #{csrd_forward.5} parent=35 // loop_header_branch
                %226 = sbr.rel (%p224) target = $region43
              $region40: #{csrd_forward.5} parent=35 // loop_body
                %v230 = vld [vmem:[%s228] sm:$0xff]
                %231 = vst [vmem:[%s229] sm:$0xff] %v230
                %v232 = vld [vmem:[%s228 + $0x10] sm:$0xff]
                %233 = vst [vmem:[%s229 + $0x8] sm:$0xff] %v232
              $region41: #{csrd_forward.5} parent=35 // loop_footer
                %s227 = sadd.s32 1, %s223
              $region42: #{csrd_forward.5} parent=35 // loop_footer_branch
                %222 = sbr.rel target = $region38
              $region43: #{csrd_forward.5} parent=35 // loop_exit
                _
            $region36: #{csrd_forward.5} parent=27 // pred_fallthru
              _
          $region28: #{csrd_forward.5} parent=23 // pred_fallthru
            _
          %250 = vnop
        $region24: #{csrd_forward.5} parent=19 // pred_fallthru
          _
        // Predicated region
        $region59: #{csrd_forward.5} parent=19 // pred_check
          %p251 = pneg %p73
        $region60: #{csrd_forward.5} parent=19 // pred_check_branch
          %253 = sbr.rel (%p251) target = $region62
        $region61: #{csrd_forward.5} parent=19 // pred_region
          %s254 = sand.u32 %s63, 1
          %s255 = sand.u32 %s63, 1
          %s256 = smul.addr %s255, 16
          %s257 = scalar_lea.vmem [#allocation3], %s256
          %s258 = smul.addr %s18, 4
          %s259 = sadd.s32 %s19, %s258
          %s260 = smul.addr %s259, 8
          %s261 = scalar_lea.vmem %s1, %s260
          // Predicated region
          $region63: #{csrd_forward.5} parent=61 // pred_check
            _
          $region64: #{csrd_forward.5} parent=61 // pred_check_branch
            %263 = sbr.rel (0) target = $region66
          $region65: #{csrd_forward.5} parent=61 // pred_region
            // Predicated region
            $region67: #{csrd_forward.5} parent=65 // pred_check
              _
            $region68: #{csrd_forward.5} parent=65 // pred_check_branch
              %265 = sbr.rel (0) target = $region70
            $region69: #{csrd_forward.5} parent=65 // pred_region
              // Predicated region
              $region82: #{csrd_forward.5} parent=69 // pred_check
                _
              $region83: #{csrd_forward.5} parent=69 // pred_check_branch
                %282 = sbr.rel (0) target = $region85
              $region84: #{csrd_forward.5} parent=69 // pred_region
                loop: start=0, step=1, limit=1
                $region86: #{csrd_forward.5} parent=84 // loop_pre_header
                  _
                $region87: #{csrd_forward.5} parent=84 // loop_header
                  %s284 = sphi 0, %s288
                  %p285 = scmp.ge.s32.totalorder %s284, 1
                  %s289 = sphi %s261, %s261
                  %s290 = sphi %s257, %s257
                $region88: #{csrd_forward.5} parent=84 // loop_header_branch
                  %287 = sbr.rel (%p285) target = $region92
                $region89: #{csrd_forward.5} parent=84 // loop_body
                  %v291 = vld [vmem:[%s289] sm:$0xff]
                  %292 = vst [vmem:[%s290] sm:$0xff] %v291
                  %v293 = vld [vmem:[%s289 + $0x10] sm:$0xff]
                  %294 = vst [vmem:[%s290 + $0x8] sm:$0xff] %v293
                $region90: #{csrd_forward.5} parent=84 // loop_footer
                  %s288 = sadd.s32 1, %s284
                $region91: #{csrd_forward.5} parent=84 // loop_footer_branch
                  %283 = sbr.rel target = $region87
                $region92: #{csrd_forward.5} parent=84 // loop_exit
                  _
              $region85: #{csrd_forward.5} parent=69 // pred_fallthru
                _
              // Predicated region
              $region93: #{csrd_forward.5} parent=69 // pred_check
                _
              $region94: #{csrd_forward.5} parent=69 // pred_check_branch
                %296 = sbr.rel target = $region96
              $region95: #{csrd_forward.5} parent=69 // pred_region
                _
              $region96: #{csrd_forward.5} parent=69 // pred_fallthru
                _
            $region70: #{csrd_forward.5} parent=65 // pred_fallthru
              _
            // Predicated region
            $region71: #{csrd_forward.5} parent=65 // pred_check
              _
            $region72: #{csrd_forward.5} parent=65 // pred_check_branch
              %267 = sbr.rel target = $region74
            $region73: #{csrd_forward.5} parent=65 // pred_region
              loop: start=0, step=1, limit=1
              $region75: #{csrd_forward.5} parent=73 // loop_pre_header
                _
              $region76: #{csrd_forward.5} parent=73 // loop_header
                %s270 = sphi 0, %s274
                %p271 = scmp.ge.s32.totalorder %s270, 1
                %s275 = sphi %s261, %s261
                %s276 = sphi %s257, %s257
              $region77: #{csrd_forward.5} parent=73 // loop_header_branch
                %273 = sbr.rel (%p271) target = $region81
              $region78: #{csrd_forward.5} parent=73 // loop_body
                %v277 = vld [vmem:[%s275] sm:$0xff]
                %278 = vst [vmem:[%s276] sm:$0xff] %v277
                %v279 = vld [vmem:[%s275 + $0x10] sm:$0xff]
                %280 = vst [vmem:[%s276 + $0x8] sm:$0xff] %v279
              $region79: #{csrd_forward.5} parent=73 // loop_footer
                %s274 = sadd.s32 1, %s270
              $region80: #{csrd_forward.5} parent=73 // loop_footer_branch
                %269 = sbr.rel target = $region76
              $region81: #{csrd_forward.5} parent=73 // loop_exit
                _
            $region74: #{csrd_forward.5} parent=65 // pred_fallthru
              _
          $region66: #{csrd_forward.5} parent=61 // pred_fallthru
            _
          %297 = vnop
        $region62: #{csrd_forward.5} parent=19 // pred_fallthru
          _
        // Predicated region
        $region97: #{csrd_forward.5} parent=19 // pred_check
          %p298 = pneg %p101
        $region98: #{csrd_forward.5} parent=19 // pred_check_branch
          %300 = sbr.rel (%p298) target = $region100
        $region99: #{csrd_forward.5} parent=19 // pred_region
          %s301 = sand.u32 %s91, 1
          %s302 = sand.u32 %s91, 1
          %s303 = smul.addr %s302, 16
          %s304 = scalar_lea.vmem [#allocation4], %s303
          %s305 = smul.addr %s18, 4
          %s306 = sadd.s32 %s19, %s305
          %s307 = smul.addr %s306, 8
          %s308 = scalar_lea.vmem %s2, %s307
          // Predicated region
          $region101: #{csrd_forward.5} parent=99 // pred_check
            _
          $region102: #{csrd_forward.5} parent=99 // pred_check_branch
            %310 = sbr.rel (0) target = $region104
          $region103: #{csrd_forward.5} parent=99 // pred_region
            // Predicated region
            $region105: #{csrd_forward.5} parent=103 // pred_check
              _
            $region106: #{csrd_forward.5} parent=103 // pred_check_branch
              %312 = sbr.rel (0) target = $region108
            $region107: #{csrd_forward.5} parent=103 // pred_region
              // Predicated region
              $region120: #{csrd_forward.5} parent=107 // pred_check
                _
              $region121: #{csrd_forward.5} parent=107 // pred_check_branch
                %329 = sbr.rel (0) target = $region123
              $region122: #{csrd_forward.5} parent=107 // pred_region
                loop: start=0, step=1, limit=1
                $region124: #{csrd_forward.5} parent=122 // loop_pre_header
                  _
                $region125: #{csrd_forward.5} parent=122 // loop_header
                  %s331 = sphi 0, %s335
                  %p332 = scmp.ge.s32.totalorder %s331, 1
                  %s336 = sphi %s308, %s308
                  %s337 = sphi %s304, %s304
                $region126: #{csrd_forward.5} parent=122 // loop_header_branch
                  %334 = sbr.rel (%p332) target = $region130
                $region127: #{csrd_forward.5} parent=122 // loop_body
                  %v338 = vld [vmem:[%s336] sm:$0xff]
                  %339 = vst [vmem:[%s337] sm:$0xff] %v338
                  %v340 = vld [vmem:[%s336 + $0x10] sm:$0xff]
                  %341 = vst [vmem:[%s337 + $0x8] sm:$0xff] %v340
                $region128: #{csrd_forward.5} parent=122 // loop_footer
                  %s335 = sadd.s32 1, %s331
                $region129: #{csrd_forward.5} parent=122 // loop_footer_branch
                  %330 = sbr.rel target = $region125
                $region130: #{csrd_forward.5} parent=122 // loop_exit
                  _
              $region123: #{csrd_forward.5} parent=107 // pred_fallthru
                _
              // Predicated region
              $region131: #{csrd_forward.5} parent=107 // pred_check
                _
              $region132: #{csrd_forward.5} parent=107 // pred_check_branch
                %343 = sbr.rel target = $region134
              $region133: #{csrd_forward.5} parent=107 // pred_region
                _
              $region134: #{csrd_forward.5} parent=107 // pred_fallthru
                _
            $region108: #{csrd_forward.5} parent=103 // pred_fallthru
              _
            // Predicated region
            $region109: #{csrd_forward.5} parent=103 // pred_check
              _
            $region110: #{csrd_forward.5} parent=103 // pred_check_branch
              %314 = sbr.rel target = $region112
            $region111: #{csrd_forward.5} parent=103 // pred_region
              loop: start=0, step=1, limit=1
              $region113: #{csrd_forward.5} parent=111 // loop_pre_header
                _
              $region114: #{csrd_forward.5} parent=111 // loop_header
                %s317 = sphi 0, %s321
                %p318 = scmp.ge.s32.totalorder %s317, 1
                %s322 = sphi %s308, %s308
                %s323 = sphi %s304, %s304
              $region115: #{csrd_forward.5} parent=111 // loop_header_branch
                %320 = sbr.rel (%p318) target = $region119
              $region116: #{csrd_forward.5} parent=111 // loop_body
                %v324 = vld [vmem:[%s322] sm:$0xff]
                %325 = vst [vmem:[%s323] sm:$0xff] %v324
                %v326 = vld [vmem:[%s322 + $0x10] sm:$0xff]
                %327 = vst [vmem:[%s323 + $0x8] sm:$0xff] %v326
              $region117: #{csrd_forward.5} parent=111 // loop_footer
                %s321 = sadd.s32 1, %s317
              $region118: #{csrd_forward.5} parent=111 // loop_footer_branch
                %316 = sbr.rel target = $region114
              $region119: #{csrd_forward.5} parent=111 // loop_exit
                _
            $region112: #{csrd_forward.5} parent=103 // pred_fallthru
              _
          $region104: #{csrd_forward.5} parent=99 // pred_fallthru
            _
          %344 = vnop
        $region100: #{csrd_forward.5} parent=19 // pred_fallthru
          _
        // Predicated region
        $region135: #{csrd_forward.5} parent=19 // pred_check
          %p345 = pneg %p127
        $region136: #{csrd_forward.5} parent=19 // pred_check_branch
          %347 = sbr.rel (%p345) target = $region138
        $region137: #{csrd_forward.5} parent=19 // pred_region
          %p348 = scmp.lt.s32.totalorder %s18, 1
          %s349 = scalar_select %p348, %s18, 1
          %s350 = smul.addr %s349, 2
          %s351 = smul.addr %s350, 8
          %s352 = scalar_lea.vmem %s3, %s351
        $region138: #{csrd_forward.5} parent=19 // pred_fallthru
          _
      $region20: #{csrd_forward.5} parent=5 // pred_fallthru
        _
      %p353 = scmp.le.s32.totalorder 1, %s11
      %p354 = scmp.lt.s32.totalorder %s11, 5
      %p355 = pnand %p353, %p354
      %p356 = pneg %p355
      // Predicated region
      $region139: #{csrd_forward.5} parent=5 // pred_check
        _
      $region140: #{csrd_forward.5} parent=5 // pred_check_branch
        %358 = sbr.rel (%p355) target = $region142
      $region141: #{csrd_forward.5} parent=5 // pred_region
        %s359 = ssub.s32 %s11, 1
        %s360 = sand.u32 %s38, 1
        %s361 = sand.u32 %s38, 1
        %s362 = smul.addr %s361, 16
        %s363 = scalar_lea.vmem [#allocation2], %s362
        // Predicated region
        $region143: #{csrd_forward.5} parent=141 // pred_check
          %p364 = pneg %p51
        $region144: #{csrd_forward.5} parent=141 // pred_check_branch
          %366 = sbr.rel (%p364) target = $region146
        $region145: #{csrd_forward.5} parent=141 // pred_region
          _
        $region146: #{csrd_forward.5} parent=141 // pred_fallthru
          _
        %s367 = sand.u32 %s66, 1
        %s368 = sand.u32 %s66, 1
        %s369 = smul.addr %s368, 16
        %s370 = scalar_lea.vmem [#allocation3], %s369
        // Predicated region
        $region147: #{csrd_forward.5} parent=141 // pred_check
          %p371 = pneg %p79
        $region148: #{csrd_forward.5} parent=141 // pred_check_branch
          %373 = sbr.rel (%p371) target = $region150
        $region149: #{csrd_forward.5} parent=141 // pred_region
          _
        $region150: #{csrd_forward.5} parent=141 // pred_fallthru
          _
        %s374 = sand.u32 %s94, 1
        %s375 = sand.u32 %s94, 1
        %s376 = smul.addr %s375, 16
        %s377 = scalar_lea.vmem [#allocation4], %s376
        // Predicated region
        $region151: #{csrd_forward.5} parent=141 // pred_check
          %p378 = pneg %p107
        $region152: #{csrd_forward.5} parent=141 // pred_check_branch
          %380 = sbr.rel (%p378) target = $region154
        $region153: #{csrd_forward.5} parent=141 // pred_region
          _
        $region154: #{csrd_forward.5} parent=141 // pred_fallthru
          _
        %s381 = sand.u32 %s38, 1
        %s382 = sand.u32 %s38, 1
        %s383 = smul.addr %s382, 16
        %s384 = scalar_lea.vmem [#allocation2], %s383
        %p385 = pneg %p51
        %p386 = pneg %p48
        %s387 = sand.u32 %s66, 1
        %s388 = sand.u32 %s66, 1
        %s389 = smul.addr %s388, 16
        %s390 = scalar_lea.vmem [#allocation3], %s389
        %p391 = pneg %p79
        %p392 = pneg %p76
        %s393 = sand.u32 %s94, 1
        %s394 = sand.u32 %s94, 1
        %s395 = smul.addr %s394, 16
        %s396 = scalar_lea.vmem [#allocation4], %s395
        %p397 = pneg %p107
        %p398 = pneg %p104
        %p399 = scmp.lt.s32.totalorder %s20, 1
        %s400 = scalar_select %p399, %s20, 1
        %s401 = smul.addr %s400, 2
        %s402 = smul.addr %s401, 8
        %s403 = scalar_lea.vmem %s3, %s402
        %p404 = pneg %p133
        %p405 = pneg %p130
        %p406 = pneg %p154
        %p407 = pneg %p151
        %p408 = pneg %p182
        %p409 = pneg %p179
        %s410 = sand.u32 %s169, 1
        %s411 = sand.u32 %s169, 1
        %s412 = smul.addr %s411, 16
        %s413 = scalar_lea.vmem [#allocation5], %s412
        %p414 = scmp.lt.s32.totalorder %s20, 1
        %s415 = scalar_select %p414, %s20, 1
        %s416 = smul.addr %s415, 2
        %s417 = smul.addr %s416, 8
        %s418 = scalar_lea.vmem %s3, %s417
        %v419 = vld [vmem:[%s363] sm:$0xff]
        %v420 = vld [vmem:[%s363 + $0x8] sm:$0xff]
        %v421 = vld [vmem:[%s370] sm:$0xff]
        %v422 = vld [vmem:[%s370 + $0x8] sm:$0xff]
        %v423 = vld [vmem:[%s377] sm:$0xff]
        %v424 = vld [vmem:[%s377 + $0x8] sm:$0xff]
        %v425 = vld [vmem:[%s418] sm:$0xff]
        %v426 = vld [vmem:[%s418 + $0x8] sm:$0xff]
        %v427 = vld [vmem:[%s4] sm:$0xff]
        %v428 = vld [vmem:[%s4 + $0x8] sm:$0xff]
        %430 = vset.pattern.permute.xlu0 2
        %431 = vperm.xlu0 %430, %v425
        %v432 = vpop.permute.xlu0 %431
        %435 = vset.pattern.permute.xlu0 2
        %436 = vperm.xlu0 %435, %v426
        %v437 = vpop.permute.xlu0 %436
        %v439 = vmul.f32 %v421, %v432
        %v440 = vmul.f32 %v422, %v437
        %v441 = vadd.f32 %v439, %v423
        %v442 = vadd.f32 %v440, %v424
        %444 = vset.pattern.permute.xlu0 0
        %445 = vperm.xlu0 %444, %v427
        %v446 = vpop.permute.xlu0 %445
        %449 = vset.pattern.permute.xlu0 0
        %450 = vperm.xlu0 %449, %v428
        %v451 = vpop.permute.xlu0 %450
        %v453 = vmul.f32 %v441, %v446
        %v454 = vmul.f32 %v442, %v451
        %455 = vset.pattern.permute.xlu0 1
        %456 = vperm.xlu0 %455, %v427
        %v457 = vpop.permute.xlu0 %456
        %459 = vset.pattern.permute.xlu0 1
        %460 = vperm.xlu0 %459, %v428
        %v461 = vpop.permute.xlu0 %460
        %v463 = vadd.f32 %v453, %v457
        %v464 = vadd.f32 %v454, %v461
        %v465 = vmax.f32 %v463, 0.0
        %v466 = vmax.f32 %v464, 0.0
        %467 = vset.pattern.permute.xlu0 0
        %468 = vperm.xlu0 %467, %v425
        %v469 = vpop.permute.xlu0 %468
        %471 = vset.pattern.permute.xlu0 0
        %472 = vperm.xlu0 %471, %v426
        %v473 = vpop.permute.xlu0 %472
        %v475 = vmul.f32 %v419, %v469
        %v476 = vmul.f32 %v420, %v473
        %477 = vset.pattern.permute.xlu0 1
        %478 = vperm.xlu0 %477, %v425
        %v479 = vpop.permute.xlu0 %478
        %481 = vset.pattern.permute.xlu0 1
        %482 = vperm.xlu0 %481, %v426
        %v483 = vpop.permute.xlu0 %482
        %v485 = vadd.f32 %v475, %v479
        %v486 = vadd.f32 %v476, %v483
        %v487 = vxor.u32 %v485, 2147483648
        %v488 = vxor.u32 %v486, 2147483648
        %v489 = vmul.f32 %v487, 1.442695
        %v490 = vpow.pop %v489
        %v491 = vmul.f32 %v488, 1.442695
        %v492 = vpow.pop %v491
        %v493 = vadd.f32 %v490, 1.0
        %v494 = vadd.f32 %v492, 1.0
        %v495 = vrcp.pop %v493
        %v496 = vmul.f32 1.0, %v495
        %v497 = vrcp.pop %v494
        %v498 = vmul.f32 1.0, %v497
        %499 = vset.pattern.permute.xlu0 4
        %500 = vperm.xlu0 %499, %v427
        %v501 = vpop.permute.xlu0 %500
        %503 = vset.pattern.permute.xlu0 4
        %504 = vperm.xlu0 %503, %v428
        %v505 = vpop.permute.xlu0 %504
        %vm507 = vcmp.gt.f32.partialorder %v496, %v501
        %vm508 = vcmp.gt.f32.partialorder %v498, %v505
        %v509 = vmul.f32 %v496, %v419
        %v510 = vmul.f32 %v498, %v420
        %v511 = vsel %vm507, %v419, %v509
        %v512 = vsel %vm508, %v420, %v510
        %v513 = vsel %vm507, 0.0, %v509
        %v514 = vsel %vm508, 0.0, %v510
        %515 = vset.pattern.permute.xlu0 2
        %516 = vperm.xlu0 %515, %v427
        %v517 = vpop.permute.xlu0 %516
        %519 = vset.pattern.permute.xlu0 2
        %520 = vperm.xlu0 %519, %v428
        %v521 = vpop.permute.xlu0 %520
        %v523 = vmul.f32 %v517, %v511
        %v524 = vmul.f32 %v521, %v512
        %525 = vset.pattern.permute.xlu0 3
        %526 = vperm.xlu0 %525, %v427
        %v527 = vpop.permute.xlu0 %526
        %529 = vset.pattern.permute.xlu0 3
        %530 = vperm.xlu0 %529, %v428
        %v531 = vpop.permute.xlu0 %530
        %v533 = vmul.f32 %v527, %v514
        %v534 = vmul.f32 %v531, %v513
        %v535 = vadd.f32 %v523, %v533
        %v536 = vadd.f32 %v524, %v534
        %537 = vset.pattern.permute.xlu0 3
        %538 = vperm.xlu0 %537, %v425
        %v539 = vpop.permute.xlu0 %538
        %541 = vset.pattern.permute.xlu0 3
        %542 = vperm.xlu0 %541, %v426
        %v543 = vpop.permute.xlu0 %542
        %v545 = vmul.f32 %v539, %v535
        %v546 = vmul.f32 %v543, %v536
        %547 = vset.pattern.permute.xlu0 4
        %548 = vperm.xlu0 %547, %v425
        %v549 = vpop.permute.xlu0 %548
        %551 = vset.pattern.permute.xlu0 4
        %552 = vperm.xlu0 %551, %v426
        %v553 = vpop.permute.xlu0 %552
        %v555 = vmul.f32 %v549, %v465
        %v556 = vmul.f32 %v553, %v466
        %v557 = vadd.f32 %v545, %v555
        %v558 = vadd.f32 %v546, %v556
        %559 = vst [vmem:[%s413] sm:$0xff] %v557
        %560 = vst [vmem:[%s413 + $0x8] sm:$0xff] %v558
        %s561 = sand.u32 %s169, 1
        %s562 = sand.u32 %s169, 1
        %s563 = smul.addr %s562, 16
        %s564 = scalar_lea.vmem [#allocation5], %s563
        // Predicated region
        $region155: #{csrd_forward.5} parent=141 // pred_check
          %p565 = pneg %p179
        $region156: #{csrd_forward.5} parent=141 // pred_check_branch
          %567 = sbr.rel (%p565) target = $region158
        $region157: #{csrd_forward.5} parent=141 // pred_region
          %s568 = smul.addr %s20, 4
          %s569 = sadd.s32 %s21, %s568
          %s570 = smul.addr %s569, 8
          %s571 = scalar_lea.vmem %s5, %s570
          // Predicated region
          $region159: #{csrd_forward.5} parent=157 // pred_check
            _
          $region160: #{csrd_forward.5} parent=157 // pred_check_branch
            %573 = sbr.rel (0) target = $region162
          $region161: #{csrd_forward.5} parent=157 // pred_region
            // Predicated region
            $region163: #{csrd_forward.5} parent=161 // pred_check
              _
            $region164: #{csrd_forward.5} parent=161 // pred_check_branch
              %575 = sbr.rel (0) target = $region166
            $region165: #{csrd_forward.5} parent=161 // pred_region
              // Predicated region
              $region178: #{csrd_forward.5} parent=165 // pred_check
                _
              $region179: #{csrd_forward.5} parent=165 // pred_check_branch
                %592 = sbr.rel (0) target = $region181
              $region180: #{csrd_forward.5} parent=165 // pred_region
                loop: start=0, step=1, limit=1
                $region182: #{csrd_forward.5} parent=180 // loop_pre_header
                  _
                $region183: #{csrd_forward.5} parent=180 // loop_header
                  %s594 = sphi 0, %s598
                  %p595 = scmp.ge.s32.totalorder %s594, 1
                  %s599 = sphi %s564, %s564
                  %s600 = sphi %s571, %s571
                $region184: #{csrd_forward.5} parent=180 // loop_header_branch
                  %597 = sbr.rel (%p595) target = $region188
                $region185: #{csrd_forward.5} parent=180 // loop_body
                  %v601 = vld [vmem:[%s599] sm:$0xff]
                  %602 = vst [vmem:[%s600] sm:$0xff] %v601
                  %v603 = vld [vmem:[%s599 + $0x8] sm:$0xff]
                  %604 = vst [vmem:[%s600 + $0x10] sm:$0xff] %v603
                $region186: #{csrd_forward.5} parent=180 // loop_footer
                  %s598 = sadd.s32 1, %s594
                $region187: #{csrd_forward.5} parent=180 // loop_footer_branch
                  %593 = sbr.rel target = $region183
                $region188: #{csrd_forward.5} parent=180 // loop_exit
                  _
              $region181: #{csrd_forward.5} parent=165 // pred_fallthru
                _
              // Predicated region
              $region189: #{csrd_forward.5} parent=165 // pred_check
                _
              $region190: #{csrd_forward.5} parent=165 // pred_check_branch
                %606 = sbr.rel target = $region192
              $region191: #{csrd_forward.5} parent=165 // pred_region
                _
              $region192: #{csrd_forward.5} parent=165 // pred_fallthru
                _
            $region166: #{csrd_forward.5} parent=161 // pred_fallthru
              _
            // Predicated region
            $region167: #{csrd_forward.5} parent=161 // pred_check
              _
            $region168: #{csrd_forward.5} parent=161 // pred_check_branch
              %577 = sbr.rel target = $region170
            $region169: #{csrd_forward.5} parent=161 // pred_region
              loop: start=0, step=1, limit=1
              $region171: #{csrd_forward.5} parent=169 // loop_pre_header
                _
              $region172: #{csrd_forward.5} parent=169 // loop_header
                %s580 = sphi 0, %s584
                %p581 = scmp.ge.s32.totalorder %s580, 1
                %s585 = sphi %s564, %s564
                %s586 = sphi %s571, %s571
              $region173: #{csrd_forward.5} parent=169 // loop_header_branch
                %583 = sbr.rel (%p581) target = $region177
              $region174: #{csrd_forward.5} parent=169 // loop_body
                %v587 = vld [vmem:[%s585] sm:$0xff]
                %588 = vst [vmem:[%s586] sm:$0xff] %v587
                %v589 = vld [vmem:[%s585 + $0x8] sm:$0xff]
                %590 = vst [vmem:[%s586 + $0x10] sm:$0xff] %v589
              $region175: #{csrd_forward.5} parent=169 // loop_footer
                %s584 = sadd.s32 1, %s580
              $region176: #{csrd_forward.5} parent=169 // loop_footer_branch
                %579 = sbr.rel target = $region172
              $region177: #{csrd_forward.5} parent=169 // loop_exit
                _
            $region170: #{csrd_forward.5} parent=161 // pred_fallthru
              _
          $region162: #{csrd_forward.5} parent=157 // pred_fallthru
            _
          %607 = vnop
        $region158: #{csrd_forward.5} parent=141 // pred_fallthru
          _
      $region142: #{csrd_forward.5} parent=5 // pred_fallthru
        _
      %p608 = scmp.le.s32.totalorder 2, %s11
      // Predicated region
      $region193: #{csrd_forward.5} parent=5 // pred_check
        %p609 = pneg %p608
      $region194: #{csrd_forward.5} parent=5 // pred_check_branch
        %611 = sbr.rel (%p609) target = $region196
      $region195: #{csrd_forward.5} parent=5 // pred_region
        %s612 = ssub.s32 %s11, 2
        // Predicated region
        $region197: #{csrd_forward.5} parent=195 // pred_check
          %p613 = pneg %p185
        $region198: #{csrd_forward.5} parent=195 // pred_check_branch
          %615 = sbr.rel (%p613) target = $region200
        $region199: #{csrd_forward.5} parent=195 // pred_region
          %s616 = sand.u32 %s170, 1
          %s617 = sand.u32 %s170, 1
          %s618 = smul.addr %s617, 16
          %s619 = scalar_lea.vmem [#allocation5], %s618
        $region200: #{csrd_forward.5} parent=195 // pred_fallthru
          _
      $region196: #{csrd_forward.5} parent=5 // pred_fallthru
        _
    $region6: #{csrd_forward.5} parent=1 // loop_footer
      %s15 = sadd.s32 1, %s11
    $region7: #{csrd_forward.5} parent=1 // loop_footer_branch
      %10 = sbr.rel target = $region3
    $region8: #{csrd_forward.5} parent=1 // loop_exit
      _

// kernel: csrd_forward.4
$region0: #{csrd_forward.4}
  #allocation0 [shape = 'u32[]', space=smem, size = 0x4, offset = 0x4, fixed_abs, tag = 'smem constant byte address 0x4 - core index']
  #allocation1 [shape = 'u32[144,128]{1,0:T(1,128)}', space=vmem, size = 0x12000, scoped, tag = 'internal scratch']
  %s0 = inlined_call_operand.vmem [shape: f32[2,4,324], index: 0, kind: input, shape index: {}]
  %s1 = inlined_call_operand.vmem [shape: f32[2,4,256], index: 1, kind: input, shape index: {}]
  %s2 = inlined_call_operand.vmem [shape: f32[2,16,256], index: 2, kind: input, shape index: {}]
  %s3 = inlined_call_operand.vmem [shape: f32[5,256], index: 3, kind: input, shape index: {}]
  %s4 = inlined_call_operand.vmem [shape: f32[25,16,4], index: 4, kind: input, shape index: {}]
  %s5 = inlined_call_operand.vmem [shape: f32[16,4], index: 5, kind: input, shape index: {}]
  %s6 = inlined_call_operand.vmem [shape: f32[16,4], index: 6, kind: input, shape index: {}]
  %s7 = inlined_call_operand.vmem [shape: f32[2,16,256], index: 7, kind: output, shape index: {0}]
  %s8 = inlined_call_operand.vmem [shape: f32[2,16,5], index: 8, kind: output, shape index: {1}]
  %9 = xla_tuple %s7, %s8
  %s10 = sld [smem:[#allocation0]]
  $region69: #{csrd_forward.4} parent=0
    _
  %s12 = ssub.s32 1, %s10
  %s13 = scalar_select 0, %s12, %s10
  loop: start=0, step=1, limit=4
  $region2: #{csrd_forward.4} parent=0 // loop_pre_header
    _
  $region3: #{csrd_forward.4} parent=0 // loop_header
    %s15 = sphi 0, %s19
    %p16 = scmp.ge.s32.totalorder %s15, 4
    %s25 = sphi 0, %s27
    %s28 = sphi 0, %s25
    %s29 = sphi 0, %s28
    %s45 = sphi 0, %s29
    %s51 = sphi 0, %s53
    %s54 = sphi 0, %s51
    %s55 = sphi 0, %s54
    %s71 = sphi 0, %s55
    %s77 = sphi 0, %s79
    %s80 = sphi 0, %s77
    %s81 = sphi 0, %s80
    %s97 = sphi 0, %s81
    %s101 = sphi 0, %s101
    %s103 = sphi 0, %s101
    %s104 = sphi 0, %s103
    %s118 = sphi 0, %s104
    %s122 = sphi 0, %s122
    %s124 = sphi 0, %s122
    %s125 = sphi 0, %s124
    %s139 = sphi 0, %s125
    %s143 = sphi 0, %s143
    %s145 = sphi 0, %s143
    %s146 = sphi 0, %s145
    %s160 = sphi 0, %s146
    %s164 = sphi 0, %s164
    %s166 = sphi 0, %s164
    %s167 = sphi 0, %s166
    %s181 = sphi 0, %s167
    %s187 = sphi 0, %s189
    %s190 = sphi 0, %s187
    %s191 = sphi 0, %s190
    %s207 = sphi 0, %s191
    %s213 = sphi 0, %s215
    %s216 = sphi 0, %s213
    %s217 = sphi 0, %s216
    %s233 = sphi 0, %s217
  $region4: #{csrd_forward.4} parent=0 // loop_header_branch
    %18 = sbr.rel (%p16) target = $region8
  $region5: #{csrd_forward.4} parent=0 // loop_body
    %s20 = ssub.s32 %s15, 1
    %s21 = ssub.s32 %s15, 2
    %s22 = sadd.s32 %s15, 1
    %s23 = ssub.s32 %s15, %s22
    %p24 = scmp.eq.s32.totalorder %s23, 0
    %s26 = sadd.s32 %s25, 1
    %s27 = scalar_select %p24, %s25, %s26
    %p30 = pneg %p24
    %p31 = scmp.eq.s32.totalorder %s15, 1
    %p32 = por %p30, %p31
    %p33 = scmp.ne.s32.totalorder %s25, %s28
    %p34 = scmp.eq.s32.totalorder %s15, 0
    %p35 = por %p33, %p34
    %p36 = scmp.ne.s32.totalorder %s25, %s28
    %p37 = scmp.eq.s32.totalorder %s20, 1
    %p38 = por %p36, %p37
    %p39 = scmp.ne.s32.totalorder %s28, %s29
    %p40 = scmp.eq.s32.totalorder %s20, 0
    %p41 = por %p39, %p40
    %p42 = scmp.ne.s32.totalorder %s28, %s29
    %p43 = scmp.eq.s32.totalorder %s21, 1
    %p44 = por %p42, %p43
    %p46 = scmp.ne.s32.totalorder %s29, %s45
    %p47 = scmp.eq.s32.totalorder %s21, 0
    %p48 = por %p46, %p47
    %s49 = ssub.s32 %s15, %s22
    %p50 = scmp.eq.s32.totalorder %s49, 0
    %s52 = sadd.s32 %s51, 1
    %s53 = scalar_select %p50, %s51, %s52
    %p56 = pneg %p50
    %p57 = scmp.eq.s32.totalorder %s15, 1
    %p58 = por %p56, %p57
    %p59 = scmp.ne.s32.totalorder %s51, %s54
    %p60 = scmp.eq.s32.totalorder %s15, 0
    %p61 = por %p59, %p60
    %p62 = scmp.ne.s32.totalorder %s51, %s54
    %p63 = scmp.eq.s32.totalorder %s20, 1
    %p64 = por %p62, %p63
    %p65 = scmp.ne.s32.totalorder %s54, %s55
    %p66 = scmp.eq.s32.totalorder %s20, 0
    %p67 = por %p65, %p66
    %p68 = scmp.ne.s32.totalorder %s54, %s55
    %p69 = scmp.eq.s32.totalorder %s21, 1
    %p70 = por %p68, %p69
    %p72 = scmp.ne.s32.totalorder %s55, %s71
    %p73 = scmp.eq.s32.totalorder %s21, 0
    %p74 = por %p72, %p73
    %s75 = ssub.s32 %s15, %s22
    %p76 = scmp.eq.s32.totalorder %s75, 0
    %s78 = sadd.s32 %s77, 1
    %s79 = scalar_select %p76, %s77, %s78
    %p82 = pneg %p76
    %p83 = scmp.eq.s32.totalorder %s15, 1
    %p84 = por %p82, %p83
    %p85 = scmp.ne.s32.totalorder %s77, %s80
    %p86 = scmp.eq.s32.totalorder %s15, 0
    %p87 = por %p85, %p86
    %p88 = scmp.ne.s32.totalorder %s77, %s80
    %p89 = scmp.eq.s32.totalorder %s20, 1
    %p90 = por %p88, %p89
    %p91 = scmp.ne.s32.totalorder %s80, %s81
    %p92 = scmp.eq.s32.totalorder %s20, 0
    %p93 = por %p91, %p92
    %p94 = scmp.ne.s32.totalorder %s80, %s81
    %p95 = scmp.eq.s32.totalorder %s21, 1
    %p96 = por %p94, %p95
    %p98 = scmp.ne.s32.totalorder %s81, %s97
    %p99 = scmp.eq.s32.totalorder %s21, 0
    %p100 = por %p98, %p99
    %s102 = sadd.s32 %s101, 1
    %p105 = scmp.eq.s32.totalorder %s15, 1
    %p106 = scmp.ne.s32.totalorder %s101, %s103
    %p107 = scmp.eq.s32.totalorder %s15, 0
    %p108 = por %p106, %p107
    %p109 = scmp.ne.s32.totalorder %s101, %s103
    %p110 = scmp.eq.s32.totalorder %s20, 1
    %p111 = por %p109, %p110
    %p112 = scmp.ne.s32.totalorder %s103, %s104
    %p113 = scmp.eq.s32.totalorder %s20, 0
    %p114 = por %p112, %p113
    %p115 = scmp.ne.s32.totalorder %s103, %s104
    %p116 = scmp.eq.s32.totalorder %s21, 1
    %p117 = por %p115, %p116
    %p119 = scmp.ne.s32.totalorder %s104, %s118
    %p120 = scmp.eq.s32.totalorder %s21, 0
    %p121 = por %p119, %p120
    %s123 = sadd.s32 %s122, 1
    %p126 = scmp.eq.s32.totalorder %s15, 1
    %p127 = scmp.ne.s32.totalorder %s122, %s124
    %p128 = scmp.eq.s32.totalorder %s15, 0
    %p129 = por %p127, %p128
    %p130 = scmp.ne.s32.totalorder %s122, %s124
    %p131 = scmp.eq.s32.totalorder %s20, 1
    %p132 = por %p130, %p131
    %p133 = scmp.ne.s32.totalorder %s124, %s125
    %p134 = scmp.eq.s32.totalorder %s20, 0
    %p135 = por %p133, %p134
    %p136 = scmp.ne.s32.totalorder %s124, %s125
    %p137 = scmp.eq.s32.totalorder %s21, 1
    %p138 = por %p136, %p137
    %p140 = scmp.ne.s32.totalorder %s125, %s139
    %p141 = scmp.eq.s32.totalorder %s21, 0
    %p142 = por %p140, %p141
    %s144 = sadd.s32 %s143, 1
    %p147 = scmp.eq.s32.totalorder %s15, 1
    %p148 = scmp.ne.s32.totalorder %s143, %s145
    %p149 = scmp.eq.s32.totalorder %s15, 0
    %p150 = por %p148, %p149
    %p151 = scmp.ne.s32.totalorder %s143, %s145
    %p152 = scmp.eq.s32.totalorder %s20, 1
    %p153 = por %p151, %p152
    %p154 = scmp.ne.s32.totalorder %s145, %s146
    %p155 = scmp.eq.s32.totalorder %s20, 0
    %p156 = por %p154, %p155
    %p157 = scmp.ne.s32.totalorder %s145, %s146
    %p158 = scmp.eq.s32.totalorder %s21, 1
    %p159 = por %p157, %p158
    %p161 = scmp.ne.s32.totalorder %s146, %s160
    %p162 = scmp.eq.s32.totalorder %s21, 0
    %p163 = por %p161, %p162
    %s165 = sadd.s32 %s164, 1
    %p168 = scmp.eq.s32.totalorder %s15, 1
    %p169 = scmp.ne.s32.totalorder %s164, %s166
    %p170 = scmp.eq.s32.totalorder %s15, 0
    %p171 = por %p169, %p170
    %p172 = scmp.ne.s32.totalorder %s164, %s166
    %p173 = scmp.eq.s32.totalorder %s20, 1
    %p174 = por %p172, %p173
    %p175 = scmp.ne.s32.totalorder %s166, %s167
    %p176 = scmp.eq.s32.totalorder %s20, 0
    %p177 = por %p175, %p176
    %p178 = scmp.ne.s32.totalorder %s166, %s167
    %p179 = scmp.eq.s32.totalorder %s21, 1
    %p180 = por %p178, %p179
    %p182 = scmp.ne.s32.totalorder %s167, %s181
    %p183 = scmp.eq.s32.totalorder %s21, 0
    %p184 = por %p182, %p183
    %s185 = ssub.s32 %s15, %s22
    %p186 = scmp.eq.s32.totalorder %s185, 0
    %s188 = sadd.s32 %s187, 1
    %s189 = scalar_select %p186, %s187, %s188
    %p192 = pneg %p186
    %p193 = scmp.eq.s32.totalorder %s15, 1
    %p194 = por %p192, %p193
    %p195 = scmp.ne.s32.totalorder %s187, %s190
    %p196 = scmp.eq.s32.totalorder %s15, 0
    %p197 = por %p195, %p196
    %p198 = scmp.ne.s32.totalorder %s187, %s190
    %p199 = scmp.eq.s32.totalorder %s20, 1
    %p200 = por %p198, %p199
    %p201 = scmp.ne.s32.totalorder %s190, %s191
    %p202 = scmp.eq.s32.totalorder %s20, 0
    %p203 = por %p201, %p202
    %p204 = scmp.ne.s32.totalorder %s190, %s191
    %p205 = scmp.eq.s32.totalorder %s21, 1
    %p206 = por %p204, %p205
    %p208 = scmp.ne.s32.totalorder %s191, %s207
    %p209 = scmp.eq.s32.totalorder %s21, 0
    %p210 = por %p208, %p209
    %s211 = ssub.s32 %s15, %s22
    %p212 = scmp.eq.s32.totalorder %s211, 0
    %s214 = sadd.s32 %s213, 1
    %s215 = scalar_select %p212, %s213, %s214
    %p218 = pneg %p212
    %p219 = scmp.eq.s32.totalorder %s15, 1
    %p220 = por %p218, %p219
    %p221 = scmp.ne.s32.totalorder %s213, %s216
    %p222 = scmp.eq.s32.totalorder %s15, 0
    %p223 = por %p221, %p222
    %p224 = scmp.ne.s32.totalorder %s213, %s216
    %p225 = scmp.eq.s32.totalorder %s20, 1
    %p226 = por %p224, %p225
    %p227 = scmp.ne.s32.totalorder %s216, %s217
    %p228 = scmp.eq.s32.totalorder %s20, 0
    %p229 = por %p227, %p228
    %p230 = scmp.ne.s32.totalorder %s216, %s217
    %p231 = scmp.eq.s32.totalorder %s21, 1
    %p232 = por %p230, %p231
    %p234 = scmp.ne.s32.totalorder %s217, %s233
    %p235 = scmp.eq.s32.totalorder %s21, 0
    %p236 = por %p234, %p235
    %p237 = scmp.le.s32.totalorder 1, %s15
    %p238 = scmp.lt.s32.totalorder %s15, 3
    %p239 = pnand %p237, %p238
    %p240 = pneg %p239
    // Predicated region
    $region9: #{csrd_forward.4} parent=5 // pred_check
      _
    $region10: #{csrd_forward.4} parent=5 // pred_check_branch
      %242 = sbr.rel (%p239) target = $region12
    $region11: #{csrd_forward.4} parent=5 // pred_region
      %s243 = ssub.s32 %s15, 1
      // Predicated region
      $region13: #{csrd_forward.4} parent=11 // pred_check
        %p244 = pneg %p114
      $region14: #{csrd_forward.4} parent=11 // pred_check_branch
        %246 = sbr.rel (%p244) target = $region16
      $region15: #{csrd_forward.4} parent=11 // pred_region
        _
      $region16: #{csrd_forward.4} parent=11 // pred_fallthru
        _
      // Predicated region
      $region17: #{csrd_forward.4} parent=11 // pred_check
        %p247 = pneg %p135
      $region18: #{csrd_forward.4} parent=11 // pred_check_branch
        %249 = sbr.rel (%p247) target = $region20
      $region19: #{csrd_forward.4} parent=11 // pred_region
        _
      $region20: #{csrd_forward.4} parent=11 // pred_fallthru
        _
      // Predicated region
      $region21: #{csrd_forward.4} parent=11 // pred_check
        %p250 = pneg %p156
      $region22: #{csrd_forward.4} parent=11 // pred_check_branch
        %252 = sbr.rel (%p250) target = $region24
      $region23: #{csrd_forward.4} parent=11 // pred_region
        _
      $region24: #{csrd_forward.4} parent=11 // pred_fallthru
        _
      // Predicated region
      $region25: #{csrd_forward.4} parent=11 // pred_check
        %p253 = pneg %p177
      $region26: #{csrd_forward.4} parent=11 // pred_check_branch
        %255 = sbr.rel (%p253) target = $region28
      $region27: #{csrd_forward.4} parent=11 // pred_region
        _
      $region28: #{csrd_forward.4} parent=11 // pred_fallthru
        _
    $region12: #{csrd_forward.4} parent=5 // pred_fallthru
      _
    %p256 = scmp.lt.s32.totalorder %s15, 2
    // Predicated region
    $region29: #{csrd_forward.4} parent=5 // pred_check
      %p257 = pneg %p256
    $region30: #{csrd_forward.4} parent=5 // pred_check_branch
      %259 = sbr.rel (%p257) target = $region32
    $region31: #{csrd_forward.4} parent=5 // pred_region
      // Predicated region
      $region33: #{csrd_forward.4} parent=31 // pred_check
        %p260 = pneg %p35
      $region34: #{csrd_forward.4} parent=31 // pred_check_branch
        %262 = sbr.rel (%p260) target = $region36
      $region35: #{csrd_forward.4} parent=31 // pred_region
        %p263 = scmp.lt.s32.totalorder %s15, 1
        %s264 = scalar_select %p263, %s15, 1
        %s265 = smul.addr %s264, 3
        %s266 = smul.addr %s265, 4
        %s267 = scalar_lea.vmem %s0, %s266
      $region36: #{csrd_forward.4} parent=31 // pred_fallthru
        _
      // Predicated region
      $region37: #{csrd_forward.4} parent=31 // pred_check
        %p268 = pneg %p61
      $region38: #{csrd_forward.4} parent=31 // pred_check_branch
        %270 = sbr.rel (%p268) target = $region40
      $region39: #{csrd_forward.4} parent=31 // pred_region
        %p271 = scmp.lt.s32.totalorder %s15, 1
        %s272 = scalar_select %p271, %s15, 1
        %s273 = smul.addr %s272, 2
        %s274 = smul.addr %s273, 4
        %s275 = scalar_lea.vmem %s1, %s274
      $region40: #{csrd_forward.4} parent=31 // pred_fallthru
        _
      // Predicated region
      $region41: #{csrd_forward.4} parent=31 // pred_check
        %p276 = pneg %p87
      $region42: #{csrd_forward.4} parent=31 // pred_check_branch
        %278 = sbr.rel (%p276) target = $region44
      $region43: #{csrd_forward.4} parent=31 // pred_region
        %p279 = scmp.lt.s32.totalorder %s15, 1
        %s280 = scalar_select %p279, %s15, 1
        %s281 = smul.addr %s280, 4
        %s282 = smul.addr %s281, 8
        %s283 = scalar_lea.vmem %s2, %s282
      $region44: #{csrd_forward.4} parent=31 // pred_fallthru
        _
    $region32: #{csrd_forward.4} parent=5 // pred_fallthru
      _
    %p284 = scmp.le.s32.totalorder 1, %s15
    %p285 = scmp.lt.s32.totalorder %s15, 3
    %p286 = pnand %p284, %p285
    %p287 = pneg %p286
    // Predicated region
    $region45: #{csrd_forward.4} parent=5 // pred_check
      _
    $region46: #{csrd_forward.4} parent=5 // pred_check_branch
      %289 = sbr.rel (%p286) target = $region48
    $region47: #{csrd_forward.4} parent=5 // pred_region
      %s290 = ssub.s32 %s15, 1
      %p291 = scmp.lt.s32.totalorder %s20, 1
      %s292 = scalar_select %p291, %s20, 1
      %s293 = smul.addr %s292, 3
      %s294 = smul.addr %s293, 4
      %s295 = scalar_lea.vmem %s0, %s294
      %p296 = pneg %p41
      %p297 = pneg %p38
      %p298 = scmp.lt.s32.totalorder %s20, 1
      %s299 = scalar_select %p298, %s20, 1
      %s300 = smul.addr %s299, 2
      %s301 = smul.addr %s300, 4
      %s302 = scalar_lea.vmem %s1, %s301
      %p303 = pneg %p67
      %p304 = pneg %p64
      %p305 = scmp.lt.s32.totalorder %s20, 1
      %s306 = scalar_select %p305, %s20, 1
      %s307 = smul.addr %s306, 4
      %s308 = smul.addr %s307, 8
      %s309 = scalar_lea.vmem %s2, %s308
      %p310 = pneg %p93
      %p311 = pneg %p90
      %p312 = pneg %p114
      %p313 = pneg %p111
      %p314 = pneg %p135
      %p315 = pneg %p132
      %p316 = pneg %p156
      %p317 = pneg %p153
      %p318 = pneg %p177
      %p319 = pneg %p174
      %p320 = pneg %p203
      %p321 = pneg %p200
      %p322 = scmp.lt.s32.totalorder %s20, 1
      %s323 = scalar_select %p322, %s20, 1
      %s324 = smul.addr %s323, 4
      %s325 = smul.addr %s324, 8
      %s326 = scalar_lea.vmem %s7, %s325
      %p327 = pneg %p229
      %p328 = pneg %p226
      %p329 = scmp.lt.s32.totalorder %s20, 1
      %s330 = scalar_select %p329, %s20, 1
      %s331 = smul.addr %s330, 2
      %s332 = smul.addr %s331, 8
      %s333 = scalar_lea.vmem %s8, %s332
      %p334 = scmp.lt.s32.totalorder %s20, 1
      %s335 = scalar_select %p334, %s20, 1
      %s336 = smul.addr %s335, 3
      %s337 = smul.addr %s336, 4
      %s338 = scalar_lea.vmem %s0, %s337
      %p339 = scmp.lt.s32.totalorder %s20, 1
      %s340 = scalar_select %p339, %s20, 1
      %s341 = smul.addr %s340, 2
      %s342 = smul.addr %s341, 4
      %s343 = scalar_lea.vmem %s1, %s342
      %p344 = scmp.lt.s32.totalorder %s20, 1
      %s345 = scalar_select %p344, %s20, 1
      %s346 = smul.addr %s345, 4
      %s347 = smul.addr %s346, 8
      %s348 = scalar_lea.vmem %s2, %s347
      %p349 = scmp.lt.s32.totalorder %s20, 1
      %s350 = scalar_select %p349, %s20, 1
      %s351 = smul.addr %s350, 4
      %s352 = smul.addr %s351, 8
      %s353 = scalar_lea.vmem %s7, %s352
      %p354 = scmp.lt.s32.totalorder %s20, 1
      %s355 = scalar_select %p354, %s20, 1
      %s356 = smul.addr %s355, 2
      %s357 = smul.addr %s356, 8
      %s358 = scalar_lea.vmem %s8, %s357
      %v359 = vld [vmem:[%s6] sm:$0xf]
      %v360 = vld [vmem:[%s343] sm:$0xff]
      %362 = vset.pattern.permute.xlu0 1
      %363 = vperm.xlu0 %362, %v359
      %v364 = vpop.permute.xlu0 %363
      %v366 = vunpack.c.l.s4 839922192
      %v367 = vunpack.c.0.s8 %v366
      %v368 = vlaneseq
      %v369 = vshrl.u32 %v368, 7
      %v370 = vsub.s32 %v367, %v369
      %v371 = vrot.slane %v364, %v370
      %v373 = vmul.f32 %v360, %v371
      %374 = vset.pattern.permute.xlu0 2
      %375 = vperm.xlu0 %374, %v359
      %v376 = vpop.permute.xlu0 %375
      %v378 = vunpack.c.l.s4 839922192
      %v379 = vunpack.c.0.s8 %v378
      %v380 = vlaneseq
      %v381 = vshrl.u32 %v380, 7
      %v382 = vsub.s32 %v379, %v381
      %v383 = vrot.slane %v376, %v382
      %v385 = vadd.f32 %v373, %v383
      %v386 = vmax.f32 %v385, 0.0
      %v387 = vld [vmem:[%s5] sm:$0xff]
      %v388 = vld [vmem:[%s5 + $0x8] sm:$0xff]
      %v389 = vld [vmem:[%s6] sm:$0xff]
      %v390 = vld [vmem:[%s6 + $0x8] sm:$0xff]
      %392 = vset.pattern.permute.xlu0 0
      %393 = vperm.xlu0 %392, %v389
      %v394 = vpop.permute.xlu0 %393
      %397 = vset.pattern.permute.xlu0 0
      %398 = vperm.xlu0 %397, %v390
      %v399 = vpop.permute.xlu0 %398
      %v402 = vcombine.high %v386, %v386
      %vm403 = vcmask 31744
      %v405 = vsel %vm403, %v387, 0
      %v408 = vsel %vm403, %v388, 0
      %vm410 = vcmask 1043456
      %v411 = vsel %vm410, %v386, 0
      %v413 = vsel %vm410, %v402, 0
      %415 = vmatprep.subr.mxu0 %v413
      %416 = vmatpush1.msra.mxu0 %v411
      %417 = vmatprep.subr.mxu0 0.0
      %418 = vmatpush1.msra.mxu0 0.0
      %419 = vmatprep.subr.mxu0 0.0
      %420 = vmatpush1.msra.mxu0 0.0
      %421 = vmatprep.subr.mxu0 0.0
      %422 = vmatpush1.msra.mxu0 0.0
      %423 = vmatprep.subr.mxu0 0.0
      %424 = vmatpush1.msra.mxu0 0.0
      %425 = vmatprep.subr.mxu0 0.0
      %426 = vmatpush1.msra.mxu0 0.0
      %427 = vmatprep.subr.mxu0 0.0
      %428 = vmatpush1.msra.mxu0 0.0
      %429 = vmatprep.subr.mxu0 0.0
      %430 = vmatpush1.msra.mxu0 0.0
      %431 = vmatprep.subr.mxu0 0.0
      %432 = vmatpush1.msra.mxu0 0.0
      %433 = vmatprep.subr.mxu0 0.0
      %434 = vmatpush1.msra.mxu0 0.0
      %435 = vmatprep.subr.mxu0 0.0
      %436 = vmatpush1.msra.mxu0 0.0
      %437 = vmatprep.subr.mxu0 0.0
      %438 = vmatpush1.msra.mxu0 0.0
      %439 = vmatprep.subr.mxu0 0.0
      %440 = vmatpush1.msra.mxu0 0.0
      %441 = vmatprep.subr.mxu0 0.0
      %442 = vmatpush1.msra.mxu0 0.0
      %443 = vmatprep.subr.mxu0 0.0
      %444 = vmatpush1.msra.mxu0 0.0
      %445 = vmatprep.subr.mxu0 0.0
      %446 = vmatpush1.msra.mxu0 0.0
      %447 = vmatprep.subr.mxu0 0.0
      %448 = vmatpush1.msra.mxu0 0.0
      %449 = vmatprep.subr.mxu0 0.0
      %450 = vmatpush1.msra.mxu0 0.0
      %451 = vmatprep.subr.mxu0 0.0
      %452 = vmatpush1.msra.mxu0 0.0
      %453 = vmatprep.subr.mxu0 0.0
      %454 = vmatpush1.msra.mxu0 0.0
      %455 = vmatprep.subr.mxu0 0.0
      %456 = vmatpush1.msra.mxu0 0.0
      %457 = vmatprep.subr.mxu0 0.0
      %458 = vmatpush1.msra.mxu0 0.0
      %459 = vmatprep.subr.mxu0 0.0
      %460 = vmatpush1.msra.mxu0 0.0
      %461 = vmatprep.subr.mxu0 0.0
      %462 = vmatpush1.msra.mxu0 0.0
      %463 = vmatprep.subr.mxu0 0.0
      %464 = vmatpush1.msra.mxu0 0.0
      %465 = vmatprep.subr.mxu0 0.0
      %466 = vmatpush1.msra.mxu0 0.0
      %467 = vmatprep.subr.mxu0 0.0
      %468 = vmatpush1.msra.mxu0 0.0
      %469 = vmatprep.subr.mxu0 0.0
      %470 = vmatpush1.msra.mxu0 0.0
      %471 = vmatprep.subr.mxu0 0.0
      %472 = vmatpush1.msra.mxu0 0.0
      %473 = vmatprep.subr.mxu0 0.0
      %474 = vmatpush1.msra.mxu0 0.0
      %475 = vmatprep.subr.mxu0 0.0
      %476 = vmatpush1.msra.mxu0 0.0
      %477 = vmatprep.subr.mxu0 0.0
      %478 = vmatpush1.msra.mxu0 0.0
      %479 = vmatprep.mubr.f32.mxu0 0.0
      %480 = vmatmul.mubr.f32.gmra.mrb[0].mxu0 %v405
      %v481 = vpop.f32.mrb[0].mxu0
      %v482 = vadd.f32 %v394, %v481
      %v483 = vpop.f32.mrb[0].mxu0
      %v484 = vadd.f32 %v394, %v483
      %485 = vmatprep.mubr.f32.mxu0 0.0
      %486 = vmatmul.mubr.f32.gmra.mrb[0].mxu0 %v408
      %v487 = vpop.f32.mrb[0].mxu0
      %v488 = vadd.f32 %v399, %v487
      %v489 = vpop.f32.mrb[0].mxu0
      %v490 = vadd.f32 %v399, %v489
      %491 = vdwg.mxu0
      %v492 = vld [vmem:[%s338] sm:$0xff]
      %v493 = vld [vmem:[%s3] ss:$8 sm:$0x3]
      %v495 = vlaneseq
      %v496 = vshrl.u32 %v495, 7
      %v497 = vsub.s32 0, %v496
      %v498 = vrot.slane %v493, %v497
      %v499 = vlaneseq
      %v500 = vshrl.u32 %v499, 7
      %v501 = vsub.s32 1, %v500
      %v502 = vrot.slane %v493, %v501
      %v503 = vcombine.low %v498, %v502
      %v505 = vmul.f32 %v492, %v503
      %v506 = vld [vmem:[%s4] sm:$0xff]
      %v507 = vld [vmem:[%s4 + $0x8] sm:$0xff]
      %v509 = vcombine.high %v505, %v505
      %v511 = vsel %vm403, %v506, 0
      %v514 = vsel %vm403, %v507, 0
      %v516 = vsel %vm410, %v505, 0
      %v518 = vsel %vm410, %v509, 0
      %520 = vmatprep.subr.mxu0 %v518
      %521 = vmatpush1.msra.mxu0 %v516
      %522 = vmatprep.subr.mxu0 0.0
      %523 = vmatpush1.msra.mxu0 0.0
      %524 = vmatprep.subr.mxu0 0.0
      %525 = vmatpush1.msra.mxu0 0.0
      %526 = vmatprep.subr.mxu0 0.0
      %527 = vmatpush1.msra.mxu0 0.0
      %528 = vmatprep.subr.mxu0 0.0
      %529 = vmatpush1.msra.mxu0 0.0
      %530 = vmatprep.subr.mxu0 0.0
      %531 = vmatpush1.msra.mxu0 0.0
      %532 = vmatprep.subr.mxu0 0.0
      %533 = vmatpush1.msra.mxu0 0.0
      %534 = vmatprep.subr.mxu0 0.0
      %535 = vmatpush1.msra.mxu0 0.0
      %536 = vmatprep.subr.mxu0 0.0
      %537 = vmatpush1.msra.mxu0 0.0
      %538 = vmatprep.subr.mxu0 0.0
      %539 = vmatpush1.msra.mxu0 0.0
      %540 = vmatprep.subr.mxu0 0.0
      %541 = vmatpush1.msra.mxu0 0.0
      %542 = vmatprep.subr.mxu0 0.0
      %543 = vmatpush1.msra.mxu0 0.0
      %544 = vmatprep.subr.mxu0 0.0
      %545 = vmatpush1.msra.mxu0 0.0
      %546 = vmatprep.subr.mxu0 0.0
      %547 = vmatpush1.msra.mxu0 0.0
      %548 = vmatprep.subr.mxu0 0.0
      %549 = vmatpush1.msra.mxu0 0.0
      %550 = vmatprep.subr.mxu0 0.0
      %551 = vmatpush1.msra.mxu0 0.0
      %552 = vmatprep.subr.mxu0 0.0
      %553 = vmatpush1.msra.mxu0 0.0
      %554 = vmatprep.subr.mxu0 0.0
      %555 = vmatpush1.msra.mxu0 0.0
      %556 = vmatprep.subr.mxu0 0.0
      %557 = vmatpush1.msra.mxu0 0.0
      %558 = vmatprep.subr.mxu0 0.0
      %559 = vmatpush1.msra.mxu0 0.0
      %560 = vmatprep.subr.mxu0 0.0
      %561 = vmatpush1.msra.mxu0 0.0
      %562 = vmatprep.subr.mxu0 0.0
      %563 = vmatpush1.msra.mxu0 0.0
      %564 = vmatprep.subr.mxu0 0.0
      %565 = vmatpush1.msra.mxu0 0.0
      %566 = vmatprep.subr.mxu0 0.0
      %567 = vmatpush1.msra.mxu0 0.0
      %568 = vmatprep.subr.mxu0 0.0
      %569 = vmatpush1.msra.mxu0 0.0
      %570 = vmatprep.subr.mxu0 0.0
      %571 = vmatpush1.msra.mxu0 0.0
      %572 = vmatprep.subr.mxu0 0.0
      %573 = vmatpush1.msra.mxu0 0.0
      %574 = vmatprep.subr.mxu0 0.0
      %575 = vmatpush1.msra.mxu0 0.0
      %576 = vmatprep.subr.mxu0 0.0
      %577 = vmatpush1.msra.mxu0 0.0
      %578 = vmatprep.subr.mxu0 0.0
      %579 = vmatpush1.msra.mxu0 0.0
      %580 = vmatprep.subr.mxu0 0.0
      %581 = vmatpush1.msra.mxu0 0.0
      %582 = vmatprep.subr.mxu0 0.0
      %583 = vmatpush1.msra.mxu0 0.0
      %584 = vmatprep.mubr.f32.mxu0 0.0
      %585 = vmatmul.mubr.f32.gmra.mrb[0].mxu0 %v511
      %v586 = vpop.f32.mrb[0].mxu0
      %v587 = vadd.f32 0.0, %v586
      %v588 = vpop.f32.mrb[0].mxu0
      %v589 = vadd.f32 0.0, %v588
      %590 = vmatprep.mubr.f32.mxu0 0.0
      %591 = vmatmul.mubr.f32.gmra.mrb[0].mxu0 %v514
      %v592 = vpop.f32.mrb[0].mxu0
      %v593 = vadd.f32 0.0, %v592
      %v594 = vpop.f32.mrb[0].mxu0
      %v595 = vadd.f32 0.0, %v594
      %596 = vdwg.mxu0
      %v597 = vadd.f32 %v482, %v587
      %v598 = vadd.f32 %v484, %v589
      %v599 = vadd.f32 %v488, %v593
      %v600 = vadd.f32 %v490, %v595
      %v601 = vld [vmem:[%s338] sm:$0xff]
      %v602 = vld [vmem:[%s338 + $0x8] sm:$0xf]
      %s603 = scalar_lea.vmem %s3, 1
      %v604 = vld [vmem:[%s603] ss:$8 sm:$0x3]
      %v606 = vlaneseq
      %v607 = vshrl.u32 %v606, 7
      %v608 = vsub.s32 0, %v607
      %v609 = vrot.slane %v604, %v608
      %v610 = vlaneseq
      %v611 = vshrl.u32 %v610, 7
      %v612 = vsub.s32 1, %v611
      %v613 = vrot.slane %v604, %v612
      %v614 = vcombine.low %v609, %v613
      %615 = vrot.lane.b32.xlu0 %v614, 1
      %v616 = vpop.permute.xlu0 %615
      %v617 = vrot.slane %v616, 4
      %vm618 = vcmask 7168
      %v619 = vsel %vm618, %v617, %v616
      %v622 = vmul.f32 %v601, %v619
      %v623 = vmul.f32 %v602, %v617
      %s624 = scalar_lea.vmem %s4, 16
      %v625 = vld [vmem:[%s624] sm:$0xff]
      %v626 = vld [vmem:[%s624 + $0x8] sm:$0xff]
      %v629 = vcombine.high %v622, %v622
      %630 = vrot.lane.b32.xlu0 %v622, 127
      %v631 = vpop.permute.xlu0 %630
      %632 = vrot.lane.b32.xlu0 %v629, 127
      %v633 = vpop.permute.xlu0 %632
      %634 = vrot.lane.b32.xlu0 %v623, 127
      %v635 = vpop.permute.xlu0 %634
      %vm636 = vcmask 1039360
      %v637 = vsel %vm636, %v631, %v633
      %v638 = vsel %vm636, %v633, %v635
      %v640 = vsel %vm403, %v625, 0
      %v643 = vsel %vm403, %v626, 0
      %v645 = vsel %vm410, %v637, 0
      %v647 = vsel %vm410, %v638, 0
      %649 = vmatprep.subr.mxu0 %v647
      %650 = vmatpush1.msra.mxu0 %v645
      %651 = vmatprep.subr.mxu0 0.0
      %652 = vmatpush1.msra.mxu0 0.0
      %653 = vmatprep.subr.mxu0 0.0
      %654 = vmatpush1.msra.mxu0 0.0
      %655 = vmatprep.subr.mxu0 0.0
      %656 = vmatpush1.msra.mxu0 0.0
      %657 = vmatprep.subr.mxu0 0.0
      %658 = vmatpush1.msra.mxu0 0.0
      %659 = vmatprep.subr.mxu0 0.0
      %660 = vmatpush1.msra.mxu0 0.0
      %661 = vmatprep.subr.mxu0 0.0
      %662 = vmatpush1.msra.mxu0 0.0
      %663 = vmatprep.subr.mxu0 0.0
      %664 = vmatpush1.msra.mxu0 0.0
      %665 = vmatprep.subr.mxu0 0.0
      %666 = vmatpush1.msra.mxu0 0.0
      %667 = vmatprep.subr.mxu0 0.0
      %668 = vmatpush1.msra.mxu0 0.0
      %669 = vmatprep.subr.mxu0 0.0
      %670 = vmatpush1.msra.mxu0 0.0
      %671 = vmatprep.subr.mxu0 0.0
      %672 = vmatpush1.msra.mxu0 0.0
      %673 = vmatprep.subr.mxu0 0.0
      %674 = vmatpush1.msra.mxu0 0.0
      %675 = vmatprep.subr.mxu0 0.0
      %676 = vmatpush1.msra.mxu0 0.0
      %677 = vmatprep.subr.mxu0 0.0
      %678 = vmatpush1.msra.mxu0 0.0
      %679 = vmatprep.subr.mxu0 0.0
      %680 = vmatpush1.msra.mxu0 0.0
      %681 = vmatprep.subr.mxu0 0.0
      %682 = vmatpush1.msra.mxu0 0.0
      %683 = vmatprep.subr.mxu0 0.0
      %684 = vmatpush1.msra.mxu0 0.0
      %685 = vmatprep.subr.mxu0 0.0
      %686 = vmatpush1.msra.mxu0 0.0
      %687 = vmatprep.subr.mxu0 0.0
      %688 = vmatpush1.msra.mxu0 0.0
      %689 = vmatprep.subr.mxu0 0.0
      %690 = vmatpush1.msra.mxu0 0.0
      %691 = vmatprep.subr.mxu0 0.0
      %692 = vmatpush1.msra.mxu0 0.0
      %693 = vmatprep.subr.mxu0 0.0
      %694 = vmatpush1.msra.mxu0 0.0
      %695 = vmatprep.subr.mxu0 0.0
      %696 = vmatpush1.msra.mxu0 0.0
      %697 = vmatprep.subr.mxu0 0.0
      %698 = vmatpush1.msra.mxu0 0.0
      %699 = vmatprep.subr.mxu0 0.0
      %700 = vmatpush1.msra.mxu0 0.0
      %701 = vmatprep.subr.mxu0 0.0
      %702 = vmatpush1.msra.mxu0 0.0
      %703 = vmatprep.subr.mxu0 0.0
      %704 = vmatpush1.msra.mxu0 0.0
      %705 = vmatprep.subr.mxu0 0.0
      %706 = vmatpush1.msra.mxu0 0.0
      %707 = vmatprep.subr.mxu0 0.0
      %708 = vmatpush1.msra.mxu0 0.0
      %709 = vmatprep.subr.mxu0 0.0
      %710 = vmatpush1.msra.mxu0 0.0
      %711 = vmatprep.subr.mxu0 0.0
      %712 = vmatpush1.msra.mxu0 0.0
      %713 = vmatprep.mubr.f32.mxu0 0.0
      %714 = vmatmul.mubr.f32.gmra.mrb[0].mxu0 %v640
      %v715 = vpop.f32.mrb[0].mxu0
      %v716 = vadd.f32 0.0, %v715
      %v717 = vpop.f32.mrb[0].mxu0
      %v718 = vadd.f32 0.0, %v717
      %719 = vmatprep.mubr.f32.mxu0 0.0
      %720 = vmatmul.mubr.f32.gmra.mrb[0].mxu0 %v643
      %v721 = vpop.f32.mrb[0].mxu0
      %v722 = vadd.f32 0.0, %v721
      %v723 = vpop.f32.mrb[0].mxu0
      %v724 = vadd.f32 0.0, %v723
      %725 = vdwg.mxu0
      %v726 = vadd.f32 %v597, %v716
      %v727 = vadd.f32 %v598, %v718
      %v728 = vadd.f32 %v599, %v722
      %v729 = vadd.f32 %v600, %v724
      %v730 = vld [vmem:[%s338] sm:$0xff]
      %v731 = vld [vmem:[%s338 + $0x8] sm:$0xf]
      %s732 = scalar_lea.vmem %s4, 32
      %v733 = vld [vmem:[%s732] sm:$0xff]
      %v734 = vld [vmem:[%s732 + $0x8] sm:$0xff]
      %v737 = vcombine.high %v730, %v730
      %738 = vrot.lane.b32.xlu0 %v730, 126
      %v739 = vpop.permute.xlu0 %738
      %740 = vrot.lane.b32.xlu0 %v737, 126
      %v741 = vpop.permute.xlu0 %740
      %742 = vrot.lane.b32.xlu0 %v731, 126
      %v743 = vpop.permute.xlu0 %742
      %vm744 = vcmask 1031168
      %v745 = vsel %vm744, %v739, %v741
      %v746 = vsel %vm744, %v741, %v743
      %v748 = vsel %vm403, %v733, 0
      %v751 = vsel %vm403, %v734, 0
      %v753 = vsel %vm410, %v745, 0
      %v755 = vsel %vm410, %v746, 0
      %757 = vmatprep.subr.mxu0 %v755
      %758 = vmatpush1.msra.mxu0 %v753
      %759 = vmatprep.subr.mxu0 0.0
      %760 = vmatpush1.msra.mxu0 0.0
      %761 = vmatprep.subr.mxu0 0.0
      %762 = vmatpush1.msra.mxu0 0.0
      %763 = vmatprep.subr.mxu0 0.0
      %764 = vmatpush1.msra.mxu0 0.0
      %765 = vmatprep.subr.mxu0 0.0
      %766 = vmatpush1.msra.mxu0 0.0
      %767 = vmatprep.subr.mxu0 0.0
      %768 = vmatpush1.msra.mxu0 0.0
      %769 = vmatprep.subr.mxu0 0.0
      %770 = vmatpush1.msra.mxu0 0.0
      %771 = vmatprep.subr.mxu0 0.0
      %772 = vmatpush1.msra.mxu0 0.0
      %773 = vmatprep.subr.mxu0 0.0
      %774 = vmatpush1.msra.mxu0 0.0
      %775 = vmatprep.subr.mxu0 0.0
      %776 = vmatpush1.msra.mxu0 0.0
      %777 = vmatprep.subr.mxu0 0.0
      %778 = vmatpush1.msra.mxu0 0.0
      %779 = vmatprep.subr.mxu0 0.0
      %780 = vmatpush1.msra.mxu0 0.0
      %781 = vmatprep.subr.mxu0 0.0
      %782 = vmatpush1.msra.mxu0 0.0
      %783 = vmatprep.subr.mxu0 0.0
      %784 = vmatpush1.msra.mxu0 0.0
      %785 = vmatprep.subr.mxu0 0.0
      %786 = vmatpush1.msra.mxu0 0.0
      %787 = vmatprep.subr.mxu0 0.0
      %788 = vmatpush1.msra.mxu0 0.0
      %789 = vmatprep.subr.mxu0 0.0
      %790 = vmatpush1.msra.mxu0 0.0
      %791 = vmatprep.subr.mxu0 0.0
      %792 = vmatpush1.msra.mxu0 0.0
      %793 = vmatprep.subr.mxu0 0.0
      %794 = vmatpush1.msra.mxu0 0.0
      %795 = vmatprep.subr.mxu0 0.0
      %796 = vmatpush1.msra.mxu0 0.0
      %797 = vmatprep.subr.mxu0 0.0
      %798 = vmatpush1.msra.mxu0 0.0
      %799 = vmatprep.subr.mxu0 0.0
      %800 = vmatpush1.msra.mxu0 0.0
      %801 = vmatprep.subr.mxu0 0.0
      %802 = vmatpush1.msra.mxu0 0.0
      %803 = vmatprep.subr.mxu0 0.0
      %804 = vmatpush1.msra.mxu0 0.0
      %805 = vmatprep.subr.mxu0 0.0
      %806 = vmatpush1.msra.mxu0 0.0
      %807 = vmatprep.subr.mxu0 0.0
      %808 = vmatpush1.msra.mxu0 0.0
      %809 = vmatprep.subr.mxu0 0.0
      %810 = vmatpush1.msra.mxu0 0.0
      %811 = vmatprep.subr.mxu0 0.0
      %812 = vmatpush1.msra.mxu0 0.0
      %813 = vmatprep.subr.mxu0 0.0
      %814 = vmatpush1.msra.mxu0 0.0
      %815 = vmatprep.subr.mxu0 0.0
      %816 = vmatpush1.msra.mxu0 0.0
      %817 = vmatprep.subr.mxu0 0.0
      %818 = vmatpush1.msra.mxu0 0.0
      %819 = vmatprep.subr.mxu0 0.0
      %820 = vmatpush1.msra.mxu0 0.0
      %821 = vmatprep.mubr.f32.mxu0 0.0
      %822 = vmatmul.mubr.f32.gmra.mrb[0].mxu0 %v748
      %v823 = vpop.f32.mrb[0].mxu0
      %v824 = vadd.f32 0.0, %v823
      %v825 = vpop.f32.mrb[0].mxu0
      %v826 = vadd.f32 0.0, %v825
      %827 = vmatprep.mubr.f32.mxu0 0.0
      %828 = vmatmul.mubr.f32.gmra.mrb[0].mxu0 %v751
      %v829 = vpop.f32.mrb[0].mxu0
      %v830 = vadd.f32 0.0, %v829
      %v831 = vpop.f32.mrb[0].mxu0
      %v832 = vadd.f32 0.0, %v831
      %833 = vdwg.mxu0
      %v834 = vadd.f32 %v726, %v824
      %v835 = vadd.f32 %v727, %v826
      %v836 = vadd.f32 %v728, %v830
      %v837 = vadd.f32 %v729, %v832
      %v838 = vld [vmem:[%s338] sm:$0xff]
      %v839 = vld [vmem:[%s338 + $0x8] sm:$0xf]
      %s840 = scalar_lea.vmem %s3, 3
      %v841 = vld [vmem:[%s840] ss:$8 sm:$0x3]
      %v843 = vlaneseq
      %v844 = vshrl.u32 %v843, 7
      %v845 = vsub.s32 0, %v844
      %v846 = vrot.slane %v841, %v845
      %v847 = vlaneseq
      %v848 = vshrl.u32 %v847, 7
      %v849 = vsub.s32 1, %v848
      %v850 = vrot.slane %v841, %v849
      %v851 = vcombine.low %v846, %v850
      %852 = vrot.lane.b32.xlu0 %v851, 3
      %v853 = vpop.permute.xlu0 %852
      %v854 = vrot.slane %v853, 4
      %vm855 = vcmask 23552
      %v856 = vsel %vm855, %v854, %v853
      %v859 = vmul.f32 %v838, %v856
      %v860 = vmul.f32 %v839, %v854
      %s861 = scalar_lea.vmem %s4, 48
      %v862 = vld [vmem:[%s861] sm:$0xff]
      %v863 = vld [vmem:[%s861 + $0x8] sm:$0xff]
      %v866 = vcombine.high %v859, %v859
      %867 = vrot.lane.b32.xlu0 %v859, 125
      %v868 = vpop.permute.xlu0 %867
      %869 = vrot.lane.b32.xlu0 %v866, 125
      %v870 = vpop.permute.xlu0 %869
      %871 = vrot.lane.b32.xlu0 %v860, 125
      %v872 = vpop.permute.xlu0 %871
      %vm873 = vcmask 1022976
      %v874 = vsel %vm873, %v868, %v870
      %v875 = vsel %vm873, %v870, %v872
      %v877 = vsel %vm403, %v862, 0
      %v880 = vsel %vm403, %v863, 0
      %v882 = vsel %vm410, %v874, 0
      %v884 = vsel %vm410, %v875, 0
      %886 = vmatprep.subr.mxu0 %v884
      %887 = vmatpush1.msra.mxu0 %v882
      %888 = vmatprep.subr.mxu0 0.0
      %889 = vmatpush1.msra.mxu0 0.0
      %890 = vmatprep.subr.mxu0 0.0
      %891 = vmatpush1.msra.mxu0 0.0
      %892 = vmatprep.subr.mxu0 0.0
      %893 = vmatpush1.msra.mxu0 0.0
      %894 = vmatprep.subr.mxu0 0.0
      %895 = vmatpush1.msra.mxu0 0.0
      %896 = vmatprep.subr.mxu0 0.0
      %897 = vmatpush1.msra.mxu0 0.0
      %898 = vmatprep.subr.mxu0 0.0
      %899 = vmatpush1.msra.mxu0 0.0
      %900 = vmatprep.subr.mxu0 0.0
      %901 = vmatpush1.msra.mxu0 0.0
      %902 = vmatprep.subr.mxu0 0.0
      %903 = vmatpush1.msra.mxu0 0.0
      %904 = vmatprep.subr.mxu0 0.0
      %905 = vmatpush1.msra.mxu0 0.0
      %906 = vmatprep.subr.mxu0 0.0
      %907 = vmatpush1.msra.mxu0 0.0
      %908 = vmatprep.subr.mxu0 0.0
      %909 = vmatpush1.msra.mxu0 0.0
      %910 = vmatprep.subr.mxu0 0.0
      %911 = vmatpush1.msra.mxu0 0.0
      %912 = vmatprep.subr.mxu0 0.0
      %913 = vmatpush1.msra.mxu0 0.0
      %914 = vmatprep.subr.mxu0 0.0
      %915 = vmatpush1.msra.mxu0 0.0
      %916 = vmatprep.subr.mxu0 0.0
      %917 = vmatpush1.msra.mxu0 0.0
      %918 = vmatprep.subr.mxu0 0.0
      %919 = vmatpush1.msra.mxu0 0.0
      %920 = vmatprep.subr.mxu0 0.0
      %921 = vmatpush1.msra.mxu0 0.0
      %922 = vmatprep.subr.mxu0 0.0
      %923 = vmatpush1.msra.mxu0 0.0
      %924 = vmatprep.subr.mxu0 0.0
      %925 = vmatpush1.msra.mxu0 0.0
      %926 = vmatprep.subr.mxu0 0.0
      %927 = vmatpush1.msra.mxu0 0.0
      %928 = vmatprep.subr.mxu0 0.0
      %929 = vmatpush1.msra.mxu0 0.0
      %930 = vmatprep.subr.mxu0 0.0
      %931 = vmatpush1.msra.mxu0 0.0
      %932 = vmatprep.subr.mxu0 0.0
      %933 = vmatpush1.msra.mxu0 0.0
      %934 = vmatprep.subr.mxu0 0.0
      %935 = vmatpush1.msra.mxu0 0.0
      %936 = vmatprep.subr.mxu0 0.0
      %937 = vmatpush1.msra.mxu0 0.0
      %938 = vmatprep.subr.mxu0 0.0
      %939 = vmatpush1.msra.mxu0 0.0
      %940 = vmatprep.subr.mxu0 0.0
      %941 = vmatpush1.msra.mxu0 0.0
      %942 = vmatprep.subr.mxu0 0.0
      %943 = vmatpush1.msra.mxu0 0.0
      %944 = vmatprep.subr.mxu0 0.0
      %945 = vmatpush1.msra.mxu0 0.0
      %946 = vmatprep.subr.mxu0 0.0
      %947 = vmatpush1.msra.mxu0 0.0
      %948 = vmatprep.subr.mxu0 0.0
      %949 = vmatpush1.msra.mxu0 0.0
      %950 = vmatprep.mubr.f32.mxu0 0.0
      %951 = vmatmul.mubr.f32.gmra.mrb[0].mxu0 %v877
      %v952 = vpop.f32.mrb[0].mxu0
      %v953 = vadd.f32 0.0, %v952
      %v954 = vpop.f32.mrb[0].mxu0
      %v955 = vadd.f32 0.0, %v954
      %956 = vmatprep.mubr.f32.mxu0 0.0
      %957 = vmatmul.mubr.f32.gmra.mrb[0].mxu0 %v880
      %v958 = vpop.f32.mrb[0].mxu0
      %v959 = vadd.f32 0.0, %v958
      %v960 = vpop.f32.mrb[0].mxu0
      %v961 = vadd.f32 0.0, %v960
      %962 = vdwg.mxu0
      %v963 = vadd.f32 %v834, %v953
      %v964 = vadd.f32 %v835, %v955
      %v965 = vadd.f32 %v836, %v959
      %v966 = vadd.f32 %v837, %v961
      %v967 = vld [vmem:[%s338] sm:$0xff]
      %v968 = vld [vmem:[%s338 + $0x8] sm:$0xf]
      %s969 = scalar_lea.vmem %s3, 4
      %v970 = vld [vmem:[%s969] ss:$8 sm:$0x3]
      %v972 = vlaneseq
      %v973 = vshrl.u32 %v972, 7
      %v974 = vsub.s32 0, %v973
      %v975 = vrot.slane %v970, %v974
      %v976 = vlaneseq
      %v977 = vshrl.u32 %v976, 7
      %v978 = vsub.s32 1, %v977
      %v979 = vrot.slane %v970, %v978
      %v980 = vcombine.low %v975, %v979
      %981 = vrot.lane.b32.xlu0 %v980, 4
      %v982 = vpop.permute.xlu0 %981
      %v983 = vrot.slane %v982, 4
      %v984 = vsel %vm403, %v983, %v982
      %v987 = vmul.f32 %v967, %v984
      %v988 = vmul.f32 %v968, %v983
      %s989 = scalar_lea.vmem %s4, 64
      %v990 = vld [vmem:[%s989] sm:$0xff]
      %v991 = vld [vmem:[%s989 + $0x8] sm:$0xff]
      %v994 = vcombine.high %v987, %v987
      %995 = vrot.lane.b32.xlu0 %v987, 124
      %v996 = vpop.permute.xlu0 %995
      %997 = vrot.lane.b32.xlu0 %v994, 124
      %v998 = vpop.permute.xlu0 %997
      %999 = vrot.lane.b32.xlu0 %v988, 124
      %v1000 = vpop.permute.xlu0 %999
      %vm1001 = vcmask 1014784
      %v1002 = vsel %vm1001, %v996, %v998
      %v1003 = vsel %vm1001, %v998, %v1000
      %v1005 = vsel %vm403, %v990, 0
      %v1008 = vsel %vm403, %v991, 0
      %v1010 = vsel %vm410, %v1002, 0
      %v1012 = vsel %vm410, %v1003, 0
      %1014 = vmatprep.subr.mxu0 %v1012
      %1015 = vmatpush1.msra.mxu0 %v1010
      %1016 = vmatprep.subr.mxu0 0.0
      %1017 = vmatpush1.msra.mxu0 0.0
      %1018 = vmatprep.subr.mxu0 0.0
      %1019 = vmatpush1.msra.mxu0 0.0
      %1020 = vmatprep.subr.mxu0 0.0
      %1021 = vmatpush1.msra.mxu0 0.0
      %1022 = vmatprep.subr.mxu0 0.0
      %1023 = vmatpush1.msra.mxu0 0.0
      %1024 = vmatprep.subr.mxu0 0.0
      %1025 = vmatpush1.msra.mxu0 0.0
      %1026 = vmatprep.subr.mxu0 0.0
      %1027 = vmatpush1.msra.mxu0 0.0
      %1028 = vmatprep.subr.mxu0 0.0
      %1029 = vmatpush1.msra.mxu0 0.0
      %1030 = vmatprep.subr.mxu0 0.0
      %1031 = vmatpush1.msra.mxu0 0.0
      %1032 = vmatprep.subr.mxu0 0.0
      %1033 = vmatpush1.msra.mxu0 0.0
      %1034 = vmatprep.subr.mxu0 0.0
      %1035 = vmatpush1.msra.mxu0 0.0
      %1036 = vmatprep.subr.mxu0 0.0
      %1037 = vmatpush1.msra.mxu0 0.0
      %1038 = vmatprep.subr.mxu0 0.0
      %1039 = vmatpush1.msra.mxu0 0.0
      %1040 = vmatprep.subr.mxu0 0.0
      %1041 = vmatpush1.msra.mxu0 0.0
      %1042 = vmatprep.subr.mxu0 0.0
      %1043 = vmatpush1.msra.mxu0 0.0
      %1044 = vmatprep.subr.mxu0 0.0
      %1045 = vmatpush1.msra.mxu0 0.0
      %1046 = vmatprep.subr.mxu0 0.0
      %1047 = vmatpush1.msra.mxu0 0.0
      %1048 = vmatprep.subr.mxu0 0.0
      %1049 = vmatpush1.msra.mxu0 0.0
      %1050 = vmatprep.subr.mxu0 0.0
      %1051 = vmatpush1.msra.mxu0 0.0
      %1052 = vmatprep.subr.mxu0 0.0
      %1053 = vmatpush1.msra.mxu0 0.0
      %1054 = vmatprep.subr.mxu0 0.0
      %1055 = vmatpush1.msra.mxu0 0.0
      %1056 = vmatprep.subr.mxu0 0.0
      %1057 = vmatpush1.msra.mxu0 0.0
      %1058 = vmatprep.subr.mxu0 0.0
      %1059 = vmatpush1.msra.mxu0 0.0
      %1060 = vmatprep.subr.mxu0 0.0
      %1061 = vmatpush1.msra.mxu0 0.0
      %1062 = vmatprep.subr.mxu0 0.0
      %1063 = vmatpush1.msra.mxu0 0.0
      %1064 = vmatprep.subr.mxu0 0.0
      %1065 = vmatpush1.msra.mxu0 0.0
      %1066 = vmatprep.subr.mxu0 0.0
      %1067 = vmatpush1.msra.mxu0 0.0
      %1068 = vmatprep.subr.mxu0 0.0
      %1069 = vmatpush1.msra.mxu0 0.0
      %1070 = vmatprep.subr.mxu0 0.0
      %1071 = vmatpush1.msra.mxu0 0.0
      %1072 = vmatprep.subr.mxu0 0.0
      %1073 = vmatpush1.msra.mxu0 0.0
      %1074 = vmatprep.subr.mxu0 0.0
      %1075 = vmatpush1.msra.mxu0 0.0
      %1076 = vmatprep.subr.mxu0 0.0
      %1077 = vmatpush1.msra.mxu0 0.0
      %1078 = vmatprep.mubr.f32.mxu0 0.0
      %1079 = vmatmul.mubr.f32.gmra.mrb[0].mxu0 %v1005
      %v1080 = vpop.f32.mrb[0].mxu0
      %v1081 = vadd.f32 0.0, %v1080
      %v1082 = vpop.f32.mrb[0].mxu0
      %v1083 = vadd.f32 0.0, %v1082
      %1084 = vmatprep.mubr.f32.mxu0 0.0
      %1085 = vmatmul.mubr.f32.gmra.mrb[0].mxu0 %v1008
      %v1086 = vpop.f32.mrb[0].mxu0
      %v1087 = vadd.f32 0.0, %v1086
      %v1088 = vpop.f32.mrb[0].mxu0
      %v1089 = vadd.f32 0.0, %v1088
      %1090 = vdwg.mxu0
      %v1091 = vadd.f32 %v963, %v1081
      %v1092 = vadd.f32 %v964, %v1083
      %v1093 = vadd.f32 %v965, %v1087
      %v1094 = vadd.f32 %v966, %v1089
      %v1095 = vld [vmem:[%s338] sm:$0xff]
      %v1096 = vld [vmem:[%s338 + $0x8] sm:$0xf]
      %1097 = vrot.lane.b32.xlu0 %v503, 16
      %v1098 = vpop.permute.xlu0 %1097
      %v1099 = vrot.slane %v1098, 4
      %vm1100 = vcmask 130048
      %v1101 = vsel %vm1100, %v1099, %v1098
      %v1104 = vmul.f32 %v1095, %v1101
      %v1105 = vmul.f32 %v1096, %v1099
      %s1106 = scalar_lea.vmem %s4, 80
      %v1107 = vld [vmem:[%s1106] sm:$0xff]
      %v1108 = vld [vmem:[%s1106 + $0x8] sm:$0xff]
      %v1111 = vcombine.high %v1104, %v1104
      %1112 = vrot.lane.b32.xlu0 %v1104, 112
      %v1113 = vpop.permute.xlu0 %1112
      %1114 = vrot.lane.b32.xlu0 %v1111, 112
      %v1115 = vpop.permute.xlu0 %1114
      %1116 = vrot.lane.b32.xlu0 %v1105, 112
      %v1117 = vpop.permute.xlu0 %1116
      %vm1118 = vcmask 916480
      %v1119 = vsel %vm1118, %v1113, %v1115
      %v1120 = vsel %vm1118, %v1115, %v1117
      %v1122 = vsel %vm403, %v1107, 0
      %v1125 = vsel %vm403, %v1108, 0
      %v1127 = vsel %vm410, %v1119, 0
      %v1129 = vsel %vm410, %v1120, 0
      %1131 = vmatprep.subr.mxu0 %v1129
      %1132 = vmatpush1.msra.mxu0 %v1127
      %1133 = vmatprep.subr.mxu0 0.0
      %1134 = vmatpush1.msra.mxu0 0.0
      %1135 = vmatprep.subr.mxu0 0.0
      %1136 = vmatpush1.msra.mxu0 0.0
      %1137 = vmatprep.subr.mxu0 0.0
      %1138 = vmatpush1.msra.mxu0 0.0
      %1139 = vmatprep.subr.mxu0 0.0
      %1140 = vmatpush1.msra.mxu0 0.0
      %1141 = vmatprep.subr.mxu0 0.0
      %1142 = vmatpush1.msra.mxu0 0.0
      %1143 = vmatprep.subr.mxu0 0.0
      %1144 = vmatpush1.msra.mxu0 0.0
      %1145 = vmatprep.subr.mxu0 0.0
      %1146 = vmatpush1.msra.mxu0 0.0
      %1147 = vmatprep.subr.mxu0 0.0
      %1148 = vmatpush1.msra.mxu0 0.0
      %1149 = vmatprep.subr.mxu0 0.0
      %1150 = vmatpush1.msra.mxu0 0.0
      %1151 = vmatprep.subr.mxu0 0.0
      %1152 = vmatpush1.msra.mxu0 0.0
      %1153 = vmatprep.subr.mxu0 0.0
      %1154 = vmatpush1.msra.mxu0 0.0
      %1155 = vmatprep.subr.mxu0 0.0
      %1156 = vmatpush1.msra.mxu0 0.0
      %1157 = vmatprep.subr.mxu0 0.0
      %1158 = vmatpush1.msra.mxu0 0.0
      %1159 = vmatprep.subr.mxu0 0.0
      %1160 = vmatpush1.msra.mxu0 0.0
      %1161 = vmatprep.subr.mxu0 0.0
      %1162 = vmatpush1.msra.mxu0 0.0
      %1163 = vmatprep.subr.mxu0 0.0
      %1164 = vmatpush1.msra.mxu0 0.0
      %1165 = vmatprep.subr.mxu0 0.0
      %1166 = vmatpush1.msra.mxu0 0.0
      %1167 = vmatprep.subr.mxu0 0.0
      %1168 = vmatpush1.msra.mxu0 0.0
      %1169 = vmatprep.subr.mxu0 0.0
      %1170 = vmatpush1.msra.mxu0 0.0
      %1171 = vmatprep.subr.mxu0 0.0
      %1172 = vmatpush1.msra.mxu0 0.0
      %1173 = vmatprep.subr.mxu0 0.0
      %1174 = vmatpush1.msra.mxu0 0.0
      %1175 = vmatprep.subr.mxu0 0.0
      %1176 = vmatpush1.msra.mxu0 0.0
      %1177 = vmatprep.subr.mxu0 0.0
      %1178 = vmatpush1.msra.mxu0 0.0
      %1179 = vmatprep.subr.mxu0 0.0
      %1180 = vmatpush1.msra.mxu0 0.0
      %1181 = vmatprep.subr.mxu0 0.0
      %1182 = vmatpush1.msra.mxu0 0.0
      %1183 = vmatprep.subr.mxu0 0.0
      %1184 = vmatpush1.msra.mxu0 0.0
      %1185 = vmatprep.subr.mxu0 0.0
      %1186 = vmatpush1.msra.mxu0 0.0
      %1187 = vmatprep.subr.mxu0 0.0
      %1188 = vmatpush1.msra.mxu0 0.0
      %1189 = vmatprep.subr.mxu0 0.0
      %1190 = vmatpush1.msra.mxu0 0.0
      %1191 = vmatprep.subr.mxu0 0.0
      %1192 = vmatpush1.msra.mxu0 0.0
      %1193 = vmatprep.subr.mxu0 0.0
      %1194 = vmatpush1.msra.mxu0 0.0
      %1195 = vmatprep.mubr.f32.mxu0 0.0
      %1196 = vmatmul.mubr.f32.gmra.mrb[0].mxu0 %v1122
      %v1197 = vpop.f32.mrb[0].mxu0
      %v1198 = vadd.f32 0.0, %v1197
      %v1199 = vpop.f32.mrb[0].mxu0
      %v1200 = vadd.f32 0.0, %v1199
      %1201 = vmatprep.mubr.f32.mxu0 0.0
      %1202 = vmatmul.mubr.f32.gmra.mrb[0].mxu0 %v1125
      %v1203 = vpop.f32.mrb[0].mxu0
      %v1204 = vadd.f32 0.0, %v1203
      %v1205 = vpop.f32.mrb[0].mxu0
      %v1206 = vadd.f32 0.0, %v1205
      %1207 = vdwg.mxu0
      %v1208 = vadd.f32 %v1091, %v1198
      %v1209 = vadd.f32 %v1092, %v1200
      %v1210 = vadd.f32 %v1093, %v1204
      %v1211 = vadd.f32 %v1094, %v1206
      %v1212 = vld [vmem:[%s338] sm:$0xff]
      %v1213 = vld [vmem:[%s338 + $0x8] sm:$0xf]
      %1214 = vrot.lane.b32.xlu0 %v614, 17
      %v1215 = vpop.permute.xlu0 %1214
      %v1216 = vrot.slane %v1215, 4
      %vm1217 = vcmask 138240
      %v1218 = vsel %vm1217, %v1216, %v1215
      %v1221 = vmul.f32 %v1212, %v1218
      %v1222 = vmul.f32 %v1213, %v1216
      %s1223 = scalar_lea.vmem %s4, 96
      %v1224 = vld [vmem:[%s1223] sm:$0xff]
      %v1225 = vld [vmem:[%s1223 + $0x8] sm:$0xff]
      %v1228 = vcombine.high %v1221, %v1221
      %1229 = vrot.lane.b32.xlu0 %v1221, 111
      %v1230 = vpop.permute.xlu0 %1229
      %1231 = vrot.lane.b32.xlu0 %v1228, 111
      %v1232 = vpop.permute.xlu0 %1231
      %1233 = vrot.lane.b32.xlu0 %v1222, 111
      %v1234 = vpop.permute.xlu0 %1233
      %vm1235 = vcmask 908288
      %v1236 = vsel %vm1235, %v1230, %v1232
      %v1237 = vsel %vm1235, %v1232, %v1234
      %v1239 = vsel %vm403, %v1224, 0
      %v1242 = vsel %vm403, %v1225, 0
      %v1244 = vsel %vm410, %v1236, 0
      %v1246 = vsel %vm410, %v1237, 0
      %1248 = vmatprep.subr.mxu0 %v1246
      %1249 = vmatpush1.msra.mxu0 %v1244
      %1250 = vmatprep.subr.mxu0 0.0
      %1251 = vmatpush1.msra.mxu0 0.0
      %1252 = vmatprep.subr.mxu0 0.0
      %1253 = vmatpush1.msra.mxu0 0.0
      %1254 = vmatprep.subr.mxu0 0.0
      %1255 = vmatpush1.msra.mxu0 0.0
      %1256 = vmatprep.subr.mxu0 0.0
      %1257 = vmatpush1.msra.mxu0 0.0
      %1258 = vmatprep.subr.mxu0 0.0
      %1259 = vmatpush1.msra.mxu0 0.0
      %1260 = vmatprep.subr.mxu0 0.0
      %1261 = vmatpush1.msra.mxu0 0.0
      %1262 = vmatprep.subr.mxu0 0.0
      %1263 = vmatpush1.msra.mxu0 0.0
      %1264 = vmatprep.subr.mxu0 0.0
      %1265 = vmatpush1.msra.mxu0 0.0
      %1266 = vmatprep.subr.mxu0 0.0
      %1267 = vmatpush1.msra.mxu0 0.0
      %1268 = vmatprep.subr.mxu0 0.0
      %1269 = vmatpush1.msra.mxu0 0.0
      %1270 = vmatprep.subr.mxu0 0.0
      %1271 = vmatpush1.msra.mxu0 0.0
      %1272 = vmatprep.subr.mxu0 0.0
      %1273 = vmatpush1.msra.mxu0 0.0
      %1274 = vmatprep.subr.mxu0 0.0
      %1275 = vmatpush1.msra.mxu0 0.0
      %1276 = vmatprep.subr.mxu0 0.0
      %1277 = vmatpush1.msra.mxu0 0.0
      %1278 = vmatprep.subr.mxu0 0.0
      %1279 = vmatpush1.msra.mxu0 0.0
      %1280 = vmatprep.subr.mxu0 0.0
      %1281 = vmatpush1.msra.mxu0 0.0
      %1282 = vmatprep.subr.mxu0 0.0
      %1283 = vmatpush1.msra.mxu0 0.0
      %1284 = vmatprep.subr.mxu0 0.0
      %1285 = vmatpush1.msra.mxu0 0.0
      %1286 = vmatprep.subr.mxu0 0.0
      %1287 = vmatpush1.msra.mxu0 0.0
      %1288 = vmatprep.subr.mxu0 0.0
      %1289 = vmatpush1.msra.mxu0 0.0
      %1290 = vmatprep.subr.mxu0 0.0
      %1291 = vmatpush1.msra.mxu0 0.0
      %1292 = vmatprep.subr.mxu0 0.0
      %1293 = vmatpush1.msra.mxu0 0.0
      %1294 = vmatprep.subr.mxu0 0.0
      %1295 = vmatpush1.msra.mxu0 0.0
      %1296 = vmatprep.subr.mxu0 0.0
      %1297 = vmatpush1.msra.mxu0 0.0
      %1298 = vmatprep.subr.mxu0 0.0
      %1299 = vmatpush1.msra.mxu0 0.0
      %1300 = vmatprep.subr.mxu0 0.0
      %1301 = vmatpush1.msra.mxu0 0.0
      %1302 = vmatprep.subr.mxu0 0.0
      %1303 = vmatpush1.msra.mxu0 0.0
      %1304 = vmatprep.subr.mxu0 0.0
      %1305 = vmatpush1.msra.mxu0 0.0
      %1306 = vmatprep.subr.mxu0 0.0
      %1307 = vmatpush1.msra.mxu0 0.0
      %1308 = vmatprep.subr.mxu0 0.0
      %1309 = vmatpush1.msra.mxu0 0.0
      %1310 = vmatprep.subr.mxu0 0.0
      %1311 = vmatpush1.msra.mxu0 0.0
      %1312 = vmatprep.mubr.f32.mxu0 0.0
      %1313 = vmatmul.mubr.f32.gmra.mrb[0].mxu0 %v1239
      %v1314 = vpop.f32.mrb[0].mxu0
      %v1315 = vadd.f32 0.0, %v1314
      %v1316 = vpop.f32.mrb[0].mxu0
      %v1317 = vadd.f32 0.0, %v1316
      %1318 = vmatprep.mubr.f32.mxu0 0.0
      %1319 = vmatmul.mubr.f32.gmra.mrb[0].mxu0 %v1242
      %v1320 = vpop.f32.mrb[0].mxu0
      %v1321 = vadd.f32 0.0, %v1320
      %v1322 = vpop.f32.mrb[0].mxu0
      %v1323 = vadd.f32 0.0, %v1322
      %1324 = vdwg.mxu0
      %v1325 = vadd.f32 %v1208, %v1315
      %v1326 = vadd.f32 %v1209, %v1317
      %v1327 = vadd.f32 %v1210, %v1321
      %v1328 = vadd.f32 %v1211, %v1323
      %v1329 = vld [vmem:[%s338] sm:$0xff]
      %v1330 = vld [vmem:[%s338 + $0x8] sm:$0xf]
      %s1331 = scalar_lea.vmem %s4, 112
      %v1332 = vld [vmem:[%s1331] sm:$0xff]
      %v1333 = vld [vmem:[%s1331 + $0x8] sm:$0xff]
      %v1336 = vcombine.high %v1329, %v1329
      %1337 = vrot.lane.b32.xlu0 %v1329, 110
      %v1338 = vpop.permute.xlu0 %1337
      %1339 = vrot.lane.b32.xlu0 %v1336, 110
      %v1340 = vpop.permute.xlu0 %1339
      %1341 = vrot.lane.b32.xlu0 %v1330, 110
      %v1342 = vpop.permute.xlu0 %1341
      %vm1343 = vcmask 900096
      %v1344 = vsel %vm1343, %v1338, %v1340
      %v1345 = vsel %vm1343, %v1340, %v1342
      %v1347 = vsel %vm403, %v1332, 0
      %v1350 = vsel %vm403, %v1333, 0
      %v1352 = vsel %vm410, %v1344, 0
      %v1354 = vsel %vm410, %v1345, 0
      %1356 = vmatprep.subr.mxu0 %v1354
      %1357 = vmatpush1.msra.mxu0 %v1352
      %1358 = vmatprep.subr.mxu0 0.0
      %1359 = vmatpush1.msra.mxu0 0.0
      %1360 = vmatprep.subr.mxu0 0.0
      %1361 = vmatpush1.msra.mxu0 0.0
      %1362 = vmatprep.subr.mxu0 0.0
      %1363 = vmatpush1.msra.mxu0 0.0
      %1364 = vmatprep.subr.mxu0 0.0
      %1365 = vmatpush1.msra.mxu0 0.0
      %1366 = vmatprep.subr.mxu0 0.0
      %1367 = vmatpush1.msra.mxu0 0.0
      %1368 = vmatprep.subr.mxu0 0.0
      %1369 = vmatpush1.msra.mxu0 0.0
      %1370 = vmatprep.subr.mxu0 0.0
      %1371 = vmatpush1.msra.mxu0 0.0
      %1372 = vmatprep.subr.mxu0 0.0
      %1373 = vmatpush1.msra.mxu0 0.0
      %1374 = vmatprep.subr.mxu0 0.0
      %1375 = vmatpush1.msra.mxu0 0.0
      %1376 = vmatprep.subr.mxu0 0.0
      %1377 = vmatpush1.msra.mxu0 0.0
      %1378 = vmatprep.subr.mxu0 0.0
      %1379 = vmatpush1.msra.mxu0 0.0
      %1380 = vmatprep.subr.mxu0 0.0
      %1381 = vmatpush1.msra.mxu0 0.0
      %1382 = vmatprep.subr.mxu0 0.0
      %1383 = vmatpush1.msra.mxu0 0.0
      %1384 = vmatprep.subr.mxu0 0.0
      %1385 = vmatpush1.msra.mxu0 0.0
      %1386 = vmatprep.subr.mxu0 0.0
      %1387 = vmatpush1.msra.mxu0 0.0
      %1388 = vmatprep.subr.mxu0 0.0
      %1389 = vmatpush1.msra.mxu0 0.0
      %1390 = vmatprep.subr.mxu0 0.0
      %1391 = vmatpush1.msra.mxu0 0.0
      %1392 = vmatprep.subr.mxu0 0.0
      %1393 = vmatpush1.msra.mxu0 0.0
      %1394 = vmatprep.subr.mxu0 0.0
      %1395 = vmatpush1.msra.mxu0 0.0
      %1396 = vmatprep.subr.mxu0 0.0
      %1397 = vmatpush1.msra.mxu0 0.0
      %1398 = vmatprep.subr.mxu0 0.0
      %1399 = vmatpush1.msra.mxu0 0.0
      %1400 = vmatprep.subr.mxu0 0.0
      %1401 = vmatpush1.msra.mxu0 0.0
      %1402 = vmatprep.subr.mxu0 0.0
      %1403 = vmatpush1.msra.mxu0 0.0
      %1404 = vmatprep.subr.mxu0 0.0
      %1405 = vmatpush1.msra.mxu0 0.0
      %1406 = vmatprep.subr.mxu0 0.0
      %1407 = vmatpush1.msra.mxu0 0.0
      %1408 = vmatprep.subr.mxu0 0.0
      %1409 = vmatpush1.msra.mxu0 0.0
      %1410 = vmatprep.subr.mxu0 0.0
      %1411 = vmatpush1.msra.mxu0 0.0
      %1412 = vmatprep.subr.mxu0 0.0
      %1413 = vmatpush1.msra.mxu0 0.0
      %1414 = vmatprep.subr.mxu0 0.0
      %1415 = vmatpush1.msra.mxu0 0.0
      %1416 = vmatprep.subr.mxu0 0.0
      %1417 = vmatpush1.msra.mxu0 0.0
      %1418 = vmatprep.subr.mxu0 0.0
      %1419 = vmatpush1.msra.mxu0 0.0
      %1420 = vmatprep.mubr.f32.mxu0 0.0
      %1421 = vmatmul.mubr.f32.gmra.mrb[0].mxu0 %v1347
      %v1422 = vpop.f32.mrb[0].mxu0
      %v1423 = vadd.f32 0.0, %v1422
      %v1424 = vpop.f32.mrb[0].mxu0
      %v1425 = vadd.f32 0.0, %v1424
      %1426 = vmatprep.mubr.f32.mxu0 0.0
      %1427 = vmatmul.mubr.f32.gmra.mrb[0].mxu0 %v1350
      %v1428 = vpop.f32.mrb[0].mxu0
      %v1429 = vadd.f32 0.0, %v1428
      %v1430 = vpop.f32.mrb[0].mxu0
      %v1431 = vadd.f32 0.0, %v1430
      %1432 = vdwg.mxu0
      %v1433 = vadd.f32 %v1325, %v1423
      %v1434 = vadd.f32 %v1326, %v1425
      %v1435 = vadd.f32 %v1327, %v1429
      %v1436 = vadd.f32 %v1328, %v1431
      %v1437 = vld [vmem:[%s338] sm:$0xff]
      %v1438 = vld [vmem:[%s338 + $0x8] sm:$0xf]
      %1439 = vrot.lane.b32.xlu0 %v851, 19
      %v1440 = vpop.permute.xlu0 %1439
      %v1441 = vrot.slane %v1440, 4
      %vm1442 = vcmask 154624
      %v1443 = vsel %vm1442, %v1441, %v1440
      %v1446 = vmul.f32 %v1437, %v1443
      %v1447 = vmul.f32 %v1438, %v1441
      %s1448 = scalar_lea.vmem %s4, 128
      %v1449 = vld [vmem:[%s1448] sm:$0xff]
      %v1450 = vld [vmem:[%s1448 + $0x8] sm:$0xff]
      %v1453 = vcombine.high %v1446, %v1446
      %1454 = vrot.lane.b32.xlu0 %v1446, 109
      %v1455 = vpop.permute.xlu0 %1454
      %1456 = vrot.lane.b32.xlu0 %v1453, 109
      %v1457 = vpop.permute.xlu0 %1456
      %1458 = vrot.lane.b32.xlu0 %v1447, 109
      %v1459 = vpop.permute.xlu0 %1458
      %vm1460 = vcmask 891904
      %v1461 = vsel %vm1460, %v1455, %v1457
      %v1462 = vsel %vm1460, %v1457, %v1459
      %v1464 = vsel %vm403, %v1449, 0
      %v1467 = vsel %vm403, %v1450, 0
      %v1469 = vsel %vm410, %v1461, 0
      %v1471 = vsel %vm410, %v1462, 0
      %1473 = vmatprep.subr.mxu0 %v1471
      %1474 = vmatpush1.msra.mxu0 %v1469
      %1475 = vmatprep.subr.mxu0 0.0
      %1476 = vmatpush1.msra.mxu0 0.0
      %1477 = vmatprep.subr.mxu0 0.0
      %1478 = vmatpush1.msra.mxu0 0.0
      %1479 = vmatprep.subr.mxu0 0.0
      %1480 = vmatpush1.msra.mxu0 0.0
      %1481 = vmatprep.subr.mxu0 0.0
      %1482 = vmatpush1.msra.mxu0 0.0
      %1483 = vmatprep.subr.mxu0 0.0
      %1484 = vmatpush1.msra.mxu0 0.0
      %1485 = vmatprep.subr.mxu0 0.0
      %1486 = vmatpush1.msra.mxu0 0.0
      %1487 = vmatprep.subr.mxu0 0.0
      %1488 = vmatpush1.msra.mxu0 0.0
      %1489 = vmatprep.subr.mxu0 0.0
      %1490 = vmatpush1.msra.mxu0 0.0
      %1491 = vmatprep.subr.mxu0 0.0
      %1492 = vmatpush1.msra.mxu0 0.0
      %1493 = vmatprep.subr.mxu0 0.0
      %1494 = vmatpush1.msra.mxu0 0.0
      %1495 = vmatprep.subr.mxu0 0.0
      %1496 = vmatpush1.msra.mxu0 0.0
      %1497 = vmatprep.subr.mxu0 0.0
      %1498 = vmatpush1.msra.mxu0 0.0
      %1499 = vmatprep.subr.mxu0 0.0
      %1500 = vmatpush1.msra.mxu0 0.0
      %1501 = vmatprep.subr.mxu0 0.0
      %1502 = vmatpush1.msra.mxu0 0.0
      %1503 = vmatprep.subr.mxu0 0.0
      %1504 = vmatpush1.msra.mxu0 0.0
      %1505 = vmatprep.subr.mxu0 0.0
      %1506 = vmatpush1.msra.mxu0 0.0
      %1507 = vmatprep.subr.mxu0 0.0
      %1508 = vmatpush1.msra.mxu0 0.0
      %1509 = vmatprep.subr.mxu0 0.0
      %1510 = vmatpush1.msra.mxu0 0.0
      %1511 = vmatprep.subr.mxu0 0.0
      %1512 = vmatpush1.msra.mxu0 0.0
      %1513 = vmatprep.subr.mxu0 0.0
      %1514 = vmatpush1.msra.mxu0 0.0
      %1515 = vmatprep.subr.mxu0 0.0
      %1516 = vmatpush1.msra.mxu0 0.0
      %1517 = vmatprep.subr.mxu0 0.0
      %1518 = vmatpush1.msra.mxu0 0.0
      %1519 = vmatprep.subr.mxu0 0.0
      %1520 = vmatpush1.msra.mxu0 0.0
      %1521 = vmatprep.subr.mxu0 0.0
      %1522 = vmatpush1.msra.mxu0 0.0
      %1523 = vmatprep.subr.mxu0 0.0
      %1524 = vmatpush1.msra.mxu0 0.0
      %1525 = vmatprep.subr.mxu0 0.0
      %1526 = vmatpush1.msra.mxu0 0.0
      %1527 = vmatprep.subr.mxu0 0.0
      %1528 = vmatpush1.msra.mxu0 0.0
      %1529 = vmatprep.subr.mxu0 0.0
      %1530 = vmatpush1.msra.mxu0 0.0
      %1531 = vmatprep.subr.mxu0 0.0
      %1532 = vmatpush1.msra.mxu0 0.0
      %1533 = vmatprep.subr.mxu0 0.0
      %1534 = vmatpush1.msra.mxu0 0.0
      %1535 = vmatprep.subr.mxu0 0.0
      %1536 = vmatpush1.msra.mxu0 0.0
      %1537 = vmatprep.mubr.f32.mxu0 0.0
      %1538 = vmatmul.mubr.f32.gmra.mrb[0].mxu0 %v1464
      %v1539 = vpop.f32.mrb[0].mxu0
      %v1540 = vadd.f32 0.0, %v1539
      %v1541 = vpop.f32.mrb[0].mxu0
      %v1542 = vadd.f32 0.0, %v1541
      %1543 = vmatprep.mubr.f32.mxu0 0.0
      %1544 = vmatmul.mubr.f32.gmra.mrb[0].mxu0 %v1467
      %v1545 = vpop.f32.mrb[0].mxu0
      %v1546 = vadd.f32 0.0, %v1545
      %v1547 = vpop.f32.mrb[0].mxu0
      %v1548 = vadd.f32 0.0, %v1547
      %1549 = vdwg.mxu0
      %v1550 = vadd.f32 %v1433, %v1540
      %v1551 = vadd.f32 %v1434, %v1542
      %v1552 = vadd.f32 %v1435, %v1546
      %v1553 = vadd.f32 %v1436, %v1548
      %v1554 = vld [vmem:[%s338] sm:$0xff]
      %v1555 = vld [vmem:[%s338 + $0x8] sm:$0xf]
      %1556 = vrot.lane.b32.xlu0 %v980, 20
      %v1557 = vpop.permute.xlu0 %1556
      %v1558 = vrot.slane %v1557, 4
      %vm1559 = vcmask 162816
      %v1560 = vsel %vm1559, %v1558, %v1557
      %v1563 = vmul.f32 %v1554, %v1560
      %v1564 = vmul.f32 %v1555, %v1558
      %s1565 = scalar_lea.vmem %s4, 144
      %v1566 = vld [vmem:[%s1565] sm:$0xff]
      %v1567 = vld [vmem:[%s1565 + $0x8] sm:$0xff]
      %v1570 = vcombine.high %v1563, %v1563
      %1571 = vrot.lane.b32.xlu0 %v1563, 108
      %v1572 = vpop.permute.xlu0 %1571
      %1573 = vrot.lane.b32.xlu0 %v1570, 108
      %v1574 = vpop.permute.xlu0 %1573
      %1575 = vrot.lane.b32.xlu0 %v1564, 108
      %v1576 = vpop.permute.xlu0 %1575
      %vm1577 = vcmask 883712
      %v1578 = vsel %vm1577, %v1572, %v1574
      %v1579 = vsel %vm1577, %v1574, %v1576
      %v1581 = vsel %vm403, %v1566, 0
      %v1584 = vsel %vm403, %v1567, 0
      %v1586 = vsel %vm410, %v1578, 0
      %v1588 = vsel %vm410, %v1579, 0
      %1590 = vmatprep.subr.mxu0 %v1588
      %1591 = vmatpush1.msra.mxu0 %v1586
      %1592 = vmatprep.subr.mxu0 0.0
      %1593 = vmatpush1.msra.mxu0 0.0
      %1594 = vmatprep.subr.mxu0 0.0
      %1595 = vmatpush1.msra.mxu0 0.0
      %1596 = vmatprep.subr.mxu0 0.0
      %1597 = vmatpush1.msra.mxu0 0.0
      %1598 = vmatprep.subr.mxu0 0.0
      %1599 = vmatpush1.msra.mxu0 0.0
      %1600 = vmatprep.subr.mxu0 0.0
      %1601 = vmatpush1.msra.mxu0 0.0
      %1602 = vmatprep.subr.mxu0 0.0
      %1603 = vmatpush1.msra.mxu0 0.0
      %1604 = vmatprep.subr.mxu0 0.0
      %1605 = vmatpush1.msra.mxu0 0.0
      %1606 = vmatprep.subr.mxu0 0.0
      %1607 = vmatpush1.msra.mxu0 0.0
      %1608 = vmatprep.subr.mxu0 0.0
      %1609 = vmatpush1.msra.mxu0 0.0
      %1610 = vmatprep.subr.mxu0 0.0
      %1611 = vmatpush1.msra.mxu0 0.0
      %1612 = vmatprep.subr.mxu0 0.0
      %1613 = vmatpush1.msra.mxu0 0.0
      %1614 = vmatprep.subr.mxu0 0.0
      %1615 = vmatpush1.msra.mxu0 0.0
      %1616 = vmatprep.subr.mxu0 0.0
      %1617 = vmatpush1.msra.mxu0 0.0
      %1618 = vmatprep.subr.mxu0 0.0
      %1619 = vmatpush1.msra.mxu0 0.0
      %1620 = vmatprep.subr.mxu0 0.0
      %1621 = vmatpush1.msra.mxu0 0.0
      %1622 = vmatprep.subr.mxu0 0.0
      %1623 = vmatpush1.msra.mxu0 0.0
      %1624 = vmatprep.subr.mxu0 0.0
      %1625 = vmatpush1.msra.mxu0 0.0
      %1626 = vmatprep.subr.mxu0 0.0
      %1627 = vmatpush1.msra.mxu0 0.0
      %1628 = vmatprep.subr.mxu0 0.0
      %1629 = vmatpush1.msra.mxu0 0.0
      %1630 = vmatprep.subr.mxu0 0.0
      %1631 = vmatpush1.msra.mxu0 0.0
      %1632 = vmatprep.subr.mxu0 0.0
      %1633 = vmatpush1.msra.mxu0 0.0
      %1634 = vmatprep.subr.mxu0 0.0
      %1635 = vmatpush1.msra.mxu0 0.0
      %1636 = vmatprep.subr.mxu0 0.0
      %1637 = vmatpush1.msra.mxu0 0.0
      %1638 = vmatprep.subr.mxu0 0.0
      %1639 = vmatpush1.msra.mxu0 0.0
      %1640 = vmatprep.subr.mxu0 0.0
      %1641 = vmatpush1.msra.mxu0 0.0
      %1642 = vmatprep.subr.mxu0 0.0
      %1643 = vmatpush1.msra.mxu0 0.0
      %1644 = vmatprep.subr.mxu0 0.0
      %1645 = vmatpush1.msra.mxu0 0.0
      %1646 = vmatprep.subr.mxu0 0.0
      %1647 = vmatpush1.msra.mxu0 0.0
      %1648 = vmatprep.subr.mxu0 0.0
      %1649 = vmatpush1.msra.mxu0 0.0
      %1650 = vmatprep.subr.mxu0 0.0
      %1651 = vmatpush1.msra.mxu0 0.0
      %1652 = vmatprep.subr.mxu0 0.0
      %1653 = vmatpush1.msra.mxu0 0.0
      %1654 = vmatprep.mubr.f32.mxu0 0.0
      %1655 = vmatmul.mubr.f32.gmra.mrb[0].mxu0 %v1581
      %v1656 = vpop.f32.mrb[0].mxu0
      %v1657 = vadd.f32 0.0, %v1656
      %v1658 = vpop.f32.mrb[0].mxu0
      %v1659 = vadd.f32 0.0, %v1658
      %1660 = vmatprep.mubr.f32.mxu0 0.0
      %1661 = vmatmul.mubr.f32.gmra.mrb[0].mxu0 %v1584
      %v1662 = vpop.f32.mrb[0].mxu0
      %v1663 = vadd.f32 0.0, %v1662
      %v1664 = vpop.f32.mrb[0].mxu0
      %v1665 = vadd.f32 0.0, %v1664
      %1666 = vdwg.mxu0
      %v1667 = vadd.f32 %v1550, %v1657
      %v1668 = vadd.f32 %v1551, %v1659
      %v1669 = vadd.f32 %v1552, %v1663
      %v1670 = vadd.f32 %v1553, %v1665
      %v1671 = vld [vmem:[%s338] sm:$0xff]
      %v1672 = vld [vmem:[%s338 + $0x8] sm:$0xf]
      %1673 = vrot.lane.b32.xlu0 %v503, 32
      %v1674 = vpop.permute.xlu0 %1673
      %v1675 = vrot.slane %v1674, 4
      %vm1676 = vcmask 261120
      %v1677 = vsel %vm1676, %v1675, %v1674
      %v1680 = vmul.f32 %v1671, %v1677
      %v1681 = vmul.f32 %v1672, %v1675
      %s1682 = scalar_lea.vmem %s4, 160
      %v1683 = vld [vmem:[%s1682] sm:$0xff]
      %v1684 = vld [vmem:[%s1682 + $0x8] sm:$0xff]
      %v1687 = vcombine.high %v1680, %v1680
      %1688 = vrot.lane.b32.xlu0 %v1680, 96
      %v1689 = vpop.permute.xlu0 %1688
      %1690 = vrot.lane.b32.xlu0 %v1687, 96
      %v1691 = vpop.permute.xlu0 %1690
      %1692 = vrot.lane.b32.xlu0 %v1681, 96
      %v1693 = vpop.permute.xlu0 %1692
      %vm1694 = vcmask 785408
      %v1695 = vsel %vm1694, %v1689, %v1691
      %v1696 = vsel %vm1694, %v1691, %v1693
      %v1698 = vsel %vm403, %v1683, 0
      %v1701 = vsel %vm403, %v1684, 0
      %v1703 = vsel %vm410, %v1695, 0
      %v1705 = vsel %vm410, %v1696, 0
      %1707 = vmatprep.subr.mxu0 %v1705
      %1708 = vmatpush1.msra.mxu0 %v1703
      %1709 = vmatprep.subr.mxu0 0.0
      %1710 = vmatpush1.msra.mxu0 0.0
      %1711 = vmatprep.subr.mxu0 0.0
      %1712 = vmatpush1.msra.mxu0 0.0
      %1713 = vmatprep.subr.mxu0 0.0
      %1714 = vmatpush1.msra.mxu0 0.0
      %1715 = vmatprep.subr.mxu0 0.0
      %1716 = vmatpush1.msra.mxu0 0.0
      %1717 = vmatprep.subr.mxu0 0.0
      %1718 = vmatpush1.msra.mxu0 0.0
      %1719 = vmatprep.subr.mxu0 0.0
      %1720 = vmatpush1.msra.mxu0 0.0
      %1721 = vmatprep.subr.mxu0 0.0
      %1722 = vmatpush1.msra.mxu0 0.0
      %1723 = vmatprep.subr.mxu0 0.0
      %1724 = vmatpush1.msra.mxu0 0.0
      %1725 = vmatprep.subr.mxu0 0.0
      %1726 = vmatpush1.msra.mxu0 0.0
      %1727 = vmatprep.subr.mxu0 0.0
      %1728 = vmatpush1.msra.mxu0 0.0
      %1729 = vmatprep.subr.mxu0 0.0
      %1730 = vmatpush1.msra.mxu0 0.0
      %1731 = vmatprep.subr.mxu0 0.0
      %1732 = vmatpush1.msra.mxu0 0.0
      %1733 = vmatprep.subr.mxu0 0.0
      %1734 = vmatpush1.msra.mxu0 0.0
      %1735 = vmatprep.subr.mxu0 0.0
      %1736 = vmatpush1.msra.mxu0 0.0
      %1737 = vmatprep.subr.mxu0 0.0
      %1738 = vmatpush1.msra.mxu0 0.0
      %1739 = vmatprep.subr.mxu0 0.0
      %1740 = vmatpush1.msra.mxu0 0.0
      %1741 = vmatprep.subr.mxu0 0.0
      %1742 = vmatpush1.msra.mxu0 0.0
      %1743 = vmatprep.subr.mxu0 0.0
      %1744 = vmatpush1.msra.mxu0 0.0
      %1745 = vmatprep.subr.mxu0 0.0
      %1746 = vmatpush1.msra.mxu0 0.0
      %1747 = vmatprep.subr.mxu0 0.0
      %1748 = vmatpush1.msra.mxu0 0.0
      %1749 = vmatprep.subr.mxu0 0.0
      %1750 = vmatpush1.msra.mxu0 0.0
      %1751 = vmatprep.subr.mxu0 0.0
      %1752 = vmatpush1.msra.mxu0 0.0
      %1753 = vmatprep.subr.mxu0 0.0
      %1754 = vmatpush1.msra.mxu0 0.0
      %1755 = vmatprep.subr.mxu0 0.0
      %1756 = vmatpush1.msra.mxu0 0.0
      %1757 = vmatprep.subr.mxu0 0.0
      %1758 = vmatpush1.msra.mxu0 0.0
      %1759 = vmatprep.subr.mxu0 0.0
      %1760 = vmatpush1.msra.mxu0 0.0
      %1761 = vmatprep.subr.mxu0 0.0
      %1762 = vmatpush1.msra.mxu0 0.0
      %1763 = vmatprep.subr.mxu0 0.0
      %1764 = vmatpush1.msra.mxu0 0.0
      %1765 = vmatprep.subr.mxu0 0.0
      %1766 = vmatpush1.msra.mxu0 0.0
      %1767 = vmatprep.subr.mxu0 0.0
      %1768 = vmatpush1.msra.mxu0 0.0
      %1769 = vmatprep.subr.mxu0 0.0
      %1770 = vmatpush1.msra.mxu0 0.0
      %1771 = vmatprep.mubr.f32.mxu0 0.0
      %1772 = vmatmul.mubr.f32.gmra.mrb[0].mxu0 %v1698
      %v1773 = vpop.f32.mrb[0].mxu0
      %v1774 = vadd.f32 0.0, %v1773
      %v1775 = vpop.f32.mrb[0].mxu0
      %v1776 = vadd.f32 0.0, %v1775
      %1777 = vmatprep.mubr.f32.mxu0 0.0
      %1778 = vmatmul.mubr.f32.gmra.mrb[0].mxu0 %v1701
      %v1779 = vpop.f32.mrb[0].mxu0
      %v1780 = vadd.f32 0.0, %v1779
      %v1781 = vpop.f32.mrb[0].mxu0
      %v1782 = vadd.f32 0.0, %v1781
      %1783 = vdwg.mxu0
      %v1784 = vadd.f32 %v1667, %v1774
      %v1785 = vadd.f32 %v1668, %v1776
      %v1786 = vadd.f32 %v1669, %v1780
      %v1787 = vadd.f32 %v1670, %v1782
      %v1788 = vld [vmem:[%s338] sm:$0xff]
      %v1789 = vld [vmem:[%s338 + $0x8] sm:$0xf]
      %1790 = vrot.lane.b32.xlu0 %v614, 33
      %v1791 = vpop.permute.xlu0 %1790
      %v1792 = vrot.slane %v1791, 4
      %vm1793 = vcmask 269312
      %v1794 = vsel %vm1793, %v1792, %v1791
      %v1797 = vmul.f32 %v1788, %v1794
      %v1798 = vmul.f32 %v1789, %v1792
      %s1799 = scalar_lea.vmem %s4, 176
      %v1800 = vld [vmem:[%s1799] sm:$0xff]
      %v1801 = vld [vmem:[%s1799 + $0x8] sm:$0xff]
      %v1804 = vcombine.high %v1797, %v1797
      %1805 = vrot.lane.b32.xlu0 %v1797, 95
      %v1806 = vpop.permute.xlu0 %1805
      %1807 = vrot.lane.b32.xlu0 %v1804, 95
      %v1808 = vpop.permute.xlu0 %1807
      %1809 = vrot.lane.b32.xlu0 %v1798, 95
      %v1810 = vpop.permute.xlu0 %1809
      %vm1811 = vcmask 777216
      %v1812 = vsel %vm1811, %v1806, %v1808
      %v1813 = vsel %vm1811, %v1808, %v1810
      %v1815 = vsel %vm403, %v1800, 0
      %v1818 = vsel %vm403, %v1801, 0
      %v1820 = vsel %vm410, %v1812, 0
      %v1822 = vsel %vm410, %v1813, 0
      %1824 = vmatprep.subr.mxu0 %v1822
      %1825 = vmatpush1.msra.mxu0 %v1820
      %1826 = vmatprep.subr.mxu0 0.0
      %1827 = vmatpush1.msra.mxu0 0.0
      %1828 = vmatprep.subr.mxu0 0.0
      %1829 = vmatpush1.msra.mxu0 0.0
      %1830 = vmatprep.subr.mxu0 0.0
      %1831 = vmatpush1.msra.mxu0 0.0
      %1832 = vmatprep.subr.mxu0 0.0
      %1833 = vmatpush1.msra.mxu0 0.0
      %1834 = vmatprep.subr.mxu0 0.0
      %1835 = vmatpush1.msra.mxu0 0.0
      %1836 = vmatprep.subr.mxu0 0.0
      %1837 = vmatpush1.msra.mxu0 0.0
      %1838 = vmatprep.subr.mxu0 0.0
      %1839 = vmatpush1.msra.mxu0 0.0
      %1840 = vmatprep.subr.mxu0 0.0
      %1841 = vmatpush1.msra.mxu0 0.0
      %1842 = vmatprep.subr.mxu0 0.0
      %1843 = vmatpush1.msra.mxu0 0.0
      %1844 = vmatprep.subr.mxu0 0.0
      %1845 = vmatpush1.msra.mxu0 0.0
      %1846 = vmatprep.subr.mxu0 0.0
      %1847 = vmatpush1.msra.mxu0 0.0
      %1848 = vmatprep.subr.mxu0 0.0
      %1849 = vmatpush1.msra.mxu0 0.0
      %1850 = vmatprep.subr.mxu0 0.0
      %1851 = vmatpush1.msra.mxu0 0.0
      %1852 = vmatprep.subr.mxu0 0.0
      %1853 = vmatpush1.msra.mxu0 0.0
      %1854 = vmatprep.subr.mxu0 0.0
      %1855 = vmatpush1.msra.mxu0 0.0
      %1856 = vmatprep.subr.mxu0 0.0
      %1857 = vmatpush1.msra.mxu0 0.0
      %1858 = vmatprep.subr.mxu0 0.0
      %1859 = vmatpush1.msra.mxu0 0.0
      %1860 = vmatprep.subr.mxu0 0.0
      %1861 = vmatpush1.msra.mxu0 0.0
      %1862 = vmatprep.subr.mxu0 0.0
      %1863 = vmatpush1.msra.mxu0 0.0
      %1864 = vmatprep.subr.mxu0 0.0
      %1865 = vmatpush1.msra.mxu0 0.0
      %1866 = vmatprep.subr.mxu0 0.0
      %1867 = vmatpush1.msra.mxu0 0.0
      %1868 = vmatprep.subr.mxu0 0.0
      %1869 = vmatpush1.msra.mxu0 0.0
      %1870 = vmatprep.subr.mxu0 0.0
      %1871 = vmatpush1.msra.mxu0 0.0
      %1872 = vmatprep.subr.mxu0 0.0
      %1873 = vmatpush1.msra.mxu0 0.0
      %1874 = vmatprep.subr.mxu0 0.0
      %1875 = vmatpush1.msra.mxu0 0.0
      %1876 = vmatprep.subr.mxu0 0.0
      %1877 = vmatpush1.msra.mxu0 0.0
      %1878 = vmatprep.subr.mxu0 0.0
      %1879 = vmatpush1.msra.mxu0 0.0
      %1880 = vmatprep.subr.mxu0 0.0
      %1881 = vmatpush1.msra.mxu0 0.0
      %1882 = vmatprep.subr.mxu0 0.0
      %1883 = vmatpush1.msra.mxu0 0.0
      %1884 = vmatprep.subr.mxu0 0.0
      %1885 = vmatpush1.msra.mxu0 0.0
      %1886 = vmatprep.subr.mxu0 0.0
      %1887 = vmatpush1.msra.mxu0 0.0
      %1888 = vmatprep.mubr.f32.mxu0 0.0
      %1889 = vmatmul.mubr.f32.gmra.mrb[0].mxu0 %v1815
      %v1890 = vpop.f32.mrb[0].mxu0
      %v1891 = vadd.f32 0.0, %v1890
      %v1892 = vpop.f32.mrb[0].mxu0
      %v1893 = vadd.f32 0.0, %v1892
      %1894 = vmatprep.mubr.f32.mxu0 0.0
      %1895 = vmatmul.mubr.f32.gmra.mrb[0].mxu0 %v1818
      %v1896 = vpop.f32.mrb[0].mxu0
      %v1897 = vadd.f32 0.0, %v1896
      %v1898 = vpop.f32.mrb[0].mxu0
      %v1899 = vadd.f32 0.0, %v1898
      %1900 = vdwg.mxu0
      %v1901 = vadd.f32 %v1784, %v1891
      %v1902 = vadd.f32 %v1785, %v1893
      %v1903 = vadd.f32 %v1786, %v1897
      %v1904 = vadd.f32 %v1787, %v1899
      %v1905 = vld [vmem:[%s338] sm:$0xff]
      %v1906 = vld [vmem:[%s338 + $0x8] sm:$0xf]
      %s1907 = scalar_lea.vmem %s4, 192
      %v1908 = vld [vmem:[%s1907] sm:$0xff]
      %v1909 = vld [vmem:[%s1907 + $0x8] sm:$0xff]
      %v1912 = vcombine.high %v1905, %v1905
      %1913 = vrot.lane.b32.xlu0 %v1905, 94
      %v1914 = vpop.permute.xlu0 %1913
      %1915 = vrot.lane.b32.xlu0 %v1912, 94
      %v1916 = vpop.permute.xlu0 %1915
      %1917 = vrot.lane.b32.xlu0 %v1906, 94
      %v1918 = vpop.permute.xlu0 %1917
      %vm1919 = vcmask 769024
      %v1920 = vsel %vm1919, %v1914, %v1916
      %v1921 = vsel %vm1919, %v1916, %v1918
      %v1923 = vsel %vm403, %v1908, 0
      %v1926 = vsel %vm403, %v1909, 0
      %v1928 = vsel %vm410, %v1920, 0
      %v1930 = vsel %vm410, %v1921, 0
      %1932 = vmatprep.subr.mxu0 %v1930
      %1933 = vmatpush1.msra.mxu0 %v1928
      %1934 = vmatprep.subr.mxu0 0.0
      %1935 = vmatpush1.msra.mxu0 0.0
      %1936 = vmatprep.subr.mxu0 0.0
      %1937 = vmatpush1.msra.mxu0 0.0
      %1938 = vmatprep.subr.mxu0 0.0
      %1939 = vmatpush1.msra.mxu0 0.0
      %1940 = vmatprep.subr.mxu0 0.0
      %1941 = vmatpush1.msra.mxu0 0.0
      %1942 = vmatprep.subr.mxu0 0.0
      %1943 = vmatpush1.msra.mxu0 0.0
      %1944 = vmatprep.subr.mxu0 0.0
      %1945 = vmatpush1.msra.mxu0 0.0
      %1946 = vmatprep.subr.mxu0 0.0
      %1947 = vmatpush1.msra.mxu0 0.0
      %1948 = vmatprep.subr.mxu0 0.0
      %1949 = vmatpush1.msra.mxu0 0.0
      %1950 = vmatprep.subr.mxu0 0.0
      %1951 = vmatpush1.msra.mxu0 0.0
      %1952 = vmatprep.subr.mxu0 0.0
      %1953 = vmatpush1.msra.mxu0 0.0
      %1954 = vmatprep.subr.mxu0 0.0
      %1955 = vmatpush1.msra.mxu0 0.0
      %1956 = vmatprep.subr.mxu0 0.0
      %1957 = vmatpush1.msra.mxu0 0.0
      %1958 = vmatprep.subr.mxu0 0.0
      %1959 = vmatpush1.msra.mxu0 0.0
      %1960 = vmatprep.subr.mxu0 0.0
      %1961 = vmatpush1.msra.mxu0 0.0
      %1962 = vmatprep.subr.mxu0 0.0
      %1963 = vmatpush1.msra.mxu0 0.0
      %1964 = vmatprep.subr.mxu0 0.0
      %1965 = vmatpush1.msra.mxu0 0.0
      %1966 = vmatprep.subr.mxu0 0.0
      %1967 = vmatpush1.msra.mxu0 0.0
      %1968 = vmatprep.subr.mxu0 0.0
      %1969 = vmatpush1.msra.mxu0 0.0
      %1970 = vmatprep.subr.mxu0 0.0
      %1971 = vmatpush1.msra.mxu0 0.0
      %1972 = vmatprep.subr.mxu0 0.0
      %1973 = vmatpush1.msra.mxu0 0.0
      %1974 = vmatprep.subr.mxu0 0.0
      %1975 = vmatpush1.msra.mxu0 0.0
      %1976 = vmatprep.subr.mxu0 0.0
      %1977 = vmatpush1.msra.mxu0 0.0
      %1978 = vmatprep.subr.mxu0 0.0
      %1979 = vmatpush1.msra.mxu0 0.0
      %1980 = vmatprep.subr.mxu0 0.0
      %1981 = vmatpush1.msra.mxu0 0.0
      %1982 = vmatprep.subr.mxu0 0.0
      %1983 = vmatpush1.msra.mxu0 0.0
      %1984 = vmatprep.subr.mxu0 0.0
      %1985 = vmatpush1.msra.mxu0 0.0
      %1986 = vmatprep.subr.mxu0 0.0
      %1987 = vmatpush1.msra.mxu0 0.0
      %1988 = vmatprep.subr.mxu0 0.0
      %1989 = vmatpush1.msra.mxu0 0.0
      %1990 = vmatprep.subr.mxu0 0.0
      %1991 = vmatpush1.msra.mxu0 0.0
      %1992 = vmatprep.subr.mxu0 0.0
      %1993 = vmatpush1.msra.mxu0 0.0
      %1994 = vmatprep.subr.mxu0 0.0
      %1995 = vmatpush1.msra.mxu0 0.0
      %1996 = vmatprep.mubr.f32.mxu0 0.0
      %1997 = vmatmul.mubr.f32.gmra.mrb[0].mxu0 %v1923
      %v1998 = vpop.f32.mrb[0].mxu0
      %v1999 = vadd.f32 0.0, %v1998
      %v2000 = vpop.f32.mrb[0].mxu0
      %v2001 = vadd.f32 0.0, %v2000
      %2002 = vmatprep.mubr.f32.mxu0 0.0
      %2003 = vmatmul.mubr.f32.gmra.mrb[0].mxu0 %v1926
      %v2004 = vpop.f32.mrb[0].mxu0
      %v2005 = vadd.f32 0.0, %v2004
      %v2006 = vpop.f32.mrb[0].mxu0
      %v2007 = vadd.f32 0.0, %v2006
      %2008 = vdwg.mxu0
      %v2009 = vadd.f32 %v1901, %v1999
      %v2010 = vadd.f32 %v1902, %v2001
      %v2011 = vadd.f32 %v1903, %v2005
      %v2012 = vadd.f32 %v1904, %v2007
      %v2013 = vld [vmem:[%s338] sm:$0xff]
      %v2014 = vld [vmem:[%s338 + $0x8] sm:$0xf]
      %2015 = vrot.lane.b32.xlu0 %v851, 35
      %v2016 = vpop.permute.xlu0 %2015
      %v2017 = vrot.slane %v2016, 4
      %vm2018 = vcmask 285696
      %v2019 = vsel %vm2018, %v2017, %v2016
      %v2022 = vmul.f32 %v2013, %v2019
      %v2023 = vmul.f32 %v2014, %v2017
      %s2024 = scalar_lea.vmem %s4, 208
      %v2025 = vld [vmem:[%s2024] sm:$0xff]
      %v2026 = vld [vmem:[%s2024 + $0x8] sm:$0xff]
      %v2029 = vcombine.high %v2022, %v2022
      %2030 = vrot.lane.b32.xlu0 %v2022, 93
      %v2031 = vpop.permute.xlu0 %2030
      %2032 = vrot.lane.b32.xlu0 %v2029, 93
      %v2033 = vpop.permute.xlu0 %2032
      %2034 = vrot.lane.b32.xlu0 %v2023, 93
      %v2035 = vpop.permute.xlu0 %2034
      %vm2036 = vcmask 760832
      %v2037 = vsel %vm2036, %v2031, %v2033
      %v2038 = vsel %vm2036, %v2033, %v2035
      %v2040 = vsel %vm403, %v2025, 0
      %v2043 = vsel %vm403, %v2026, 0
      %v2045 = vsel %vm410, %v2037, 0
      %v2047 = vsel %vm410, %v2038, 0
      %2049 = vmatprep.subr.mxu0 %v2047
      %2050 = vmatpush1.msra.mxu0 %v2045
      %2051 = vmatprep.subr.mxu0 0.0
      %2052 = vmatpush1.msra.mxu0 0.0
      %2053 = vmatprep.subr.mxu0 0.0
      %2054 = vmatpush1.msra.mxu0 0.0
      %2055 = vmatprep.subr.mxu0 0.0
      %2056 = vmatpush1.msra.mxu0 0.0
      %2057 = vmatprep.subr.mxu0 0.0
      %2058 = vmatpush1.msra.mxu0 0.0
      %2059 = vmatprep.subr.mxu0 0.0
      %2060 = vmatpush1.msra.mxu0 0.0
      %2061 = vmatprep.subr.mxu0 0.0
      %2062 = vmatpush1.msra.mxu0 0.0
      %2063 = vmatprep.subr.mxu0 0.0
      %2064 = vmatpush1.msra.mxu0 0.0
      %2065 = vmatprep.subr.mxu0 0.0
      %2066 = vmatpush1.msra.mxu0 0.0
      %2067 = vmatprep.subr.mxu0 0.0
      %2068 = vmatpush1.msra.mxu0 0.0
      %2069 = vmatprep.subr.mxu0 0.0
      %2070 = vmatpush1.msra.mxu0 0.0
      %2071 = vmatprep.subr.mxu0 0.0
      %2072 = vmatpush1.msra.mxu0 0.0
      %2073 = vmatprep.subr.mxu0 0.0
      %2074 = vmatpush1.msra.mxu0 0.0
      %2075 = vmatprep.subr.mxu0 0.0
      %2076 = vmatpush1.msra.mxu0 0.0
      %2077 = vmatprep.subr.mxu0 0.0
      %2078 = vmatpush1.msra.mxu0 0.0
      %2079 = vmatprep.subr.mxu0 0.0
      %2080 = vmatpush1.msra.mxu0 0.0
      %2081 = vmatprep.subr.mxu0 0.0
      %2082 = vmatpush1.msra.mxu0 0.0
      %2083 = vmatprep.subr.mxu0 0.0
      %2084 = vmatpush1.msra.mxu0 0.0
      %2085 = vmatprep.subr.mxu0 0.0
      %2086 = vmatpush1.msra.mxu0 0.0
      %2087 = vmatprep.subr.mxu0 0.0
      %2088 = vmatpush1.msra.mxu0 0.0
      %2089 = vmatprep.subr.mxu0 0.0
      %2090 = vmatpush1.msra.mxu0 0.0
      %2091 = vmatprep.subr.mxu0 0.0
      %2092 = vmatpush1.msra.mxu0 0.0
      %2093 = vmatprep.subr.mxu0 0.0
      %2094 = vmatpush1.msra.mxu0 0.0
      %2095 = vmatprep.subr.mxu0 0.0
      %2096 = vmatpush1.msra.mxu0 0.0
      %2097 = vmatprep.subr.mxu0 0.0
      %2098 = vmatpush1.msra.mxu0 0.0
      %2099 = vmatprep.subr.mxu0 0.0
      %2100 = vmatpush1.msra.mxu0 0.0
      %2101 = vmatprep.subr.mxu0 0.0
      %2102 = vmatpush1.msra.mxu0 0.0
      %2103 = vmatprep.subr.mxu0 0.0
      %2104 = vmatpush1.msra.mxu0 0.0
      %2105 = vmatprep.subr.mxu0 0.0
      %2106 = vmatpush1.msra.mxu0 0.0
      %2107 = vmatprep.subr.mxu0 0.0
      %2108 = vmatpush1.msra.mxu0 0.0
      %2109 = vmatprep.subr.mxu0 0.0
      %2110 = vmatpush1.msra.mxu0 0.0
      %2111 = vmatprep.subr.mxu0 0.0
      %2112 = vmatpush1.msra.mxu0 0.0
      %2113 = vmatprep.mubr.f32.mxu0 0.0
      %2114 = vmatmul.mubr.f32.gmra.mrb[0].mxu0 %v2040
      %v2115 = vpop.f32.mrb[0].mxu0
      %v2116 = vadd.f32 0.0, %v2115
      %v2117 = vpop.f32.mrb[0].mxu0
      %v2118 = vadd.f32 0.0, %v2117
      %2119 = vmatprep.mubr.f32.mxu0 0.0
      %2120 = vmatmul.mubr.f32.gmra.mrb[0].mxu0 %v2043
      %v2121 = vpop.f32.mrb[0].mxu0
      %v2122 = vadd.f32 0.0, %v2121
      %v2123 = vpop.f32.mrb[0].mxu0
      %v2124 = vadd.f32 0.0, %v2123
      %2125 = vdwg.mxu0
      %v2126 = vadd.f32 %v2009, %v2116
      %v2127 = vadd.f32 %v2010, %v2118
      %v2128 = vadd.f32 %v2011, %v2122
      %v2129 = vadd.f32 %v2012, %v2124
      %v2130 = vld [vmem:[%s338] sm:$0xff]
      %v2131 = vld [vmem:[%s338 + $0x8] sm:$0xf]
      %2132 = vrot.lane.b32.xlu0 %v980, 36
      %v2133 = vpop.permute.xlu0 %2132
      %v2134 = vrot.slane %v2133, 4
      %vm2135 = vcmask 293888
      %v2136 = vsel %vm2135, %v2134, %v2133
      %v2139 = vmul.f32 %v2130, %v2136
      %v2140 = vmul.f32 %v2131, %v2134
      %s2141 = scalar_lea.vmem %s4, 224
      %v2142 = vld [vmem:[%s2141] sm:$0xff]
      %v2143 = vld [vmem:[%s2141 + $0x8] sm:$0xff]
      %v2146 = vcombine.high %v2139, %v2139
      %2147 = vrot.lane.b32.xlu0 %v2139, 92
      %v2148 = vpop.permute.xlu0 %2147
      %2149 = vrot.lane.b32.xlu0 %v2146, 92
      %v2150 = vpop.permute.xlu0 %2149
      %2151 = vrot.lane.b32.xlu0 %v2140, 92
      %v2152 = vpop.permute.xlu0 %2151
      %vm2153 = vcmask 752640
      %v2154 = vsel %vm2153, %v2148, %v2150
      %v2155 = vsel %vm2153, %v2150, %v2152
      %v2157 = vsel %vm403, %v2142, 0
      %v2160 = vsel %vm403, %v2143, 0
      %v2162 = vsel %vm410, %v2154, 0
      %v2164 = vsel %vm410, %v2155, 0
      %2166 = vmatprep.subr.mxu0 %v2164
      %2167 = vmatpush1.msra.mxu0 %v2162
      %2168 = vmatprep.subr.mxu0 0.0
      %2169 = vmatpush1.msra.mxu0 0.0
      %2170 = vmatprep.subr.mxu0 0.0
      %2171 = vmatpush1.msra.mxu0 0.0
      %2172 = vmatprep.subr.mxu0 0.0
      %2173 = vmatpush1.msra.mxu0 0.0
      %2174 = vmatprep.subr.mxu0 0.0
      %2175 = vmatpush1.msra.mxu0 0.0
      %2176 = vmatprep.subr.mxu0 0.0
      %2177 = vmatpush1.msra.mxu0 0.0
      %2178 = vmatprep.subr.mxu0 0.0
      %2179 = vmatpush1.msra.mxu0 0.0
      %2180 = vmatprep.subr.mxu0 0.0
      %2181 = vmatpush1.msra.mxu0 0.0
      %2182 = vmatprep.subr.mxu0 0.0
      %2183 = vmatpush1.msra.mxu0 0.0
      %2184 = vmatprep.subr.mxu0 0.0
      %2185 = vmatpush1.msra.mxu0 0.0
      %2186 = vmatprep.subr.mxu0 0.0
      %2187 = vmatpush1.msra.mxu0 0.0
      %2188 = vmatprep.subr.mxu0 0.0
      %2189 = vmatpush1.msra.mxu0 0.0
      %2190 = vmatprep.subr.mxu0 0.0
      %2191 = vmatpush1.msra.mxu0 0.0
      %2192 = vmatprep.subr.mxu0 0.0
      %2193 = vmatpush1.msra.mxu0 0.0
      %2194 = vmatprep.subr.mxu0 0.0
      %2195 = vmatpush1.msra.mxu0 0.0
      %2196 = vmatprep.subr.mxu0 0.0
      %2197 = vmatpush1.msra.mxu0 0.0
      %2198 = vmatprep.subr.mxu0 0.0
      %2199 = vmatpush1.msra.mxu0 0.0
      %2200 = vmatprep.subr.mxu0 0.0
      %2201 = vmatpush1.msra.mxu0 0.0
      %2202 = vmatprep.subr.mxu0 0.0
      %2203 = vmatpush1.msra.mxu0 0.0
      %2204 = vmatprep.subr.mxu0 0.0
      %2205 = vmatpush1.msra.mxu0 0.0
      %2206 = vmatprep.subr.mxu0 0.0
      %2207 = vmatpush1.msra.mxu0 0.0
      %2208 = vmatprep.subr.mxu0 0.0
      %2209 = vmatpush1.msra.mxu0 0.0
      %2210 = vmatprep.subr.mxu0 0.0
      %2211 = vmatpush1.msra.mxu0 0.0
      %2212 = vmatprep.subr.mxu0 0.0
      %2213 = vmatpush1.msra.mxu0 0.0
      %2214 = vmatprep.subr.mxu0 0.0
      %2215 = vmatpush1.msra.mxu0 0.0
      %2216 = vmatprep.subr.mxu0 0.0
      %2217 = vmatpush1.msra.mxu0 0.0
      %2218 = vmatprep.subr.mxu0 0.0
      %2219 = vmatpush1.msra.mxu0 0.0
      %2220 = vmatprep.subr.mxu0 0.0
      %2221 = vmatpush1.msra.mxu0 0.0
      %2222 = vmatprep.subr.mxu0 0.0
      %2223 = vmatpush1.msra.mxu0 0.0
      %2224 = vmatprep.subr.mxu0 0.0
      %2225 = vmatpush1.msra.mxu0 0.0
      %2226 = vmatprep.subr.mxu0 0.0
      %2227 = vmatpush1.msra.mxu0 0.0
      %2228 = vmatprep.subr.mxu0 0.0
      %2229 = vmatpush1.msra.mxu0 0.0
      %2230 = vmatprep.mubr.f32.mxu0 0.0
      %2231 = vmatmul.mubr.f32.gmra.mrb[0].mxu0 %v2157
      %v2232 = vpop.f32.mrb[0].mxu0
      %v2233 = vadd.f32 0.0, %v2232
      %v2234 = vpop.f32.mrb[0].mxu0
      %v2235 = vadd.f32 0.0, %v2234
      %2236 = vmatprep.mubr.f32.mxu0 0.0
      %2237 = vmatmul.mubr.f32.gmra.mrb[0].mxu0 %v2160
      %v2238 = vpop.f32.mrb[0].mxu0
      %v2239 = vadd.f32 0.0, %v2238
      %v2240 = vpop.f32.mrb[0].mxu0
      %v2241 = vadd.f32 0.0, %v2240
      %2242 = vdwg.mxu0
      %v2243 = vadd.f32 %v2126, %v2233
      %v2244 = vadd.f32 %v2127, %v2235
      %v2245 = vadd.f32 %v2128, %v2239
      %v2246 = vadd.f32 %v2129, %v2241
      %v2247 = vld [vmem:[%s338] sm:$0xff]
      %v2248 = vld [vmem:[%s338 + $0x8] sm:$0xf]
      %2249 = vrot.lane.b32.xlu0 %v503, 48
      %v2250 = vpop.permute.xlu0 %2249
      %v2251 = vrot.slane %v2250, 4
      %vm2252 = vcmask 392192
      %v2253 = vsel %vm2252, %v2251, %v2250
      %v2256 = vmul.f32 %v2247, %v2253
      %v2257 = vmul.f32 %v2248, %v2251
      %s2258 = scalar_lea.vmem %s4, 240
      %v2259 = vld [vmem:[%s2258] sm:$0xff]
      %v2260 = vld [vmem:[%s2258 + $0x8] sm:$0xff]
      %v2263 = vcombine.high %v2256, %v2256
      %2264 = vrot.lane.b32.xlu0 %v2256, 80
      %v2265 = vpop.permute.xlu0 %2264
      %2266 = vrot.lane.b32.xlu0 %v2263, 80
      %v2267 = vpop.permute.xlu0 %2266
      %2268 = vrot.lane.b32.xlu0 %v2257, 80
      %v2269 = vpop.permute.xlu0 %2268
      %vm2270 = vcmask 654336
      %v2271 = vsel %vm2270, %v2265, %v2267
      %v2272 = vsel %vm2270, %v2267, %v2269
      %v2274 = vsel %vm403, %v2259, 0
      %v2277 = vsel %vm403, %v2260, 0
      %v2279 = vsel %vm410, %v2271, 0
      %v2281 = vsel %vm410, %v2272, 0
      %2283 = vmatprep.subr.mxu0 %v2281
      %2284 = vmatpush1.msra.mxu0 %v2279
      %2285 = vmatprep.subr.mxu0 0.0
      %2286 = vmatpush1.msra.mxu0 0.0
      %2287 = vmatprep.subr.mxu0 0.0
      %2288 = vmatpush1.msra.mxu0 0.0
      %2289 = vmatprep.subr.mxu0 0.0
      %2290 = vmatpush1.msra.mxu0 0.0
      %2291 = vmatprep.subr.mxu0 0.0
      %2292 = vmatpush1.msra.mxu0 0.0
      %2293 = vmatprep.subr.mxu0 0.0
      %2294 = vmatpush1.msra.mxu0 0.0
      %2295 = vmatprep.subr.mxu0 0.0
      %2296 = vmatpush1.msra.mxu0 0.0
      %2297 = vmatprep.subr.mxu0 0.0
      %2298 = vmatpush1.msra.mxu0 0.0
      %2299 = vmatprep.subr.mxu0 0.0
      %2300 = vmatpush1.msra.mxu0 0.0
      %2301 = vmatprep.subr.mxu0 0.0
      %2302 = vmatpush1.msra.mxu0 0.0
      %2303 = vmatprep.subr.mxu0 0.0
      %2304 = vmatpush1.msra.mxu0 0.0
      %2305 = vmatprep.subr.mxu0 0.0
      %2306 = vmatpush1.msra.mxu0 0.0
      %2307 = vmatprep.subr.mxu0 0.0
      %2308 = vmatpush1.msra.mxu0 0.0
      %2309 = vmatprep.subr.mxu0 0.0
      %2310 = vmatpush1.msra.mxu0 0.0
      %2311 = vmatprep.subr.mxu0 0.0
      %2312 = vmatpush1.msra.mxu0 0.0
      %2313 = vmatprep.subr.mxu0 0.0
      %2314 = vmatpush1.msra.mxu0 0.0
      %2315 = vmatprep.subr.mxu0 0.0
      %2316 = vmatpush1.msra.mxu0 0.0
      %2317 = vmatprep.subr.mxu0 0.0
      %2318 = vmatpush1.msra.mxu0 0.0
      %2319 = vmatprep.subr.mxu0 0.0
      %2320 = vmatpush1.msra.mxu0 0.0
      %2321 = vmatprep.subr.mxu0 0.0
      %2322 = vmatpush1.msra.mxu0 0.0
      %2323 = vmatprep.subr.mxu0 0.0
      %2324 = vmatpush1.msra.mxu0 0.0
      %2325 = vmatprep.subr.mxu0 0.0
      %2326 = vmatpush1.msra.mxu0 0.0
      %2327 = vmatprep.subr.mxu0 0.0
      %2328 = vmatpush1.msra.mxu0 0.0
      %2329 = vmatprep.subr.mxu0 0.0
      %2330 = vmatpush1.msra.mxu0 0.0
      %2331 = vmatprep.subr.mxu0 0.0
      %2332 = vmatpush1.msra.mxu0 0.0
      %2333 = vmatprep.subr.mxu0 0.0
      %2334 = vmatpush1.msra.mxu0 0.0
      %2335 = vmatprep.subr.mxu0 0.0
      %2336 = vmatpush1.msra.mxu0 0.0
      %2337 = vmatprep.subr.mxu0 0.0
      %2338 = vmatpush1.msra.mxu0 0.0
      %2339 = vmatprep.subr.mxu0 0.0
      %2340 = vmatpush1.msra.mxu0 0.0
      %2341 = vmatprep.subr.mxu0 0.0
      %2342 = vmatpush1.msra.mxu0 0.0
      %2343 = vmatprep.subr.mxu0 0.0
      %2344 = vmatpush1.msra.mxu0 0.0
      %2345 = vmatprep.subr.mxu0 0.0
      %2346 = vmatpush1.msra.mxu0 0.0
      %2347 = vmatprep.mubr.f32.mxu0 0.0
      %2348 = vmatmul.mubr.f32.gmra.mrb[0].mxu0 %v2274
      %v2349 = vpop.f32.mrb[0].mxu0
      %v2350 = vadd.f32 0.0, %v2349
      %v2351 = vpop.f32.mrb[0].mxu0
      %v2352 = vadd.f32 0.0, %v2351
      %2353 = vmatprep.mubr.f32.mxu0 0.0
      %2354 = vmatmul.mubr.f32.gmra.mrb[0].mxu0 %v2277
      %v2355 = vpop.f32.mrb[0].mxu0
      %v2356 = vadd.f32 0.0, %v2355
      %v2357 = vpop.f32.mrb[0].mxu0
      %v2358 = vadd.f32 0.0, %v2357
      %2359 = vdwg.mxu0
      %v2360 = vadd.f32 %v2243, %v2350
      %v2361 = vadd.f32 %v2244, %v2352
      %v2362 = vadd.f32 %v2245, %v2356
      %v2363 = vadd.f32 %v2246, %v2358
      %v2364 = vld [vmem:[%s338] sm:$0xff]
      %v2365 = vld [vmem:[%s338 + $0x8] sm:$0xf]
      %2366 = vrot.lane.b32.xlu0 %v614, 49
      %v2367 = vpop.permute.xlu0 %2366
      %v2368 = vrot.slane %v2367, 4
      %vm2369 = vcmask 400384
      %v2370 = vsel %vm2369, %v2368, %v2367
      %v2373 = vmul.f32 %v2364, %v2370
      %v2374 = vmul.f32 %v2365, %v2368
      %s2375 = scalar_lea.vmem %s4, 256
      %v2376 = vld [vmem:[%s2375] sm:$0xff]
      %v2377 = vld [vmem:[%s2375 + $0x8] sm:$0xff]
      %v2380 = vcombine.high %v2373, %v2373
      %2381 = vrot.lane.b32.xlu0 %v2373, 79
      %v2382 = vpop.permute.xlu0 %2381
      %2383 = vrot.lane.b32.xlu0 %v2380, 79
      %v2384 = vpop.permute.xlu0 %2383
      %2385 = vrot.lane.b32.xlu0 %v2374, 79
      %v2386 = vpop.permute.xlu0 %2385
      %vm2387 = vcmask 646144
      %v2388 = vsel %vm2387, %v2382, %v2384
      %v2389 = vsel %vm2387, %v2384, %v2386
      %v2391 = vsel %vm403, %v2376, 0
      %v2394 = vsel %vm403, %v2377, 0
      %v2396 = vsel %vm410, %v2388, 0
      %v2398 = vsel %vm410, %v2389, 0
      %2400 = vmatprep.subr.mxu0 %v2398
      %2401 = vmatpush1.msra.mxu0 %v2396
      %2402 = vmatprep.subr.mxu0 0.0
      %2403 = vmatpush1.msra.mxu0 0.0
      %2404 = vmatprep.subr.mxu0 0.0
      %2405 = vmatpush1.msra.mxu0 0.0
      %2406 = vmatprep.subr.mxu0 0.0
      %2407 = vmatpush1.msra.mxu0 0.0
      %2408 = vmatprep.subr.mxu0 0.0
      %2409 = vmatpush1.msra.mxu0 0.0
      %2410 = vmatprep.subr.mxu0 0.0
      %2411 = vmatpush1.msra.mxu0 0.0
      %2412 = vmatprep.subr.mxu0 0.0
      %2413 = vmatpush1.msra.mxu0 0.0
      %2414 = vmatprep.subr.mxu0 0.0
      %2415 = vmatpush1.msra.mxu0 0.0
      %2416 = vmatprep.subr.mxu0 0.0
      %2417 = vmatpush1.msra.mxu0 0.0
      %2418 = vmatprep.subr.mxu0 0.0
      %2419 = vmatpush1.msra.mxu0 0.0
      %2420 = vmatprep.subr.mxu0 0.0
      %2421 = vmatpush1.msra.mxu0 0.0
      %2422 = vmatprep.subr.mxu0 0.0
      %2423 = vmatpush1.msra.mxu0 0.0
      %2424 = vmatprep.subr.mxu0 0.0
      %2425 = vmatpush1.msra.mxu0 0.0
      %2426 = vmatprep.subr.mxu0 0.0
      %2427 = vmatpush1.msra.mxu0 0.0
      %2428 = vmatprep.subr.mxu0 0.0
      %2429 = vmatpush1.msra.mxu0 0.0
      %2430 = vmatprep.subr.mxu0 0.0
      %2431 = vmatpush1.msra.mxu0 0.0
      %2432 = vmatprep.subr.mxu0 0.0
      %2433 = vmatpush1.msra.mxu0 0.0
      %2434 = vmatprep.subr.mxu0 0.0
      %2435 = vmatpush1.msra.mxu0 0.0
      %2436 = vmatprep.subr.mxu0 0.0
      %2437 = vmatpush1.msra.mxu0 0.0
      %2438 = vmatprep.subr.mxu0 0.0
      %2439 = vmatpush1.msra.mxu0 0.0
      %2440 = vmatprep.subr.mxu0 0.0
      %2441 = vmatpush1.msra.mxu0 0.0
      %2442 = vmatprep.subr.mxu0 0.0
      %2443 = vmatpush1.msra.mxu0 0.0
      %2444 = vmatprep.subr.mxu0 0.0
      %2445 = vmatpush1.msra.mxu0 0.0
      %2446 = vmatprep.subr.mxu0 0.0
      %2447 = vmatpush1.msra.mxu0 0.0
      %2448 = vmatprep.subr.mxu0 0.0
      %2449 = vmatpush1.msra.mxu0 0.0
      %2450 = vmatprep.subr.mxu0 0.0
      %2451 = vmatpush1.msra.mxu0 0.0
      %2452 = vmatprep.subr.mxu0 0.0
      %2453 = vmatpush1.msra.mxu0 0.0
      %2454 = vmatprep.subr.mxu0 0.0
      %2455 = vmatpush1.msra.mxu0 0.0
      %2456 = vmatprep.subr.mxu0 0.0
      %2457 = vmatpush1.msra.mxu0 0.0
      %2458 = vmatprep.subr.mxu0 0.0
      %2459 = vmatpush1.msra.mxu0 0.0
      %2460 = vmatprep.subr.mxu0 0.0
      %2461 = vmatpush1.msra.mxu0 0.0
      %2462 = vmatprep.subr.mxu0 0.0
      %2463 = vmatpush1.msra.mxu0 0.0
      %2464 = vmatprep.mubr.f32.mxu0 0.0
      %2465 = vmatmul.mubr.f32.gmra.mrb[0].mxu0 %v2391
      %v2466 = vpop.f32.mrb[0].mxu0
      %v2467 = vadd.f32 0.0, %v2466
      %v2468 = vpop.f32.mrb[0].mxu0
      %v2469 = vadd.f32 0.0, %v2468
      %2470 = vmatprep.mubr.f32.mxu0 0.0
      %2471 = vmatmul.mubr.f32.gmra.mrb[0].mxu0 %v2394
      %v2472 = vpop.f32.mrb[0].mxu0
      %v2473 = vadd.f32 0.0, %v2472
      %v2474 = vpop.f32.mrb[0].mxu0
      %v2475 = vadd.f32 0.0, %v2474
      %2476 = vdwg.mxu0
      %v2477 = vadd.f32 %v2360, %v2467
      %v2478 = vadd.f32 %v2361, %v2469
      %v2479 = vadd.f32 %v2362, %v2473
      %v2480 = vadd.f32 %v2363, %v2475
      %v2481 = vld [vmem:[%s338] sm:$0xff]
      %v2482 = vld [vmem:[%s338 + $0x8] sm:$0xf]
      %s2483 = scalar_lea.vmem %s4, 272
      %v2484 = vld [vmem:[%s2483] sm:$0xff]
      %v2485 = vld [vmem:[%s2483 + $0x8] sm:$0xff]
      %v2488 = vcombine.high %v2481, %v2481
      %2489 = vrot.lane.b32.xlu0 %v2481, 78
      %v2490 = vpop.permute.xlu0 %2489
      %2491 = vrot.lane.b32.xlu0 %v2488, 78
      %v2492 = vpop.permute.xlu0 %2491
      %2493 = vrot.lane.b32.xlu0 %v2482, 78
      %v2494 = vpop.permute.xlu0 %2493
      %vm2495 = vcmask 637952
      %v2496 = vsel %vm2495, %v2490, %v2492
      %v2497 = vsel %vm2495, %v2492, %v2494
      %v2499 = vsel %vm403, %v2484, 0
      %v2502 = vsel %vm403, %v2485, 0
      %v2504 = vsel %vm410, %v2496, 0
      %v2506 = vsel %vm410, %v2497, 0
      %2508 = vmatprep.subr.mxu0 %v2506
      %2509 = vmatpush1.msra.mxu0 %v2504
      %2510 = vmatprep.subr.mxu0 0.0
      %2511 = vmatpush1.msra.mxu0 0.0
      %2512 = vmatprep.subr.mxu0 0.0
      %2513 = vmatpush1.msra.mxu0 0.0
      %2514 = vmatprep.subr.mxu0 0.0
      %2515 = vmatpush1.msra.mxu0 0.0
      %2516 = vmatprep.subr.mxu0 0.0
      %2517 = vmatpush1.msra.mxu0 0.0
      %2518 = vmatprep.subr.mxu0 0.0
      %2519 = vmatpush1.msra.mxu0 0.0
      %2520 = vmatprep.subr.mxu0 0.0
      %2521 = vmatpush1.msra.mxu0 0.0
      %2522 = vmatprep.subr.mxu0 0.0
      %2523 = vmatpush1.msra.mxu0 0.0
      %2524 = vmatprep.subr.mxu0 0.0
      %2525 = vmatpush1.msra.mxu0 0.0
      %2526 = vmatprep.subr.mxu0 0.0
      %2527 = vmatpush1.msra.mxu0 0.0
      %2528 = vmatprep.subr.mxu0 0.0
      %2529 = vmatpush1.msra.mxu0 0.0
      %2530 = vmatprep.subr.mxu0 0.0
      %2531 = vmatpush1.msra.mxu0 0.0
      %2532 = vmatprep.subr.mxu0 0.0
      %2533 = vmatpush1.msra.mxu0 0.0
      %2534 = vmatprep.subr.mxu0 0.0
      %2535 = vmatpush1.msra.mxu0 0.0
      %2536 = vmatprep.subr.mxu0 0.0
      %2537 = vmatpush1.msra.mxu0 0.0
      %2538 = vmatprep.subr.mxu0 0.0
      %2539 = vmatpush1.msra.mxu0 0.0
      %2540 = vmatprep.subr.mxu0 0.0
      %2541 = vmatpush1.msra.mxu0 0.0
      %2542 = vmatprep.subr.mxu0 0.0
      %2543 = vmatpush1.msra.mxu0 0.0
      %2544 = vmatprep.subr.mxu0 0.0
      %2545 = vmatpush1.msra.mxu0 0.0
      %2546 = vmatprep.subr.mxu0 0.0
      %2547 = vmatpush1.msra.mxu0 0.0
      %2548 = vmatprep.subr.mxu0 0.0
      %2549 = vmatpush1.msra.mxu0 0.0
      %2550 = vmatprep.subr.mxu0 0.0
      %2551 = vmatpush1.msra.mxu0 0.0
      %2552 = vmatprep.subr.mxu0 0.0
      %2553 = vmatpush1.msra.mxu0 0.0
      %2554 = vmatprep.subr.mxu0 0.0
      %2555 = vmatpush1.msra.mxu0 0.0
      %2556 = vmatprep.subr.mxu0 0.0
      %2557 = vmatpush1.msra.mxu0 0.0
      %2558 = vmatprep.subr.mxu0 0.0
      %2559 = vmatpush1.msra.mxu0 0.0
      %2560 = vmatprep.subr.mxu0 0.0
      %2561 = vmatpush1.msra.mxu0 0.0
      %2562 = vmatprep.subr.mxu0 0.0
      %2563 = vmatpush1.msra.mxu0 0.0
      %2564 = vmatprep.subr.mxu0 0.0
      %2565 = vmatpush1.msra.mxu0 0.0
      %2566 = vmatprep.subr.mxu0 0.0
      %2567 = vmatpush1.msra.mxu0 0.0
      %2568 = vmatprep.subr.mxu0 0.0
      %2569 = vmatpush1.msra.mxu0 0.0
      %2570 = vmatprep.subr.mxu0 0.0
      %2571 = vmatpush1.msra.mxu0 0.0
      %2572 = vmatprep.mubr.f32.mxu0 0.0
      %2573 = vmatmul.mubr.f32.gmra.mrb[0].mxu0 %v2499
      %v2574 = vpop.f32.mrb[0].mxu0
      %v2575 = vadd.f32 0.0, %v2574
      %v2576 = vpop.f32.mrb[0].mxu0
      %v2577 = vadd.f32 0.0, %v2576
      %2578 = vmatprep.mubr.f32.mxu0 0.0
      %2579 = vmatmul.mubr.f32.gmra.mrb[0].mxu0 %v2502
      %v2580 = vpop.f32.mrb[0].mxu0
      %v2581 = vadd.f32 0.0, %v2580
      %v2582 = vpop.f32.mrb[0].mxu0
      %v2583 = vadd.f32 0.0, %v2582
      %2584 = vdwg.mxu0
      %v2585 = vadd.f32 %v2477, %v2575
      %v2586 = vadd.f32 %v2478, %v2577
      %v2587 = vadd.f32 %v2479, %v2581
      %v2588 = vadd.f32 %v2480, %v2583
      %v2589 = vld [vmem:[%s338] sm:$0xff]
      %v2590 = vld [vmem:[%s338 + $0x8] sm:$0xf]
      %2591 = vrot.lane.b32.xlu0 %v851, 51
      %v2592 = vpop.permute.xlu0 %2591
      %v2593 = vrot.slane %v2592, 4
      %vm2594 = vcmask 416768
      %v2595 = vsel %vm2594, %v2593, %v2592
      %v2598 = vmul.f32 %v2589, %v2595
      %v2599 = vmul.f32 %v2590, %v2593
      %s2600 = scalar_lea.vmem %s4, 288
      %v2601 = vld [vmem:[%s2600] sm:$0xff]
      %v2602 = vld [vmem:[%s2600 + $0x8] sm:$0xff]
      %v2605 = vcombine.high %v2598, %v2598
      %2606 = vrot.lane.b32.xlu0 %v2598, 77
      %v2607 = vpop.permute.xlu0 %2606
      %2608 = vrot.lane.b32.xlu0 %v2605, 77
      %v2609 = vpop.permute.xlu0 %2608
      %2610 = vrot.lane.b32.xlu0 %v2599, 77
      %v2611 = vpop.permute.xlu0 %2610
      %vm2612 = vcmask 629760
      %v2613 = vsel %vm2612, %v2607, %v2609
      %v2614 = vsel %vm2612, %v2609, %v2611
      %v2616 = vsel %vm403, %v2601, 0
      %v2619 = vsel %vm403, %v2602, 0
      %v2621 = vsel %vm410, %v2613, 0
      %v2623 = vsel %vm410, %v2614, 0
      %2625 = vmatprep.subr.mxu0 %v2623
      %2626 = vmatpush1.msra.mxu0 %v2621
      %2627 = vmatprep.subr.mxu0 0.0
      %2628 = vmatpush1.msra.mxu0 0.0
      %2629 = vmatprep.subr.mxu0 0.0
      %2630 = vmatpush1.msra.mxu0 0.0
      %2631 = vmatprep.subr.mxu0 0.0
      %2632 = vmatpush1.msra.mxu0 0.0
      %2633 = vmatprep.subr.mxu0 0.0
      %2634 = vmatpush1.msra.mxu0 0.0
      %2635 = vmatprep.subr.mxu0 0.0
      %2636 = vmatpush1.msra.mxu0 0.0
      %2637 = vmatprep.subr.mxu0 0.0
      %2638 = vmatpush1.msra.mxu0 0.0
      %2639 = vmatprep.subr.mxu0 0.0
      %2640 = vmatpush1.msra.mxu0 0.0
      %2641 = vmatprep.subr.mxu0 0.0
      %2642 = vmatpush1.msra.mxu0 0.0
      %2643 = vmatprep.subr.mxu0 0.0
      %2644 = vmatpush1.msra.mxu0 0.0
      %2645 = vmatprep.subr.mxu0 0.0
      %2646 = vmatpush1.msra.mxu0 0.0
      %2647 = vmatprep.subr.mxu0 0.0
      %2648 = vmatpush1.msra.mxu0 0.0
      %2649 = vmatprep.subr.mxu0 0.0
      %2650 = vmatpush1.msra.mxu0 0.0
      %2651 = vmatprep.subr.mxu0 0.0
      %2652 = vmatpush1.msra.mxu0 0.0
      %2653 = vmatprep.subr.mxu0 0.0
      %2654 = vmatpush1.msra.mxu0 0.0
      %2655 = vmatprep.subr.mxu0 0.0
      %2656 = vmatpush1.msra.mxu0 0.0
      %2657 = vmatprep.subr.mxu0 0.0
      %2658 = vmatpush1.msra.mxu0 0.0
      %2659 = vmatprep.subr.mxu0 0.0
      %2660 = vmatpush1.msra.mxu0 0.0
      %2661 = vmatprep.subr.mxu0 0.0
      %2662 = vmatpush1.msra.mxu0 0.0
      %2663 = vmatprep.subr.mxu0 0.0
      %2664 = vmatpush1.msra.mxu0 0.0
      %2665 = vmatprep.subr.mxu0 0.0
      %2666 = vmatpush1.msra.mxu0 0.0
      %2667 = vmatprep.subr.mxu0 0.0
      %2668 = vmatpush1.msra.mxu0 0.0
      %2669 = vmatprep.subr.mxu0 0.0
      %2670 = vmatpush1.msra.mxu0 0.0
      %2671 = vmatprep.subr.mxu0 0.0
      %2672 = vmatpush1.msra.mxu0 0.0
      %2673 = vmatprep.subr.mxu0 0.0
      %2674 = vmatpush1.msra.mxu0 0.0
      %2675 = vmatprep.subr.mxu0 0.0
      %2676 = vmatpush1.msra.mxu0 0.0
      %2677 = vmatprep.subr.mxu0 0.0
      %2678 = vmatpush1.msra.mxu0 0.0
      %2679 = vmatprep.subr.mxu0 0.0
      %2680 = vmatpush1.msra.mxu0 0.0
      %2681 = vmatprep.subr.mxu0 0.0
      %2682 = vmatpush1.msra.mxu0 0.0
      %2683 = vmatprep.subr.mxu0 0.0
      %2684 = vmatpush1.msra.mxu0 0.0
      %2685 = vmatprep.subr.mxu0 0.0
      %2686 = vmatpush1.msra.mxu0 0.0
      %2687 = vmatprep.subr.mxu0 0.0
      %2688 = vmatpush1.msra.mxu0 0.0
      %2689 = vmatprep.mubr.f32.mxu0 0.0
      %2690 = vmatmul.mubr.f32.gmra.mrb[0].mxu0 %v2616
      %v2691 = vpop.f32.mrb[0].mxu0
      %v2692 = vadd.f32 0.0, %v2691
      %v2693 = vpop.f32.mrb[0].mxu0
      %v2694 = vadd.f32 0.0, %v2693
      %2695 = vmatprep.mubr.f32.mxu0 0.0
      %2696 = vmatmul.mubr.f32.gmra.mrb[0].mxu0 %v2619
      %v2697 = vpop.f32.mrb[0].mxu0
      %v2698 = vadd.f32 0.0, %v2697
      %v2699 = vpop.f32.mrb[0].mxu0
      %v2700 = vadd.f32 0.0, %v2699
      %2701 = vdwg.mxu0
      %v2702 = vadd.f32 %v2585, %v2692
      %v2703 = vadd.f32 %v2586, %v2694
      %v2704 = vadd.f32 %v2587, %v2698
      %v2705 = vadd.f32 %v2588, %v2700
      %v2706 = vld [vmem:[%s338] sm:$0xff]
      %v2707 = vld [vmem:[%s338 + $0x8] sm:$0xf]
      %2708 = vrot.lane.b32.xlu0 %v980, 52
      %v2709 = vpop.permute.xlu0 %2708
      %v2710 = vrot.slane %v2709, 4
      %vm2711 = vcmask 424960
      %v2712 = vsel %vm2711, %v2710, %v2709
      %v2715 = vmul.f32 %v2706, %v2712
      %v2716 = vmul.f32 %v2707, %v2710
      %s2717 = scalar_lea.vmem %s4, 304
      %v2718 = vld [vmem:[%s2717] sm:$0xff]
      %v2719 = vld [vmem:[%s2717 + $0x8] sm:$0xff]
      %v2722 = vcombine.high %v2715, %v2715
      %2723 = vrot.lane.b32.xlu0 %v2715, 76
      %v2724 = vpop.permute.xlu0 %2723
      %2725 = vrot.lane.b32.xlu0 %v2722, 76
      %v2726 = vpop.permute.xlu0 %2725
      %2727 = vrot.lane.b32.xlu0 %v2716, 76
      %v2728 = vpop.permute.xlu0 %2727
      %vm2729 = vcmask 621568
      %v2730 = vsel %vm2729, %v2724, %v2726
      %v2731 = vsel %vm2729, %v2726, %v2728
      %v2733 = vsel %vm403, %v2718, 0
      %v2736 = vsel %vm403, %v2719, 0
      %v2738 = vsel %vm410, %v2730, 0
      %v2740 = vsel %vm410, %v2731, 0
      %2742 = vmatprep.subr.mxu0 %v2740
      %2743 = vmatpush1.msra.mxu0 %v2738
      %2744 = vmatprep.subr.mxu0 0.0
      %2745 = vmatpush1.msra.mxu0 0.0
      %2746 = vmatprep.subr.mxu0 0.0
      %2747 = vmatpush1.msra.mxu0 0.0
      %2748 = vmatprep.subr.mxu0 0.0
      %2749 = vmatpush1.msra.mxu0 0.0
      %2750 = vmatprep.subr.mxu0 0.0
      %2751 = vmatpush1.msra.mxu0 0.0
      %2752 = vmatprep.subr.mxu0 0.0
      %2753 = vmatpush1.msra.mxu0 0.0
      %2754 = vmatprep.subr.mxu0 0.0
      %2755 = vmatpush1.msra.mxu0 0.0
      %2756 = vmatprep.subr.mxu0 0.0
      %2757 = vmatpush1.msra.mxu0 0.0
      %2758 = vmatprep.subr.mxu0 0.0
      %2759 = vmatpush1.msra.mxu0 0.0
      %2760 = vmatprep.subr.mxu0 0.0
      %2761 = vmatpush1.msra.mxu0 0.0
      %2762 = vmatprep.subr.mxu0 0.0
      %2763 = vmatpush1.msra.mxu0 0.0
      %2764 = vmatprep.subr.mxu0 0.0
      %2765 = vmatpush1.msra.mxu0 0.0
      %2766 = vmatprep.subr.mxu0 0.0
      %2767 = vmatpush1.msra.mxu0 0.0
      %2768 = vmatprep.subr.mxu0 0.0
      %2769 = vmatpush1.msra.mxu0 0.0
      %2770 = vmatprep.subr.mxu0 0.0
      %2771 = vmatpush1.msra.mxu0 0.0
      %2772 = vmatprep.subr.mxu0 0.0
      %2773 = vmatpush1.msra.mxu0 0.0
      %2774 = vmatprep.subr.mxu0 0.0
      %2775 = vmatpush1.msra.mxu0 0.0
      %2776 = vmatprep.subr.mxu0 0.0
      %2777 = vmatpush1.msra.mxu0 0.0
      %2778 = vmatprep.subr.mxu0 0.0
      %2779 = vmatpush1.msra.mxu0 0.0
      %2780 = vmatprep.subr.mxu0 0.0
      %2781 = vmatpush1.msra.mxu0 0.0
      %2782 = vmatprep.subr.mxu0 0.0
      %2783 = vmatpush1.msra.mxu0 0.0
      %2784 = vmatprep.subr.mxu0 0.0
      %2785 = vmatpush1.msra.mxu0 0.0
      %2786 = vmatprep.subr.mxu0 0.0
      %2787 = vmatpush1.msra.mxu0 0.0
      %2788 = vmatprep.subr.mxu0 0.0
      %2789 = vmatpush1.msra.mxu0 0.0
      %2790 = vmatprep.subr.mxu0 0.0
      %2791 = vmatpush1.msra.mxu0 0.0
      %2792 = vmatprep.subr.mxu0 0.0
      %2793 = vmatpush1.msra.mxu0 0.0
      %2794 = vmatprep.subr.mxu0 0.0
      %2795 = vmatpush1.msra.mxu0 0.0
      %2796 = vmatprep.subr.mxu0 0.0
      %2797 = vmatpush1.msra.mxu0 0.0
      %2798 = vmatprep.subr.mxu0 0.0
      %2799 = vmatpush1.msra.mxu0 0.0
      %2800 = vmatprep.subr.mxu0 0.0
      %2801 = vmatpush1.msra.mxu0 0.0
      %2802 = vmatprep.subr.mxu0 0.0
      %2803 = vmatpush1.msra.mxu0 0.0
      %2804 = vmatprep.subr.mxu0 0.0
      %2805 = vmatpush1.msra.mxu0 0.0
      %2806 = vmatprep.mubr.f32.mxu0 0.0
      %2807 = vmatmul.mubr.f32.gmra.mrb[0].mxu0 %v2733
      %v2808 = vpop.f32.mrb[0].mxu0
      %v2809 = vadd.f32 0.0, %v2808
      %v2810 = vpop.f32.mrb[0].mxu0
      %v2811 = vadd.f32 0.0, %v2810
      %2812 = vmatprep.mubr.f32.mxu0 0.0
      %2813 = vmatmul.mubr.f32.gmra.mrb[0].mxu0 %v2736
      %v2814 = vpop.f32.mrb[0].mxu0
      %v2815 = vadd.f32 0.0, %v2814
      %v2816 = vpop.f32.mrb[0].mxu0
      %v2817 = vadd.f32 0.0, %v2816
      %2818 = vdwg.mxu0
      %v2819 = vadd.f32 %v2702, %v2809
      %v2820 = vadd.f32 %v2703, %v2811
      %v2821 = vadd.f32 %v2704, %v2815
      %v2822 = vadd.f32 %v2705, %v2817
      %v2823 = vld [vmem:[%s338] sm:$0xff]
      %v2824 = vld [vmem:[%s338 + $0x8] sm:$0xf]
      %2825 = vrot.lane.b32.xlu0 %v503, 64
      %v2826 = vpop.permute.xlu0 %2825
      %v2827 = vrot.slane %v2826, 4
      %vm2828 = vcmask 523264
      %v2829 = vsel %vm2828, %v2827, %v2826
      %v2832 = vmul.f32 %v2823, %v2829
      %v2833 = vmul.f32 %v2824, %v2827
      %s2834 = scalar_lea.vmem %s4, 320
      %v2835 = vld [vmem:[%s2834] sm:$0xff]
      %v2836 = vld [vmem:[%s2834 + $0x8] sm:$0xff]
      %v2839 = vcombine.high %v2832, %v2832
      %2840 = vrot.lane.b32.xlu0 %v2832, 64
      %v2841 = vpop.permute.xlu0 %2840
      %2842 = vrot.lane.b32.xlu0 %v2839, 64
      %v2843 = vpop.permute.xlu0 %2842
      %2844 = vrot.lane.b32.xlu0 %v2833, 64
      %v2845 = vpop.permute.xlu0 %2844
      %v2846 = vsel %vm2828, %v2841, %v2843
      %v2847 = vsel %vm2828, %v2843, %v2845
      %v2849 = vsel %vm403, %v2835, 0
      %v2852 = vsel %vm403, %v2836, 0
      %v2854 = vsel %vm410, %v2846, 0
      %v2856 = vsel %vm410, %v2847, 0
      %2858 = vmatprep.subr.mxu0 %v2856
      %2859 = vmatpush1.msra.mxu0 %v2854
      %2860 = vmatprep.subr.mxu0 0.0
      %2861 = vmatpush1.msra.mxu0 0.0
      %2862 = vmatprep.subr.mxu0 0.0
      %2863 = vmatpush1.msra.mxu0 0.0
      %2864 = vmatprep.subr.mxu0 0.0
      %2865 = vmatpush1.msra.mxu0 0.0
      %2866 = vmatprep.subr.mxu0 0.0
      %2867 = vmatpush1.msra.mxu0 0.0
      %2868 = vmatprep.subr.mxu0 0.0
      %2869 = vmatpush1.msra.mxu0 0.0
      %2870 = vmatprep.subr.mxu0 0.0
      %2871 = vmatpush1.msra.mxu0 0.0
      %2872 = vmatprep.subr.mxu0 0.0
      %2873 = vmatpush1.msra.mxu0 0.0
      %2874 = vmatprep.subr.mxu0 0.0
      %2875 = vmatpush1.msra.mxu0 0.0
      %2876 = vmatprep.subr.mxu0 0.0
      %2877 = vmatpush1.msra.mxu0 0.0
      %2878 = vmatprep.subr.mxu0 0.0
      %2879 = vmatpush1.msra.mxu0 0.0
      %2880 = vmatprep.subr.mxu0 0.0
      %2881 = vmatpush1.msra.mxu0 0.0
      %2882 = vmatprep.subr.mxu0 0.0
      %2883 = vmatpush1.msra.mxu0 0.0
      %2884 = vmatprep.subr.mxu0 0.0
      %2885 = vmatpush1.msra.mxu0 0.0
      %2886 = vmatprep.subr.mxu0 0.0
      %2887 = vmatpush1.msra.mxu0 0.0
      %2888 = vmatprep.subr.mxu0 0.0
      %2889 = vmatpush1.msra.mxu0 0.0
      %2890 = vmatprep.subr.mxu0 0.0
      %2891 = vmatpush1.msra.mxu0 0.0
      %2892 = vmatprep.subr.mxu0 0.0
      %2893 = vmatpush1.msra.mxu0 0.0
      %2894 = vmatprep.subr.mxu0 0.0
      %2895 = vmatpush1.msra.mxu0 0.0
      %2896 = vmatprep.subr.mxu0 0.0
      %2897 = vmatpush1.msra.mxu0 0.0
      %2898 = vmatprep.subr.mxu0 0.0
      %2899 = vmatpush1.msra.mxu0 0.0
      %2900 = vmatprep.subr.mxu0 0.0
      %2901 = vmatpush1.msra.mxu0 0.0
      %2902 = vmatprep.subr.mxu0 0.0
      %2903 = vmatpush1.msra.mxu0 0.0
      %2904 = vmatprep.subr.mxu0 0.0
      %2905 = vmatpush1.msra.mxu0 0.0
      %2906 = vmatprep.subr.mxu0 0.0
      %2907 = vmatpush1.msra.mxu0 0.0
      %2908 = vmatprep.subr.mxu0 0.0
      %2909 = vmatpush1.msra.mxu0 0.0
      %2910 = vmatprep.subr.mxu0 0.0
      %2911 = vmatpush1.msra.mxu0 0.0
      %2912 = vmatprep.subr.mxu0 0.0
      %2913 = vmatpush1.msra.mxu0 0.0
      %2914 = vmatprep.subr.mxu0 0.0
      %2915 = vmatpush1.msra.mxu0 0.0
      %2916 = vmatprep.subr.mxu0 0.0
      %2917 = vmatpush1.msra.mxu0 0.0
      %2918 = vmatprep.subr.mxu0 0.0
      %2919 = vmatpush1.msra.mxu0 0.0
      %2920 = vmatprep.subr.mxu0 0.0
      %2921 = vmatpush1.msra.mxu0 0.0
      %2922 = vmatprep.mubr.f32.mxu0 0.0
      %2923 = vmatmul.mubr.f32.gmra.mrb[0].mxu0 %v2849
      %v2924 = vpop.f32.mrb[0].mxu0
      %v2925 = vadd.f32 0.0, %v2924
      %v2926 = vpop.f32.mrb[0].mxu0
      %v2927 = vadd.f32 0.0, %v2926
      %2928 = vmatprep.mubr.f32.mxu0 0.0
      %2929 = vmatmul.mubr.f32.gmra.mrb[0].mxu0 %v2852
      %v2930 = vpop.f32.mrb[0].mxu0
      %v2931 = vadd.f32 0.0, %v2930
      %v2932 = vpop.f32.mrb[0].mxu0
      %v2933 = vadd.f32 0.0, %v2932
      %2934 = vdwg.mxu0
      %v2935 = vadd.f32 %v2819, %v2925
      %v2936 = vadd.f32 %v2820, %v2927
      %v2937 = vadd.f32 %v2821, %v2931
      %v2938 = vadd.f32 %v2822, %v2933
      %v2939 = vld [vmem:[%s338] sm:$0xff]
      %v2940 = vld [vmem:[%s338 + $0x8] sm:$0xf]
      %2941 = vrot.lane.b32.xlu0 %v614, 65
      %v2942 = vpop.permute.xlu0 %2941
      %v2943 = vrot.slane %v2942, 4
      %vm2944 = vcmask 531456
      %v2945 = vsel %vm2944, %v2943, %v2942
      %v2948 = vmul.f32 %v2939, %v2945
      %v2949 = vmul.f32 %v2940, %v2943
      %s2950 = scalar_lea.vmem %s4, 336
      %v2951 = vld [vmem:[%s2950] sm:$0xff]
      %v2952 = vld [vmem:[%s2950 + $0x8] sm:$0xff]
      %v2955 = vcombine.high %v2948, %v2948
      %2956 = vrot.lane.b32.xlu0 %v2948, 63
      %v2957 = vpop.permute.xlu0 %2956
      %2958 = vrot.lane.b32.xlu0 %v2955, 63
      %v2959 = vpop.permute.xlu0 %2958
      %2960 = vrot.lane.b32.xlu0 %v2949, 63
      %v2961 = vpop.permute.xlu0 %2960
      %vm2962 = vcmask 515072
      %v2963 = vsel %vm2962, %v2957, %v2959
      %v2964 = vsel %vm2962, %v2959, %v2961
      %v2966 = vsel %vm403, %v2951, 0
      %v2969 = vsel %vm403, %v2952, 0
      %v2971 = vsel %vm410, %v2963, 0
      %v2973 = vsel %vm410, %v2964, 0
      %2975 = vmatprep.subr.mxu0 %v2973
      %2976 = vmatpush1.msra.mxu0 %v2971
      %2977 = vmatprep.subr.mxu0 0.0
      %2978 = vmatpush1.msra.mxu0 0.0
      %2979 = vmatprep.subr.mxu0 0.0
      %2980 = vmatpush1.msra.mxu0 0.0
      %2981 = vmatprep.subr.mxu0 0.0
      %2982 = vmatpush1.msra.mxu0 0.0
      %2983 = vmatprep.subr.mxu0 0.0
      %2984 = vmatpush1.msra.mxu0 0.0
      %2985 = vmatprep.subr.mxu0 0.0
      %2986 = vmatpush1.msra.mxu0 0.0
      %2987 = vmatprep.subr.mxu0 0.0
      %2988 = vmatpush1.msra.mxu0 0.0
      %2989 = vmatprep.subr.mxu0 0.0
      %2990 = vmatpush1.msra.mxu0 0.0
      %2991 = vmatprep.subr.mxu0 0.0
      %2992 = vmatpush1.msra.mxu0 0.0
      %2993 = vmatprep.subr.mxu0 0.0
      %2994 = vmatpush1.msra.mxu0 0.0
      %2995 = vmatprep.subr.mxu0 0.0
      %2996 = vmatpush1.msra.mxu0 0.0
      %2997 = vmatprep.subr.mxu0 0.0
      %2998 = vmatpush1.msra.mxu0 0.0
      %2999 = vmatprep.subr.mxu0 0.0
      %3000 = vmatpush1.msra.mxu0 0.0
      %3001 = vmatprep.subr.mxu0 0.0
      %3002 = vmatpush1.msra.mxu0 0.0
      %3003 = vmatprep.subr.mxu0 0.0
      %3004 = vmatpush1.msra.mxu0 0.0
      %3005 = vmatprep.subr.mxu0 0.0
      %3006 = vmatpush1.msra.mxu0 0.0
      %3007 = vmatprep.subr.mxu0 0.0
      %3008 = vmatpush1.msra.mxu0 0.0
      %3009 = vmatprep.subr.mxu0 0.0
      %3010 = vmatpush1.msra.mxu0 0.0
      %3011 = vmatprep.subr.mxu0 0.0
      %3012 = vmatpush1.msra.mxu0 0.0
      %3013 = vmatprep.subr.mxu0 0.0
      %3014 = vmatpush1.msra.mxu0 0.0
      %3015 = vmatprep.subr.mxu0 0.0
      %3016 = vmatpush1.msra.mxu0 0.0
      %3017 = vmatprep.subr.mxu0 0.0
      %3018 = vmatpush1.msra.mxu0 0.0
      %3019 = vmatprep.subr.mxu0 0.0
      %3020 = vmatpush1.msra.mxu0 0.0
      %3021 = vmatprep.subr.mxu0 0.0
      %3022 = vmatpush1.msra.mxu0 0.0
      %3023 = vmatprep.subr.mxu0 0.0
      %3024 = vmatpush1.msra.mxu0 0.0
      %3025 = vmatprep.subr.mxu0 0.0
      %3026 = vmatpush1.msra.mxu0 0.0
      %3027 = vmatprep.subr.mxu0 0.0
      %3028 = vmatpush1.msra.mxu0 0.0
      %3029 = vmatprep.subr.mxu0 0.0
      %3030 = vmatpush1.msra.mxu0 0.0
      %3031 = vmatprep.subr.mxu0 0.0
      %3032 = vmatpush1.msra.mxu0 0.0
      %3033 = vmatprep.subr.mxu0 0.0
      %3034 = vmatpush1.msra.mxu0 0.0
      %3035 = vmatprep.subr.mxu0 0.0
      %3036 = vmatpush1.msra.mxu0 0.0
      %3037 = vmatprep.subr.mxu0 0.0
      %3038 = vmatpush1.msra.mxu0 0.0
      %3039 = vmatprep.mubr.f32.mxu0 0.0
      %3040 = vmatmul.mubr.f32.gmra.mrb[0].mxu0 %v2966
      %v3041 = vpop.f32.mrb[0].mxu0
      %v3042 = vadd.f32 0.0, %v3041
      %v3043 = vpop.f32.mrb[0].mxu0
      %v3044 = vadd.f32 0.0, %v3043
      %3045 = vmatprep.mubr.f32.mxu0 0.0
      %3046 = vmatmul.mubr.f32.gmra.mrb[0].mxu0 %v2969
      %v3047 = vpop.f32.mrb[0].mxu0
      %v3048 = vadd.f32 0.0, %v3047
      %v3049 = vpop.f32.mrb[0].mxu0
      %v3050 = vadd.f32 0.0, %v3049
      %3051 = vdwg.mxu0
      %v3052 = vadd.f32 %v2935, %v3042
      %v3053 = vadd.f32 %v2936, %v3044
      %v3054 = vadd.f32 %v2937, %v3048
      %v3055 = vadd.f32 %v2938, %v3050
      %v3056 = vld [vmem:[%s338] sm:$0xff]
      %v3057 = vld [vmem:[%s338 + $0x8] sm:$0xf]
      %s3058 = scalar_lea.vmem %s4, 352
      %v3059 = vld [vmem:[%s3058] sm:$0xff]
      %v3060 = vld [vmem:[%s3058 + $0x8] sm:$0xff]
      %v3063 = vcombine.high %v3056, %v3056
      %3064 = vrot.lane.b32.xlu0 %v3056, 62
      %v3065 = vpop.permute.xlu0 %3064
      %3066 = vrot.lane.b32.xlu0 %v3063, 62
      %v3067 = vpop.permute.xlu0 %3066
      %3068 = vrot.lane.b32.xlu0 %v3057, 62
      %v3069 = vpop.permute.xlu0 %3068
      %vm3070 = vcmask 506880
      %v3071 = vsel %vm3070, %v3065, %v3067
      %v3072 = vsel %vm3070, %v3067, %v3069
      %v3074 = vsel %vm403, %v3059, 0
      %v3077 = vsel %vm403, %v3060, 0
      %v3079 = vsel %vm410, %v3071, 0
      %v3081 = vsel %vm410, %v3072, 0
      %3083 = vmatprep.subr.mxu0 %v3081
      %3084 = vmatpush1.msra.mxu0 %v3079
      %3085 = vmatprep.subr.mxu0 0.0
      %3086 = vmatpush1.msra.mxu0 0.0
      %3087 = vmatprep.subr.mxu0 0.0
      %3088 = vmatpush1.msra.mxu0 0.0
      %3089 = vmatprep.subr.mxu0 0.0
      %3090 = vmatpush1.msra.mxu0 0.0
      %3091 = vmatprep.subr.mxu0 0.0
      %3092 = vmatpush1.msra.mxu0 0.0
      %3093 = vmatprep.subr.mxu0 0.0
      %3094 = vmatpush1.msra.mxu0 0.0
      %3095 = vmatprep.subr.mxu0 0.0
      %3096 = vmatpush1.msra.mxu0 0.0
      %3097 = vmatprep.subr.mxu0 0.0
      %3098 = vmatpush1.msra.mxu0 0.0
      %3099 = vmatprep.subr.mxu0 0.0
      %3100 = vmatpush1.msra.mxu0 0.0
      %3101 = vmatprep.subr.mxu0 0.0
      %3102 = vmatpush1.msra.mxu0 0.0
      %3103 = vmatprep.subr.mxu0 0.0
      %3104 = vmatpush1.msra.mxu0 0.0
      %3105 = vmatprep.subr.mxu0 0.0
      %3106 = vmatpush1.msra.mxu0 0.0
      %3107 = vmatprep.subr.mxu0 0.0
      %3108 = vmatpush1.msra.mxu0 0.0
      %3109 = vmatprep.subr.mxu0 0.0
      %3110 = vmatpush1.msra.mxu0 0.0
      %3111 = vmatprep.subr.mxu0 0.0
      %3112 = vmatpush1.msra.mxu0 0.0
      %3113 = vmatprep.subr.mxu0 0.0
      %3114 = vmatpush1.msra.mxu0 0.0
      %3115 = vmatprep.subr.mxu0 0.0
      %3116 = vmatpush1.msra.mxu0 0.0
      %3117 = vmatprep.subr.mxu0 0.0
      %3118 = vmatpush1.msra.mxu0 0.0
      %3119 = vmatprep.subr.mxu0 0.0
      %3120 = vmatpush1.msra.mxu0 0.0
      %3121 = vmatprep.subr.mxu0 0.0
      %3122 = vmatpush1.msra.mxu0 0.0
      %3123 = vmatprep.subr.mxu0 0.0
      %3124 = vmatpush1.msra.mxu0 0.0
      %3125 = vmatprep.subr.mxu0 0.0
      %3126 = vmatpush1.msra.mxu0 0.0
      %3127 = vmatprep.subr.mxu0 0.0
      %3128 = vmatpush1.msra.mxu0 0.0
      %3129 = vmatprep.subr.mxu0 0.0
      %3130 = vmatpush1.msra.mxu0 0.0
      %3131 = vmatprep.subr.mxu0 0.0
      %3132 = vmatpush1.msra.mxu0 0.0
      %3133 = vmatprep.subr.mxu0 0.0
      %3134 = vmatpush1.msra.mxu0 0.0
      %3135 = vmatprep.subr.mxu0 0.0
      %3136 = vmatpush1.msra.mxu0 0.0
      %3137 = vmatprep.subr.mxu0 0.0
      %3138 = vmatpush1.msra.mxu0 0.0
      %3139 = vmatprep.subr.mxu0 0.0
      %3140 = vmatpush1.msra.mxu0 0.0
      %3141 = vmatprep.subr.mxu0 0.0
      %3142 = vmatpush1.msra.mxu0 0.0
      %3143 = vmatprep.subr.mxu0 0.0
      %3144 = vmatpush1.msra.mxu0 0.0
      %3145 = vmatprep.subr.mxu0 0.0
      %3146 = vmatpush1.msra.mxu0 0.0
      %3147 = vmatprep.mubr.f32.mxu0 0.0
      %3148 = vmatmul.mubr.f32.gmra.mrb[0].mxu0 %v3074
      %v3149 = vpop.f32.mrb[0].mxu0
      %v3150 = vadd.f32 0.0, %v3149
      %v3151 = vpop.f32.mrb[0].mxu0
      %v3152 = vadd.f32 0.0, %v3151
      %3153 = vmatprep.mubr.f32.mxu0 0.0
      %3154 = vmatmul.mubr.f32.gmra.mrb[0].mxu0 %v3077
      %v3155 = vpop.f32.mrb[0].mxu0
      %v3156 = vadd.f32 0.0, %v3155
      %v3157 = vpop.f32.mrb[0].mxu0
      %v3158 = vadd.f32 0.0, %v3157
      %3159 = vdwg.mxu0
      %v3160 = vadd.f32 %v3052, %v3150
      %v3161 = vadd.f32 %v3053, %v3152
      %v3162 = vadd.f32 %v3054, %v3156
      %v3163 = vadd.f32 %v3055, %v3158
      %v3164 = vld [vmem:[%s338] sm:$0xff]
      %v3165 = vld [vmem:[%s338 + $0x8] sm:$0xf]
      %3166 = vrot.lane.b32.xlu0 %v851, 67
      %v3167 = vpop.permute.xlu0 %3166
      %v3168 = vrot.slane %v3167, 4
      %vm3169 = vcmask 547840
      %v3170 = vsel %vm3169, %v3168, %v3167
      %v3173 = vmul.f32 %v3164, %v3170
      %v3174 = vmul.f32 %v3165, %v3168
      %s3175 = scalar_lea.vmem %s4, 368
      %v3176 = vld [vmem:[%s3175] sm:$0xff]
      %v3177 = vld [vmem:[%s3175 + $0x8] sm:$0xff]
      %v3180 = vcombine.high %v3173, %v3173
      %3181 = vrot.lane.b32.xlu0 %v3173, 61
      %v3182 = vpop.permute.xlu0 %3181
      %3183 = vrot.lane.b32.xlu0 %v3180, 61
      %v3184 = vpop.permute.xlu0 %3183
      %3185 = vrot.lane.b32.xlu0 %v3174, 61
      %v3186 = vpop.permute.xlu0 %3185
      %vm3187 = vcmask 498688
      %v3188 = vsel %vm3187, %v3182, %v3184
      %v3189 = vsel %vm3187, %v3184, %v3186
      %v3191 = vsel %vm403, %v3176, 0
      %v3194 = vsel %vm403, %v3177, 0
      %v3196 = vsel %vm410, %v3188, 0
      %v3198 = vsel %vm410, %v3189, 0
      %3200 = vmatprep.subr.mxu0 %v3198
      %3201 = vmatpush1.msra.mxu0 %v3196
      %3202 = vmatprep.subr.mxu0 0.0
      %3203 = vmatpush1.msra.mxu0 0.0
      %3204 = vmatprep.subr.mxu0 0.0
      %3205 = vmatpush1.msra.mxu0 0.0
      %3206 = vmatprep.subr.mxu0 0.0
      %3207 = vmatpush1.msra.mxu0 0.0
      %3208 = vmatprep.subr.mxu0 0.0
      %3209 = vmatpush1.msra.mxu0 0.0
      %3210 = vmatprep.subr.mxu0 0.0
      %3211 = vmatpush1.msra.mxu0 0.0
      %3212 = vmatprep.subr.mxu0 0.0
      %3213 = vmatpush1.msra.mxu0 0.0
      %3214 = vmatprep.subr.mxu0 0.0
      %3215 = vmatpush1.msra.mxu0 0.0
      %3216 = vmatprep.subr.mxu0 0.0
      %3217 = vmatpush1.msra.mxu0 0.0
      %3218 = vmatprep.subr.mxu0 0.0
      %3219 = vmatpush1.msra.mxu0 0.0
      %3220 = vmatprep.subr.mxu0 0.0
      %3221 = vmatpush1.msra.mxu0 0.0
      %3222 = vmatprep.subr.mxu0 0.0
      %3223 = vmatpush1.msra.mxu0 0.0
      %3224 = vmatprep.subr.mxu0 0.0
      %3225 = vmatpush1.msra.mxu0 0.0
      %3226 = vmatprep.subr.mxu0 0.0
      %3227 = vmatpush1.msra.mxu0 0.0
      %3228 = vmatprep.subr.mxu0 0.0
      %3229 = vmatpush1.msra.mxu0 0.0
      %3230 = vmatprep.subr.mxu0 0.0
      %3231 = vmatpush1.msra.mxu0 0.0
      %3232 = vmatprep.subr.mxu0 0.0
      %3233 = vmatpush1.msra.mxu0 0.0
      %3234 = vmatprep.subr.mxu0 0.0
      %3235 = vmatpush1.msra.mxu0 0.0
      %3236 = vmatprep.subr.mxu0 0.0
      %3237 = vmatpush1.msra.mxu0 0.0
      %3238 = vmatprep.subr.mxu0 0.0
      %3239 = vmatpush1.msra.mxu0 0.0
      %3240 = vmatprep.subr.mxu0 0.0
      %3241 = vmatpush1.msra.mxu0 0.0
      %3242 = vmatprep.subr.mxu0 0.0
      %3243 = vmatpush1.msra.mxu0 0.0
      %3244 = vmatprep.subr.mxu0 0.0
      %3245 = vmatpush1.msra.mxu0 0.0
      %3246 = vmatprep.subr.mxu0 0.0
      %3247 = vmatpush1.msra.mxu0 0.0
      %3248 = vmatprep.subr.mxu0 0.0
      %3249 = vmatpush1.msra.mxu0 0.0
      %3250 = vmatprep.subr.mxu0 0.0
      %3251 = vmatpush1.msra.mxu0 0.0
      %3252 = vmatprep.subr.mxu0 0.0
      %3253 = vmatpush1.msra.mxu0 0.0
      %3254 = vmatprep.subr.mxu0 0.0
      %3255 = vmatpush1.msra.mxu0 0.0
      %3256 = vmatprep.subr.mxu0 0.0
      %3257 = vmatpush1.msra.mxu0 0.0
      %3258 = vmatprep.subr.mxu0 0.0
      %3259 = vmatpush1.msra.mxu0 0.0
      %3260 = vmatprep.subr.mxu0 0.0
      %3261 = vmatpush1.msra.mxu0 0.0
      %3262 = vmatprep.subr.mxu0 0.0
      %3263 = vmatpush1.msra.mxu0 0.0
      %3264 = vmatprep.mubr.f32.mxu0 0.0
      %3265 = vmatmul.mubr.f32.gmra.mrb[0].mxu0 %v3191
      %v3266 = vpop.f32.mrb[0].mxu0
      %v3267 = vadd.f32 0.0, %v3266
      %v3268 = vpop.f32.mrb[0].mxu0
      %v3269 = vadd.f32 0.0, %v3268
      %3270 = vmatprep.mubr.f32.mxu0 0.0
      %3271 = vmatmul.mubr.f32.gmra.mrb[0].mxu0 %v3194
      %v3272 = vpop.f32.mrb[0].mxu0
      %v3273 = vadd.f32 0.0, %v3272
      %v3274 = vpop.f32.mrb[0].mxu0
      %v3275 = vadd.f32 0.0, %v3274
      %3276 = vdwg.mxu0
      %v3277 = vadd.f32 %v3160, %v3267
      %v3278 = vadd.f32 %v3161, %v3269
      %v3279 = vadd.f32 %v3162, %v3273
      %v3280 = vadd.f32 %v3163, %v3275
      %v3281 = vld [vmem:[%s338] sm:$0xff]
      %v3282 = vld [vmem:[%s338 + $0x8] sm:$0xf]
      %3283 = vrot.lane.b32.xlu0 %v980, 68
      %v3284 = vpop.permute.xlu0 %3283
      %v3285 = vrot.slane %v3284, 4
      %vm3286 = vcmask 556032
      %v3287 = vsel %vm3286, %v3285, %v3284
      %v3290 = vmul.f32 %v3281, %v3287
      %v3291 = vmul.f32 %v3282, %v3285
      %s3292 = scalar_lea.vmem %s4, 384
      %v3293 = vld [vmem:[%s3292] sm:$0xff]
      %v3294 = vld [vmem:[%s3292 + $0x8] sm:$0xff]
      %v3297 = vcombine.high %v3290, %v3290
      %3298 = vrot.lane.b32.xlu0 %v3290, 60
      %v3299 = vpop.permute.xlu0 %3298
      %3300 = vrot.lane.b32.xlu0 %v3297, 60
      %v3301 = vpop.permute.xlu0 %3300
      %3302 = vrot.lane.b32.xlu0 %v3291, 60
      %v3303 = vpop.permute.xlu0 %3302
      %vm3304 = vcmask 490496
      %v3305 = vsel %vm3304, %v3299, %v3301
      %v3306 = vsel %vm3304, %v3301, %v3303
      %v3308 = vsel %vm403, %v3293, 0
      %v3311 = vsel %vm403, %v3294, 0
      %v3313 = vsel %vm410, %v3305, 0
      %v3315 = vsel %vm410, %v3306, 0
      %3317 = vmatprep.subr.mxu0 %v3315
      %3318 = vmatpush1.msra.mxu0 %v3313
      %3319 = vmatprep.subr.mxu0 0.0
      %3320 = vmatpush1.msra.mxu0 0.0
      %3321 = vmatprep.subr.mxu0 0.0
      %3322 = vmatpush1.msra.mxu0 0.0
      %3323 = vmatprep.subr.mxu0 0.0
      %3324 = vmatpush1.msra.mxu0 0.0
      %3325 = vmatprep.subr.mxu0 0.0
      %3326 = vmatpush1.msra.mxu0 0.0
      %3327 = vmatprep.subr.mxu0 0.0
      %3328 = vmatpush1.msra.mxu0 0.0
      %3329 = vmatprep.subr.mxu0 0.0
      %3330 = vmatpush1.msra.mxu0 0.0
      %3331 = vmatprep.subr.mxu0 0.0
      %3332 = vmatpush1.msra.mxu0 0.0
      %3333 = vmatprep.subr.mxu0 0.0
      %3334 = vmatpush1.msra.mxu0 0.0
      %3335 = vmatprep.subr.mxu0 0.0
      %3336 = vmatpush1.msra.mxu0 0.0
      %3337 = vmatprep.subr.mxu0 0.0
      %3338 = vmatpush1.msra.mxu0 0.0
      %3339 = vmatprep.subr.mxu0 0.0
      %3340 = vmatpush1.msra.mxu0 0.0
      %3341 = vmatprep.subr.mxu0 0.0
      %3342 = vmatpush1.msra.mxu0 0.0
      %3343 = vmatprep.subr.mxu0 0.0
      %3344 = vmatpush1.msra.mxu0 0.0
      %3345 = vmatprep.subr.mxu0 0.0
      %3346 = vmatpush1.msra.mxu0 0.0
      %3347 = vmatprep.subr.mxu0 0.0
      %3348 = vmatpush1.msra.mxu0 0.0
      %3349 = vmatprep.subr.mxu0 0.0
      %3350 = vmatpush1.msra.mxu0 0.0
      %3351 = vmatprep.subr.mxu0 0.0
      %3352 = vmatpush1.msra.mxu0 0.0
      %3353 = vmatprep.subr.mxu0 0.0
      %3354 = vmatpush1.msra.mxu0 0.0
      %3355 = vmatprep.subr.mxu0 0.0
      %3356 = vmatpush1.msra.mxu0 0.0
      %3357 = vmatprep.subr.mxu0 0.0
      %3358 = vmatpush1.msra.mxu0 0.0
      %3359 = vmatprep.subr.mxu0 0.0
      %3360 = vmatpush1.msra.mxu0 0.0
      %3361 = vmatprep.subr.mxu0 0.0
      %3362 = vmatpush1.msra.mxu0 0.0
      %3363 = vmatprep.subr.mxu0 0.0
      %3364 = vmatpush1.msra.mxu0 0.0
      %3365 = vmatprep.subr.mxu0 0.0
      %3366 = vmatpush1.msra.mxu0 0.0
      %3367 = vmatprep.subr.mxu0 0.0
      %3368 = vmatpush1.msra.mxu0 0.0
      %3369 = vmatprep.subr.mxu0 0.0
      %3370 = vmatpush1.msra.mxu0 0.0
      %3371 = vmatprep.subr.mxu0 0.0
      %3372 = vmatpush1.msra.mxu0 0.0
      %3373 = vmatprep.subr.mxu0 0.0
      %3374 = vmatpush1.msra.mxu0 0.0
      %3375 = vmatprep.subr.mxu0 0.0
      %3376 = vmatpush1.msra.mxu0 0.0
      %3377 = vmatprep.subr.mxu0 0.0
      %3378 = vmatpush1.msra.mxu0 0.0
      %3379 = vmatprep.subr.mxu0 0.0
      %3380 = vmatpush1.msra.mxu0 0.0
      %3381 = vmatprep.mubr.f32.mxu0 0.0
      %3382 = vmatmul.mubr.f32.gmra.mrb[0].mxu0 %v3308
      %v3383 = vpop.f32.mrb[0].mxu0
      %v3384 = vadd.f32 0.0, %v3383
      %v3385 = vpop.f32.mrb[0].mxu0
      %v3386 = vadd.f32 0.0, %v3385
      %3387 = vmatprep.mubr.f32.mxu0 0.0
      %3388 = vmatmul.mubr.f32.gmra.mrb[0].mxu0 %v3311
      %v3389 = vpop.f32.mrb[0].mxu0
      %v3390 = vadd.f32 0.0, %v3389
      %v3391 = vpop.f32.mrb[0].mxu0
      %v3392 = vadd.f32 0.0, %v3391
      %3393 = vdwg.mxu0
      %v3394 = vadd.f32 %v3277, %v3384
      %v3395 = vadd.f32 %v3278, %v3386
      %v3396 = vadd.f32 %v3279, %v3390
      %v3397 = vadd.f32 %v3280, %v3392
      %3398 = vst [vmem:[%s353] sm:$0xff] %v3394
      %3399 = vst [vmem:[%s353 + $0x8] sm:$0xff] %v3395
      %3400 = vst [vmem:[%s353 + $0x10] sm:$0xff] %v3396
      %3401 = vst [vmem:[%s353 + $0x18] sm:$0xff] %v3397
      %v3402 = vld [vmem:[%s348] sm:$0xff]
      %v3403 = vld [vmem:[%s348 + $0x8] sm:$0xff]
      %v3404 = vld [vmem:[%s348 + $0x10] sm:$0xff]
      %v3405 = vld [vmem:[%s348 + $0x18] sm:$0xff]
      %v3406 = vadd.f32 %v3394, %v3395
      %3407 = vadd.xlane.f32.xlu0 %v3406
      %v3408 = vpop.xlane.xlu0 %3407
      %v3409 = vadd.f32 %v3396, %v3397
      %3410 = vadd.xlane.f32.xlu0 %v3409
      %v3411 = vpop.xlane.xlu0 %3410
      %3412 = vst.msk [vmem:[%s358] sm:$0xff] %vm618, %v3408
      %3413 = vst.msk [vmem:[%s358 + $0x8] sm:$0xff] %vm618, %v3411
      %v3414 = vmul.f32 %v3394, %v3394
      %v3415 = vmul.f32 %v3395, %v3395
      %v3416 = vmul.f32 %v3396, %v3396
      %v3417 = vmul.f32 %v3397, %v3397
      %v3418 = vadd.f32 %v3414, %v3415
      %3419 = vadd.xlane.f32.xlu0 %v3418
      %v3420 = vpop.xlane.xlu0 %3419
      %v3421 = vadd.f32 %v3416, %v3417
      %3422 = vadd.xlane.f32.xlu0 %v3421
      %v3423 = vpop.xlane.xlu0 %3422
      %vm3424 = vcmask 15368
      %3425 = vst.msk [vmem:[%s358] sm:$0xff] %vm3424, %v3420
      %3426 = vst.msk [vmem:[%s358 + $0x8] sm:$0xff] %vm3424, %v3423
      %v3427 = vmul.f32 %v3394, %v3402
      %v3428 = vmul.f32 %v3395, %v3403
      %v3429 = vmul.f32 %v3396, %v3404
      %v3430 = vmul.f32 %v3397, %v3405
      %v3431 = vadd.f32 %v3427, %v3428
      %3432 = vadd.xlane.f32.xlu0 %v3431
      %v3433 = vpop.xlane.xlu0 %3432
      %v3434 = vadd.f32 %v3429, %v3430
      %3435 = vadd.xlane.f32.xlu0 %v3434
      %v3436 = vpop.xlane.xlu0 %3435
      %vm3437 = vcmask 23568
      %3438 = vst.msk [vmem:[%s358] sm:$0xff] %vm3437, %v3433
      %3439 = vst.msk [vmem:[%s358 + $0x8] sm:$0xff] %vm3437, %v3436
      %v3440 = vadd.f32 %v3402, %v3403
      %3441 = vadd.xlane.f32.xlu0 %v3440
      %v3442 = vpop.xlane.xlu0 %3441
      %v3443 = vadd.f32 %v3404, %v3405
      %3444 = vadd.xlane.f32.xlu0 %v3443
      %v3445 = vpop.xlane.xlu0 %3444
      %vm3446 = vcmask 31768
      %3447 = vst.msk [vmem:[%s358] sm:$0xff] %vm3446, %v3442
      %3448 = vst.msk [vmem:[%s358 + $0x8] sm:$0xff] %vm3446, %v3445
      %v3449 = vmul.f32 %v3402, %v3402
      %v3450 = vmul.f32 %v3403, %v3403
      %v3451 = vmul.f32 %v3404, %v3404
      %v3452 = vmul.f32 %v3405, %v3405
      %v3453 = vadd.f32 %v3449, %v3450
      %3454 = vadd.xlane.f32.xlu0 %v3453
      %v3455 = vpop.xlane.xlu0 %3454
      %v3456 = vadd.f32 %v3451, %v3452
      %3457 = vadd.xlane.f32.xlu0 %v3456
      %v3458 = vpop.xlane.xlu0 %3457
      %vm3459 = vcmask 39968
      %3460 = vst.msk [vmem:[%s358] sm:$0xff] %vm3459, %v3455
      %3461 = vst.msk [vmem:[%s358 + $0x8] sm:$0xff] %vm3459, %v3458
      %p3462 = scmp.lt.s32.totalorder %s20, 1
      %s3463 = scalar_select %p3462, %s20, 1
      %s3464 = smul.addr %s3463, 4
      %s3465 = smul.addr %s3464, 8
      %s3466 = scalar_lea.vmem %s7, %s3465
      %p3467 = scmp.lt.s32.totalorder %s20, 1
      %s3468 = scalar_select %p3467, %s20, 1
      %s3469 = smul.addr %s3468, 2
      %s3470 = smul.addr %s3469, 8
      %s3471 = scalar_lea.vmem %s8, %s3470
      // Predicated region
      $region49: #{csrd_forward.4} parent=47 // pred_check
        %p3472 = pneg %p200
      $region50: #{csrd_forward.4} parent=47 // pred_check_branch
        %3474 = sbr.rel (%p3472) target = $region52
      $region51: #{csrd_forward.4} parent=47 // pred_region
        _
      $region52: #{csrd_forward.4} parent=47 // pred_fallthru
        _
      // Predicated region
      $region53: #{csrd_forward.4} parent=47 // pred_check
        %p3475 = pneg %p226
      $region54: #{csrd_forward.4} parent=47 // pred_check_branch
        %3477 = sbr.rel (%p3475) target = $region56
      $region55: #{csrd_forward.4} parent=47 // pred_region
        _
      $region56: #{csrd_forward.4} parent=47 // pred_fallthru
        _
    $region48: #{csrd_forward.4} parent=5 // pred_fallthru
      _
    %p3478 = scmp.le.s32.totalorder 2, %s15
    // Predicated region
    $region57: #{csrd_forward.4} parent=5 // pred_check
      %p3479 = pneg %p3478
    $region58: #{csrd_forward.4} parent=5 // pred_check_branch
      %3481 = sbr.rel (%p3479) target = $region60
    $region59: #{csrd_forward.4} parent=5 // pred_region
      %s3482 = ssub.s32 %s15, 2
      // Predicated region
      $region61: #{csrd_forward.4} parent=59 // pred_check
        %p3483 = pneg %p206
      $region62: #{csrd_forward.4} parent=59 // pred_check_branch
        %3485 = sbr.rel (%p3483) target = $region64
      $region63: #{csrd_forward.4} parent=59 // pred_region
        %p3486 = scmp.lt.s32.totalorder %s21, 1
        %s3487 = scalar_select %p3486, %s21, 1
        %s3488 = smul.addr %s3487, 4
        %s3489 = smul.addr %s3488, 8
        %s3490 = scalar_lea.vmem %s7, %s3489
      $region64: #{csrd_forward.4} parent=59 // pred_fallthru
        _
      // Predicated region
      $region65: #{csrd_forward.4} parent=59 // pred_check
        %p3491 = pneg %p232
      $region66: #{csrd_forward.4} parent=59 // pred_check_branch
        %3493 = sbr.rel (%p3491) target = $region68
      $region67: #{csrd_forward.4} parent=59 // pred_region
        %p3494 = scmp.lt.s32.totalorder %s21, 1
        %s3495 = scalar_select %p3494, %s21, 1
        %s3496 = smul.addr %s3495, 2
        %s3497 = smul.addr %s3496, 8
        %s3498 = scalar_lea.vmem %s8, %s3497
      $region68: #{csrd_forward.4} parent=59 // pred_fallthru
        _
    $region60: #{csrd_forward.4} parent=5 // pred_fallthru
      _
  $region6: #{csrd_forward.4} parent=0 // loop_footer
    %s19 = sadd.s32 1, %s15
  $region7: #{csrd_forward.4} parent=0 // loop_footer_branch
    %14 = sbr.rel target = $region3
  $region8: #{csrd_forward.4} parent=0 // loop_exit
    _

</llo_original>
